<compile_context>
chip_gen: v7x
topology: tpu7x:2x2x1
jax: 0.10.0
libtpu: 0.0.40
codegen_flags: <defaults>
</compile_context>

<pallas_src>
import functools

import jax
import jax.numpy as jnp
from jax.experimental import pallas as pl
from jax.experimental.pallas import tpu as pltpu

BN_EPS = 1e-5


def _round_up(x, m):
    return (x + m - 1) // m * m


def _default_bm(batch):
    """Batch-tile default: 128 rows on v5e and older, 256 on v6e/v7x when batch allows >=2 steps."""
    try:
        kind = jax.devices()[0].device_kind.lower()
    except Exception:  # pragma: no cover - defensive, e.g. no devices yet
        kind = ""
    if any(v in kind for v in ("v2", "v3", "v4", "v5")):
        return 128          # 128-row native MXU pass; 256 only adds vreg/spill pressure (1 vst slot)
    # v6e / v7x: 2x256x256 MXU. Use 256 rows only when it still leaves >=2 grid steps so the
    # "parallel" grid axis can shard across v7x's two TensorCores.
    return 256 if batch >= 512 else 128


def decoder_kernel(x_ref,
                   w1_ref, b1_ref,
                   w2_ref, b2_ref,
                   w3_ref, b3_ref,
                   w4_ref, b4_ref,
                   o_ref, *, compute_dtype):
    """Fused MLP: (Linear[BN folded] + ReLU) x3 + final Linear, one batch tile per grid step.

    Dots accumulate in f32 on the MXU; bias add + ReLU run in f32 on the VPU; the hidden
    activation is immediately narrowed to compute_dtype so the (bm, 512/1024) intermediates
    stay small (halves spill traffic when compute_dtype is bf16).
    Dropout(0.2) layers are identity in eval mode.
    """
    cd = compute_dtype

    # Layer 1
    h = jnp.dot(x_ref[...], w1_ref[...], preferred_element_type=jnp.float32)
    h = jnp.maximum(h + b1_ref[...], 0.0).astype(cd)

    # Layer 2
    h = jnp.dot(h, w2_ref[...], preferred_element_type=jnp.float32)
    h = jnp.maximum(h + b2_ref[...], 0.0).astype(cd)

    # Layer 3
    h = jnp.dot(h, w3_ref[...], preferred_element_type=jnp.float32)
    h = jnp.maximum(h + b3_ref[...], 0.0).astype(cd)

    # Output: Linear(1024, spectrum_dim_padded)
    o_ref[...] = (jnp.dot(h, w4_ref[...], preferred_element_type=jnp.float32)
                  + b4_ref[...]).astype(o_ref.dtype)


def fold_and_pack_decoder_params(p, *, compute_dtype=jnp.bfloat16):
    """One-time prep (do NOT call per forward): fold eval-mode BatchNorm into the preceding
    Linear, pad the output features to a 128-lane multiple, and cast MXU operands to
    compute_dtype. Biases stay f32 (added to the f32 accumulator)."""
    def bn_fold(w, b, gamma, beta, mean, var):
        s = gamma / jnp.sqrt(var + BN_EPS)
        return w * s[None, :], b * s + (beta - mean * s)

    w1, b1 = bn_fold(p["w1"], p["b1"], p["g1"], p["be1"], p["m1"], p["v1"])
    w2, b2 = bn_fold(p["w2"], p["b2"], p["g2"], p["be2"], p["m2"], p["v2"])
    w3, b3 = bn_fold(p["w3"], p["b3"], p["g3"], p["be3"], p["m3"], p["v3"])
    w4, b4 = p["w4"], p["b4"]

    spectrum_dim = int(w4.shape[1])
    n_pad = _round_up(spectrum_dim, 128)             # lane-dense, unmasked output stores
    w4_p = jnp.zeros((w4.shape[0], n_pad), jnp.float32).at[:, :spectrum_dim].set(w4)
    b4_p = jnp.zeros((n_pad,), jnp.float32).at[:spectrum_dim].set(b4)

    cd = compute_dtype
    operands = (
        w1.astype(cd),   b1[None, :].astype(jnp.float32),
        w2.astype(cd),   b2[None, :].astype(jnp.float32),
        w3.astype(cd),   b3[None, :].astype(jnp.float32),
        w4_p.astype(cd), b4_p[None, :].astype(jnp.float32),
    )
    return {
        "operands": operands,
        "spectrum_dim": spectrum_dim,
        "n_pad": int(n_pad),
        "d_in": int(w1.shape[0]),
        "compute_dtype": cd,
    }


def conditional_decoder_pallas(latent, params, packed, *, bm=None,
                               single_buffer_weights=True):
    """Hot path: concat + compute-dtype cast + batch pad (cheap glue) + one fused pallas_call.

    packed: output of fold_and_pack_decoder_params (precomputed once and reused / closed over).
    bm: batch tile override; defaults to a generation-aware choice (128 on v5e, 256 on v6e/v7x
        when the batch still yields >=2 grid steps).
    """
    cd = packed["compute_dtype"]
    x = jnp.concatenate([latent, params], axis=1).astype(cd)
    B, d_in = x.shape
    if d_in != packed["d_in"]:
        raise ValueError(f"latent+param dim {d_in} != packed d_in {packed['d_in']}")
    n_pad = packed["n_pad"]

    if bm is None:
        bm = _default_bm(B)
    bm = min(bm, _round_up(B, 8))          # don't over-pad tiny batches
    b_pad = _round_up(B, bm)
    if b_pad != B:
        x = jnp.pad(x, ((0, b_pad - B), (0, 0)))

    operands = (x,) + packed["operands"]
    kernel = functools.partial(decoder_kernel, compute_dtype=cd)
    out_shape = jax.ShapeDtypeStruct((b_pad, n_pad), jnp.float32)

    def build_and_run(single_buffer):
        def const_spec(shape):
            # Constant block index across the batch grid -> DMA'd once, reused every step.
            idx = lambda i: (0,) * len(shape)
            if single_buffer:
                # Fetched once, so a second pipeline buffer is pure VMEM waste.
                return pl.BlockSpec(shape, idx, pipeline_mode=pl.Buffered(1))
            return pl.BlockSpec(shape, idx)

        in_specs = [pl.BlockSpec((bm, d_in), lambda i: (i, 0))]
        in_specs += [const_spec(op.shape) for op in packed["operands"]]

        return pl.pallas_call(
            kernel,
            out_shape=out_shape,
            grid_spec=pltpu.PrefetchScalarGridSpec(
                num_scalar_prefetch=0,
                grid=(b_pad // bm,),
                in_specs=in_specs,
                out_specs=pl.BlockSpec((bm, n_pad), lambda i: (i, 0)),
            ),
            compiler_params=pltpu.CompilerParams(
                dimension_semantics=("parallel",),     # batch tiles shard across TCs (v7x megacore)
                vmem_limit_bytes=24 << 20,             # footprint is a few MiB; v7x headroom
            ),
        )(*operands)

    if single_buffer_weights:
        try:
            out = build_and_run(True)
        except Exception:
            # Fallback for JAX builds where pipeline_mode=pl.Buffered(1) is unavailable/rejected;
            # only costs ~1.6 MiB of extra (double-buffered) weight VMEM.
            out = build_and_run(False)
    else:
        out = build_and_run(False)

    return out[:B, :packed["spectrum_dim"]]


def conditional_decoder_ref(latent, params, p):
    """Pure-JAX reference mirroring eval-mode PyTorch forward (unfused BN)."""
    x = jnp.concatenate([latent, params], axis=1).astype(jnp.float32)

    def bn(h, gamma, beta, mean, var):
        return (h - mean) / jnp.sqrt(var + BN_EPS) * gamma + beta

    h = x @ p["w1"] + p["b1"]
    h = jnp.maximum(bn(h, p["g1"], p["be1"], p["m1"], p["v1"]), 0.0)
    h = h @ p["w2"] + p["b2"]
    h = jnp.maximum(bn(h, p["g2"], p["be2"], p["m2"], p["v2"]), 0.0)
    h = h @ p["w3"] + p["b3"]
    h = jnp.maximum(bn(h, p["g3"], p["be3"], p["m3"], p["v3"]), 0.0)
    return h @ p["w4"] + p["b4"]


def init_decoder_params(key, latent_dim, param_dim, spectrum_dim):
    """Deterministic synthetic weights matching the module's shapes."""
    dims = [latent_dim + param_dim, 256, 512, 1024, spectrum_dim]
    p = {}
    keys = jax.random.split(key, 20)
    ki = 0
    for layer in range(4):
        fan_in, fan_out = dims[layer], dims[layer + 1]
        bound = 1.0 / (fan_in ** 0.5)
        p[f"w{layer + 1}"] = jax.random.uniform(
            keys[ki], (fan_in, fan_out), jnp.float32, -bound, bound); ki += 1
        p[f"b{layer + 1}"] = jax.random.uniform(
            keys[ki], (fan_out,), jnp.float32, -bound, bound); ki += 1
    # BatchNorm params / running stats for the three hidden layers.
    for layer, width in zip((1, 2, 3), (256, 512, 1024)):
        p[f"g{layer}"] = 1.0 + 0.1 * jax.random.normal(keys[ki], (width,), jnp.float32); ki += 1
        p[f"be{layer}"] = 0.1 * jax.random.normal(keys[ki], (width,), jnp.float32); ki += 1
        p[f"m{layer}"] = 0.05 * jax.random.normal(keys[ki], (width,), jnp.float32); ki += 1
        p[f"v{layer}"] = 1.0 + 0.1 * jax.random.uniform(keys[ki], (width,), jnp.float32); ki += 1
    return p


if __name__ == "__main__":
    latent_dim, param_dim, spectrum_dim = 12, 4, 128

    key = jax.random.PRNGKey(0)
    k_lat, k_par, k_w = jax.random.split(key, 3)
    weights = init_decoder_params(k_w, latent_dim, param_dim, spectrum_dim)

    # 1) f32 compute path (bit-faithful check) on a small ragged batch (not a multiple of 8).
    #    Weight fold/pad/cast happens ONCE here, outside the per-call path.
    packed_f32 = fold_and_pack_decoder_params(weights, compute_dtype=jnp.float32)
    b_small = 6
    lat_s = jax.random.normal(k_lat, (b_small, latent_dim), jnp.float32)
    par_s = jax.random.normal(k_par, (b_small, param_dim), jnp.float32)
    out_s = jax.block_until_ready(conditional_decoder_pallas(lat_s, par_s, packed_f32))
    ref_s = conditional_decoder_ref(lat_s, par_s, weights)
    assert out_s.shape == (b_small, spectrum_dim)
    assert jnp.allclose(out_s, ref_s, atol=2e-4, rtol=2e-4), "f32 kernel mismatch vs reference"

    # 2) Perf path: bf16 MXU operands, precomputed/packed weights reused across calls, B=512 so
    #    the generation-aware tile picker can use bm=256 on v6e/v7x while keeping >=2 grid steps.
    packed_bf16 = fold_and_pack_decoder_params(weights, compute_dtype=jnp.bfloat16)
    b_big = 512
    lat_b = jax.random.normal(jax.random.fold_in(k_lat, 1), (b_big, latent_dim), jnp.float32)
    par_b = jax.random.normal(jax.random.fold_in(k_par, 1), (b_big, param_dim), jnp.float32)
    out_b = jax.block_until_ready(conditional_decoder_pallas(lat_b, par_b, packed_bf16))
    ref_b = conditional_decoder_ref(lat_b, par_b, weights)
    assert out_b.shape == (b_big, spectrum_dim)
    max_err = float(jnp.max(jnp.abs(out_b - ref_b)))
    assert max_err < 1e-1, f"bf16 kernel error too large: {max_err}"

    print("KERNEL_OK")
</pallas_src>

<mosaic_0001>
module attributes {stable_mosaic.version = 11 : i64} {
  func.func @decoder_kernel(%arg0: i32, %arg1: memref<8x16xf32, #tpu.memory_space<vmem>>, %arg2: memref<16x256xf32, #tpu.memory_space<vmem>>, %arg3: memref<1x256xf32, #tpu.memory_space<vmem>>, %arg4: memref<256x512xf32, #tpu.memory_space<vmem>>, %arg5: memref<1x512xf32, #tpu.memory_space<vmem>>, %arg6: memref<512x1024xf32, #tpu.memory_space<vmem>>, %arg7: memref<1x1024xf32, #tpu.memory_space<vmem>>, %arg8: memref<1024x128xf32, #tpu.memory_space<vmem>>, %arg9: memref<1x128xf32, #tpu.memory_space<vmem>>, %arg10: memref<8x128xf32, #tpu.memory_space<vmem>>) attributes {dimension_semantics = [#tpu.dimension_semantics<parallel>], iteration_bounds = array<i64: 1>, scalar_prefetch = 0 : i64, scratch_operands = 0 : i64, tpu.core_type = #tpu.core_type<tc>, window_params = [{transform_indices = @transform_0, window_bounds = array<i64: 8, 16>}, {pipeline_mode = #tpu.pipeline_mode<synchronous>, transform_indices = @transform_1, window_bounds = array<i64: 16, 256>}, {pipeline_mode = #tpu.pipeline_mode<synchronous>, transform_indices = @transform_2, window_bounds = array<i64: 1, 256>}, {pipeline_mode = #tpu.pipeline_mode<synchronous>, transform_indices = @transform_3, window_bounds = array<i64: 256, 512>}, {pipeline_mode = #tpu.pipeline_mode<synchronous>, transform_indices = @transform_4, window_bounds = array<i64: 1, 512>}, {pipeline_mode = #tpu.pipeline_mode<synchronous>, transform_indices = @transform_5, window_bounds = array<i64: 512, 1024>}, {pipeline_mode = #tpu.pipeline_mode<synchronous>, transform_indices = @transform_6, window_bounds = array<i64: 1, 1024>}, {pipeline_mode = #tpu.pipeline_mode<synchronous>, transform_indices = @transform_7, window_bounds = array<i64: 1024, 128>}, {pipeline_mode = #tpu.pipeline_mode<synchronous>, transform_indices = @transform_8, window_bounds = array<i64: 1, 128>}, {transform_indices = @transform_9, window_bounds = array<i64: 8, 128>}]} {
    %c0 = arith.constant 0 : index
    %c0_0 = arith.constant 0 : index
    %0 = vector.load %arg1[%c0, %c0_0] : memref<8x16xf32, #tpu.memory_space<vmem>>, vector<8x16xf32>
    %c0_1 = arith.constant 0 : index
    %c0_2 = arith.constant 0 : index
    %1 = vector.load %arg2[%c0_1, %c0_2] : memref<16x256xf32, #tpu.memory_space<vmem>>, vector<16x256xf32>
    %cst = arith.constant dense<0.000000e+00> : vector<8x256xf32>
    %2 = tpu.matmul %0, %1, %cst {dimension_numbers = #tpu.dot_dimension_numbers<[1], [0], [0], [1], [0, 0, 1, 1], [], []>} : vector<8x16xf32>, vector<16x256xf32>, vector<8x256xf32> -> vector<8x256xf32>
    %c0_3 = arith.constant 0 : index
    %c0_4 = arith.constant 0 : index
    %3 = vector.load %arg3[%c0_3, %c0_4] : memref<1x256xf32, #tpu.memory_space<vmem>>, vector<1x256xf32>
    %4 = vector.broadcast %3 : vector<1x256xf32> to vector<8x256xf32>
    %5 = arith.addf %2, %4 : vector<8x256xf32>
    %cst_5 = arith.constant 0.000000e+00 : f32
    %6 = vector.broadcast %cst_5 : f32 to vector<8x256xf32>
    %7 = arith.maximumf %5, %6 : vector<8x256xf32>
    %c0_6 = arith.constant 0 : index
    %c0_7 = arith.constant 0 : index
    %8 = vector.load %arg4[%c0_6, %c0_7] : memref<256x512xf32, #tpu.memory_space<vmem>>, vector<256x512xf32>
    %cst_8 = arith.constant dense<0.000000e+00> : vector<8x512xf32>
    %9 = tpu.matmul %7, %8, %cst_8 {dimension_numbers = #tpu.dot_dimension_numbers<[1], [0], [0], [1], [0, 0, 1, 1], [], []>} : vector<8x256xf32>, vector<256x512xf32>, vector<8x512xf32> -> vector<8x512xf32>
    %c0_9 = arith.constant 0 : index
    %c0_10 = arith.constant 0 : index
    %10 = vector.load %arg5[%c0_9, %c0_10] : memref<1x512xf32, #tpu.memory_space<vmem>>, vector<1x512xf32>
    %11 = vector.broadcast %10 : vector<1x512xf32> to vector<8x512xf32>
    %12 = arith.addf %9, %11 : vector<8x512xf32>
    %cst_11 = arith.constant 0.000000e+00 : f32
    %13 = vector.broadcast %cst_11 : f32 to vector<8x512xf32>
    %14 = arith.maximumf %12, %13 : vector<8x512xf32>
    %c0_12 = arith.constant 0 : index
    %c0_13 = arith.constant 0 : index
    %15 = vector.load %arg6[%c0_12, %c0_13] : memref<512x1024xf32, #tpu.memory_space<vmem>>, vector<512x1024xf32>
    %cst_14 = arith.constant dense<0.000000e+00> : vector<8x1024xf32>
    %16 = tpu.matmul %14, %15, %cst_14 {dimension_numbers = #tpu.dot_dimension_numbers<[1], [0], [0], [1], [0, 0, 1, 1], [], []>} : vector<8x512xf32>, vector<512x1024xf32>, vector<8x1024xf32> -> vector<8x1024xf32>
    %c0_15 = arith.constant 0 : index
    %c0_16 = arith.constant 0 : index
    %17 = vector.load %arg7[%c0_15, %c0_16] : memref<1x1024xf32, #tpu.memory_space<vmem>>, vector<1x1024xf32>
    %18 = vector.broadcast %17 : vector<1x1024xf32> to vector<8x1024xf32>
    %19 = arith.addf %16, %18 : vector<8x1024xf32>
    %cst_17 = arith.constant 0.000000e+00 : f32
    %20 = vector.broadcast %cst_17 : f32 to vector<8x1024xf32>
    %21 = arith.maximumf %19, %20 : vector<8x1024xf32>
    %c0_18 = arith.constant 0 : index
    %c0_19 = arith.constant 0 : index
    %22 = vector.load %arg8[%c0_18, %c0_19] : memref<1024x128xf32, #tpu.memory_space<vmem>>, vector<1024x128xf32>
    %cst_20 = arith.constant dense<0.000000e+00> : vector<8x128xf32>
    %23 = tpu.matmul %21, %22, %cst_20 {dimension_numbers = #tpu.dot_dimension_numbers<[1], [0], [0], [1], [0, 0, 1, 1], [], []>} : vector<8x1024xf32>, vector<1024x128xf32>, vector<8x128xf32> -> vector<8x128xf32>
    %c0_21 = arith.constant 0 : index
    %c0_22 = arith.constant 0 : index
    %24 = vector.load %arg9[%c0_21, %c0_22] : memref<1x128xf32, #tpu.memory_space<vmem>>, vector<1x128xf32>
    %25 = vector.broadcast %24 : vector<1x128xf32> to vector<8x128xf32>
    %26 = arith.addf %23, %25 : vector<8x128xf32>
    %c0_23 = arith.constant 0 : index
    %c0_24 = arith.constant 0 : index
    %27 = vector.load %arg10[%c0_23, %c0_24] : memref<8x128xf32, #tpu.memory_space<vmem>>, vector<8x128xf32>
    tpu.vector_store %arg10[%c0_23, %c0_24], %26 {strides = array<i32>} : memref<8x128xf32, #tpu.memory_space<vmem>>, vector<8x128xf32>,
    return
  }
  func.func @transform_0(%arg0: i32) -> (i32, i32) {
    %c0_i32 = arith.constant 0 : i32
    %c0_i32_0 = arith.constant 0 : i32
    return %arg0, %c0_i32 : i32, i32
  }
  func.func @transform_1(%arg0: i32) -> (i32, i32) {
    %c0_i32 = arith.constant 0 : i32
    %c0_i32_0 = arith.constant 0 : i32
    %c0_i32_1 = arith.constant 0 : i32
    return %c0_i32, %c0_i32_0 : i32, i32
  }
  func.func @transform_2(%arg0: i32) -> (i32, i32) {
    %c0_i32 = arith.constant 0 : i32
    %c0_i32_0 = arith.constant 0 : i32
    %c0_i32_1 = arith.constant 0 : i32
    return %c0_i32, %c0_i32_0 : i32, i32
  }
  func.func @transform_3(%arg0: i32) -> (i32, i32) {
    %c0_i32 = arith.constant 0 : i32
    %c0_i32_0 = arith.constant 0 : i32
    %c0_i32_1 = arith.constant 0 : i32
    return %c0_i32, %c0_i32_0 : i32, i32
  }
  func.func @transform_4(%arg0: i32) -> (i32, i32) {
    %c0_i32 = arith.constant 0 : i32
    %c0_i32_0 = arith.constant 0 : i32
    %c0_i32_1 = arith.constant 0 : i32
    return %c0_i32, %c0_i32_0 : i32, i32
  }
  func.func @transform_5(%arg0: i32) -> (i32, i32) {
    %c0_i32 = arith.constant 0 : i32
    %c0_i32_0 = arith.constant 0 : i32
    %c0_i32_1 = arith.constant 0 : i32
    return %c0_i32, %c0_i32_0 : i32, i32
  }
  func.func @transform_6(%arg0: i32) -> (i32, i32) {
    %c0_i32 = arith.constant 0 : i32
    %c0_i32_0 = arith.constant 0 : i32
    %c0_i32_1 = arith.constant 0 : i32
    return %c0_i32, %c0_i32_0 : i32, i32
  }
  func.func @transform_7(%arg0: i32) -> (i32, i32) {
    %c0_i32 = arith.constant 0 : i32
    %c0_i32_0 = arith.constant 0 : i32
    %c0_i32_1 = arith.constant 0 : i32
    return %c0_i32, %c0_i32_0 : i32, i32
  }
  func.func @transform_8(%arg0: i32) -> (i32, i32) {
    %c0_i32 = arith.constant 0 : i32
    %c0_i32_0 = arith.constant 0 : i32
    %c0_i32_1 = arith.constant 0 : i32
    return %c0_i32, %c0_i32_0 : i32, i32
  }
  func.func @transform_9(%arg0: i32) -> (i32, i32) {
    %c0_i32 = arith.constant 0 : i32
    %c0_i32_0 = arith.constant 0 : i32
    return %arg0, %c0_i32 : i32, i32
  }
}

module attributes {stable_mosaic.version = 11 : i64} {
  func.func @decoder_kernel(%arg0: i32, %arg1: memref<8x16xf32, #tpu.memory_space<vmem>>, %arg2: memref<16x256xf32, #tpu.memory_space<vmem>>, %arg3: memref<1x256xf32, #tpu.memory_space<vmem>>, %arg4: memref<256x512xf32, #tpu.memory_space<vmem>>, %arg5: memref<1x512xf32, #tpu.memory_space<vmem>>, %arg6: memref<512x1024xf32, #tpu.memory_space<vmem>>, %arg7: memref<1x1024xf32, #tpu.memory_space<vmem>>, %arg8: memref<1024x128xf32, #tpu.memory_space<vmem>>, %arg9: memref<1x128xf32, #tpu.memory_space<vmem>>, %arg10: memref<8x128xf32, #tpu.memory_space<vmem>>) attributes {dimension_semantics = [#tpu.dimension_semantics<parallel>], iteration_bounds = array<i64: 1>, scalar_prefetch = 0 : i64, scratch_operands = 0 : i64, tpu.core_type = #tpu.core_type<tc>, window_params = [{transform_indices = @transform_0, window_bounds = array<i64: 8, 16>}, {pipeline_mode = #tpu.pipeline_mode<synchronous>, transform_indices = @transform_1, window_bounds = array<i64: 16, 256>}, {pipeline_mode = #tpu.pipeline_mode<synchronous>, transform_indices = @transform_2, window_bounds = array<i64: 1, 256>}, {pipeline_mode = #tpu.pipeline_mode<synchronous>, transform_indices = @transform_3, window_bounds = array<i64: 256, 512>}, {pipeline_mode = #tpu.pipeline_mode<synchronous>, transform_indices = @transform_4, window_bounds = array<i64: 1, 512>}, {pipeline_mode = #tpu.pipeline_mode<synchronous>, transform_indices = @transform_5, window_bounds = array<i64: 512, 1024>}, {pipeline_mode = #tpu.pipeline_mode<synchronous>, transform_indices = @transform_6, window_bounds = array<i64: 1, 1024>}, {pipeline_mode = #tpu.pipeline_mode<synchronous>, transform_indices = @transform_7, window_bounds = array<i64: 1024, 128>}, {pipeline_mode = #tpu.pipeline_mode<synchronous>, transform_indices = @transform_8, window_bounds = array<i64: 1, 128>}, {transform_indices = @transform_9, window_bounds = array<i64: 8, 128>}]} {
    %c0 = arith.constant 0 : index
    %c0_0 = arith.constant 0 : index
    %0 = vector.load %arg1[%c0, %c0_0] : memref<8x16xf32, #tpu.memory_space<vmem>>, vector<8x16xf32>
    %c0_1 = arith.constant 0 : index
    %c0_2 = arith.constant 0 : index
    %1 = vector.load %arg2[%c0_1, %c0_2] : memref<16x256xf32, #tpu.memory_space<vmem>>, vector<16x256xf32>
    %cst = arith.constant dense<0.000000e+00> : vector<8x256xf32>
    %2 = tpu.matmul %0, %1, %cst {dimension_numbers = #tpu.dot_dimension_numbers<[1], [0], [0], [1], [0, 0, 1, 1], [], []>} : vector<8x16xf32>, vector<16x256xf32>, vector<8x256xf32> -> vector<8x256xf32>
    %c0_3 = arith.constant 0 : index
    %c0_4 = arith.constant 0 : index
    %3 = vector.load %arg3[%c0_3, %c0_4] : memref<1x256xf32, #tpu.memory_space<vmem>>, vector<1x256xf32>
    %4 = vector.broadcast %3 : vector<1x256xf32> to vector<8x256xf32>
    %5 = arith.addf %2, %4 : vector<8x256xf32>
    %cst_5 = arith.constant 0.000000e+00 : f32
    %6 = vector.broadcast %cst_5 : f32 to vector<8x256xf32>
    %7 = arith.maximumf %5, %6 : vector<8x256xf32>
    %c0_6 = arith.constant 0 : index
    %c0_7 = arith.constant 0 : index
    %8 = vector.load %arg4[%c0_6, %c0_7] : memref<256x512xf32, #tpu.memory_space<vmem>>, vector<256x512xf32>
    %cst_8 = arith.constant dense<0.000000e+00> : vector<8x512xf32>
    %9 = tpu.matmul %7, %8, %cst_8 {dimension_numbers = #tpu.dot_dimension_numbers<[1], [0], [0], [1], [0, 0, 1, 1], [], []>} : vector<8x256xf32>, vector<256x512xf32>, vector<8x512xf32> -> vector<8x512xf32>
    %c0_9 = arith.constant 0 : index
    %c0_10 = arith.constant 0 : index
    %10 = vector.load %arg5[%c0_9, %c0_10] : memref<1x512xf32, #tpu.memory_space<vmem>>, vector<1x512xf32>
    %11 = vector.broadcast %10 : vector<1x512xf32> to vector<8x512xf32>
    %12 = arith.addf %9, %11 : vector<8x512xf32>
    %cst_11 = arith.constant 0.000000e+00 : f32
    %13 = vector.broadcast %cst_11 : f32 to vector<8x512xf32>
    %14 = arith.maximumf %12, %13 : vector<8x512xf32>
    %c0_12 = arith.constant 0 : index
    %c0_13 = arith.constant 0 : index
    %15 = vector.load %arg6[%c0_12, %c0_13] : memref<512x1024xf32, #tpu.memory_space<vmem>>, vector<512x1024xf32>
    %cst_14 = arith.constant dense<0.000000e+00> : vector<8x1024xf32>
    %16 = tpu.matmul %14, %15, %cst_14 {dimension_numbers = #tpu.dot_dimension_numbers<[1], [0], [0], [1], [0, 0, 1, 1], [], []>} : vector<8x512xf32>, vector<512x1024xf32>, vector<8x1024xf32> -> vector<8x1024xf32>
    %c0_15 = arith.constant 0 : index
    %c0_16 = arith.constant 0 : index
    %17 = vector.load %arg7[%c0_15, %c0_16] : memref<1x1024xf32, #tpu.memory_space<vmem>>, vector<1x1024xf32>
    %18 = vector.broadcast %17 : vector<1x1024xf32> to vector<8x1024xf32>
    %19 = arith.addf %16, %18 : vector<8x1024xf32>
    %cst_17 = arith.constant 0.000000e+00 : f32
    %20 = vector.broadcast %cst_17 : f32 to vector<8x1024xf32>
    %21 = arith.maximumf %19, %20 : vector<8x1024xf32>
    %c0_18 = arith.constant 0 : index
    %c0_19 = arith.constant 0 : index
    %22 = vector.load %arg8[%c0_18, %c0_19] : memref<1024x128xf32, #tpu.memory_space<vmem>>, vector<1024x128xf32>
    %cst_20 = arith.constant dense<0.000000e+00> : vector<8x128xf32>
    %23 = tpu.matmul %21, %22, %cst_20 {dimension_numbers = #tpu.dot_dimension_numbers<[1], [0], [0], [1], [0, 0, 1, 1], [], []>} : vector<8x1024xf32>, vector<1024x128xf32>, vector<8x128xf32> -> vector<8x128xf32>
    %c0_21 = arith.constant 0 : index
    %c0_22 = arith.constant 0 : index
    %24 = vector.load %arg9[%c0_21, %c0_22] : memref<1x128xf32, #tpu.memory_space<vmem>>, vector<1x128xf32>
    %25 = vector.broadcast %24 : vector<1x128xf32> to vector<8x128xf32>
    %26 = arith.addf %23, %25 : vector<8x128xf32>
    %c0_23 = arith.constant 0 : index
    %c0_24 = arith.constant 0 : index
    %27 = vector.load %arg10[%c0_23, %c0_24] : memref<8x128xf32, #tpu.memory_space<vmem>>, vector<8x128xf32>
    tpu.vector_store %arg10[%c0_23, %c0_24], %26 {strides = array<i32>} : memref<8x128xf32, #tpu.memory_space<vmem>>, vector<8x128xf32>,
    return
  }
  func.func @transform_0(%arg0: i32) -> (i32, i32) {
    %c0_i32 = arith.constant 0 : i32
    %c0_i32_0 = arith.constant 0 : i32
    return %arg0, %c0_i32 : i32, i32
  }
  func.func @transform_1(%arg0: i32) -> (i32, i32) {
    %c0_i32 = arith.constant 0 : i32
    %c0_i32_0 = arith.constant 0 : i32
    %c0_i32_1 = arith.constant 0 : i32
    return %c0_i32, %c0_i32_0 : i32, i32
  }
  func.func @transform_2(%arg0: i32) -> (i32, i32) {
    %c0_i32 = arith.constant 0 : i32
    %c0_i32_0 = arith.constant 0 : i32
    %c0_i32_1 = arith.constant 0 : i32
    return %c0_i32, %c0_i32_0 : i32, i32
  }
  func.func @transform_3(%arg0: i32) -> (i32, i32) {
    %c0_i32 = arith.constant 0 : i32
    %c0_i32_0 = arith.constant 0 : i32
    %c0_i32_1 = arith.constant 0 : i32
    return %c0_i32, %c0_i32_0 : i32, i32
  }
  func.func @transform_4(%arg0: i32) -> (i32, i32) {
    %c0_i32 = arith.constant 0 : i32
    %c0_i32_0 = arith.constant 0 : i32
    %c0_i32_1 = arith.constant 0 : i32
    return %c0_i32, %c0_i32_0 : i32, i32
  }
  func.func @transform_5(%arg0: i32) -> (i32, i32) {
    %c0_i32 = arith.constant 0 : i32
    %c0_i32_0 = arith.constant 0 : i32
    %c0_i32_1 = arith.constant 0 : i32
    return %c0_i32, %c0_i32_0 : i32, i32
  }
  func.func @transform_6(%arg0: i32) -> (i32, i32) {
    %c0_i32 = arith.constant 0 : i32
    %c0_i32_0 = arith.constant 0 : i32
    %c0_i32_1 = arith.constant 0 : i32
    return %c0_i32, %c0_i32_0 : i32, i32
  }
  func.func @transform_7(%arg0: i32) -> (i32, i32) {
    %c0_i32 = arith.constant 0 : i32
    %c0_i32_0 = arith.constant 0 : i32
    %c0_i32_1 = arith.constant 0 : i32
    return %c0_i32, %c0_i32_0 : i32, i32
  }
  func.func @transform_8(%arg0: i32) -> (i32, i32) {
    %c0_i32 = arith.constant 0 : i32
    %c0_i32_0 = arith.constant 0 : i32
    %c0_i32_1 = arith.constant 0 : i32
    return %c0_i32, %c0_i32_0 : i32, i32
  }
  func.func @transform_9(%arg0: i32) -> (i32, i32) {
    %c0_i32 = arith.constant 0 : i32
    %c0_i32_0 = arith.constant 0 : i32
    return %arg0, %c0_i32 : i32, i32
  }
}

</mosaic_0001>

<llo_original>
// kernel: tpu_custom_call.1
$region0: #{tpu_custom_call.1}
  #allocation0 [shape = 'u32[]', space=smem, size = 0x4, offset = 0x4, fixed_abs, tag = 'smem constant byte address 0x4 - core index']
  #allocation1 [shape = 'u32[144,128]{1,0:T(1,128)}', space=vmem, size = 0x12000, scoped, tag = 'internal scratch']
  %s0 = inlined_call_operand.hbm [shape: f32[8,16], index: 0, kind: input, shape index: {}]
  %s1 = inlined_call_operand.hbm [shape: f32[16,256], index: 1, kind: input, shape index: {}]
  %s2 = inlined_call_operand.hbm [shape: f32[1,256], index: 2, kind: input, shape index: {}]
  %s3 = inlined_call_operand.hbm [shape: f32[256,512], index: 3, kind: input, shape index: {}]
  %s4 = inlined_call_operand.hbm [shape: f32[1,512], index: 4, kind: input, shape index: {}]
  %s5 = inlined_call_operand.hbm [shape: f32[512,1024], index: 5, kind: input, shape index: {}]
  %s6 = inlined_call_operand.hbm [shape: f32[1,1024], index: 6, kind: input, shape index: {}]
  %s7 = inlined_call_operand.hbm [shape: f32[1024,128], index: 7, kind: input, shape index: {}]
  %s8 = inlined_call_operand.hbm [shape: f32[1,128], index: 8, kind: input, shape index: {}]
  %s9 = inlined_call_operand.hbm [shape: f32[8,128], index: 9, kind: output, shape index: {}]
  %s10 = sld [smem:[#allocation0]]
  $region82: #{tpu_custom_call.1} parent=0
    _
  %s12 = ssub.s32 1, %s10
  %s13 = scalar_select 0, %s12, %s10
  $region1: #{tpu_custom_call.1} parent=0
    #allocation2 [shape = 'u8[4096]{0}', space=vmem, size = 0x1000, scoped, tag = 'input window, operand 0, single buffered']
    #allocation3 [shape = 's32[1]{0}', space=sflag, size = 0x4, scoped, tag = 'scoped memory for tpu_custom_call.1']
    #allocation4 [shape = 's32[1]{0}', space=sflag, size = 0x4, scoped, tag = 'scoped memory for tpu_custom_call.1']
    #allocation5 [shape = 'u8[16384]{0}', space=vmem, size = 0x4000, scoped, tag = 'input window, operand 1, single buffered']
    #allocation6 [shape = 's32[1]{0}', space=sflag, size = 0x4, scoped, tag = 'scoped memory for tpu_custom_call.1']
    #allocation7 [shape = 'u8[1024]{0}', space=vmem, size = 0x400, scoped, tag = 'input window, operand 2, single buffered']
    #allocation8 [shape = 'u8[524288]{0}', space=vmem, size = 0x80000, scoped, tag = 'input window, operand 3, single buffered']
    #allocation9 [shape = 's32[1]{0}', space=sflag, size = 0x4, scoped, tag = 'scoped memory for tpu_custom_call.1']
    #allocation10 [shape = 'u8[2048]{0}', space=vmem, size = 0x800, scoped, tag = 'input window, operand 4, single buffered']
    #allocation11 [shape = 'u8[2097152]{0}', space=vmem, size = 0x200000, scoped, tag = 'input window, operand 5, single buffered']
    #allocation12 [shape = 's32[1]{0}', space=sflag, size = 0x4, scoped, tag = 'scoped memory for tpu_custom_call.1']
    #allocation13 [shape = 'u8[4096]{0}', space=vmem, size = 0x1000, scoped, tag = 'input window, operand 6, single buffered']
    #allocation14 [shape = 'u8[524288]{0}', space=vmem, size = 0x80000, scoped, tag = 'input window, operand 7, single buffered']
    #allocation15 [shape = 's32[1]{0}', space=sflag, size = 0x4, scoped, tag = 'scoped memory for tpu_custom_call.1']
    #allocation16 [shape = 'u8[512]{0}', space=vmem, size = 0x400, scoped, tag = 'input window, operand 8, single buffered']
    #allocation17 [shape = 'u8[4096]{0}', space=vmem, size = 0x1000, scoped, tag = 'output window, operand 0, single buffered']
    %14 = vsyncpa [#allocation3], 0
    %15 = vsyncpa [#allocation6], 0
    %16 = vsyncpa [#allocation9], 0
    %17 = vsyncpa [#allocation12], 0
    %18 = vsyncpa [#allocation15], 0
    %19 = vsyncpa [#allocation4], 0
    // Predicated region
    $region2: #{tpu_custom_call.1} parent=1 // pred_check
      _
    $region3: #{tpu_custom_call.1} parent=1 // pred_check_branch
      %21 = sbr.rel (0) target = $region5
    $region4: #{tpu_custom_call.1} parent=1 // pred_region
      %s23 = ssub.s32 128, 128
      %24 = vsyncadd [#allocation3], %s23
      %s26 = sshll.u32 [#allocation2], 4
      %s27 = int_to_ptr.vmem [resolvable:$true] %s26
      %29 = dma.hbm_to_vmem [thread:$0]  %s0, 128, %s27, [#allocation3]
    $region5: #{tpu_custom_call.1} parent=1 // pred_fallthru
      _
    // Predicated region
    $region6: #{tpu_custom_call.1} parent=1 // pred_check
      _
    $region7: #{tpu_custom_call.1} parent=1 // pred_check_branch
      %31 = sbr.rel (0) target = $region9
    $region8: #{tpu_custom_call.1} parent=1 // pred_region
      %s33 = ssub.s32 512, 512
      %34 = vsyncadd [#allocation6], %s33
      %s35 = sshll.u32 [#allocation5], 4
      %s36 = int_to_ptr.vmem [resolvable:$true] %s35
      %41 = dma.hbm_to_vmem [thread:$0]  %s1, 512, %s36, [#allocation6], 256, 256, 16
    $region9: #{tpu_custom_call.1} parent=1 // pred_fallthru
      _
    // Predicated region
    $region10: #{tpu_custom_call.1} parent=1 // pred_check
      _
    $region11: #{tpu_custom_call.1} parent=1 // pred_check_branch
      %43 = sbr.rel (0) target = $region13
    $region12: #{tpu_custom_call.1} parent=1 // pred_region
      %s45 = ssub.s32 32, 32
      %46 = vsyncadd [#allocation6], %s45
      %s48 = sshll.u32 [#allocation7], 4
      %s49 = int_to_ptr.vmem [resolvable:$true] %s48
      %51 = dma.hbm_to_vmem [thread:$0]  %s2, 32, %s49, [#allocation6]
    $region13: #{tpu_custom_call.1} parent=1 // pred_fallthru
      _
    // Predicated region
    $region14: #{tpu_custom_call.1} parent=1 // pred_check
      _
    $region15: #{tpu_custom_call.1} parent=1 // pred_check_branch
      %53 = sbr.rel (0) target = $region17
    $region16: #{tpu_custom_call.1} parent=1 // pred_region
      %s55 = ssub.s32 16384, 16384
      %56 = vsyncadd [#allocation9], %s55
      %s57 = sshll.u32 [#allocation8], 4
      %s58 = int_to_ptr.vmem [resolvable:$true] %s57
      %63 = dma.hbm_to_vmem [thread:$0]  %s3, 16384, %s58, [#allocation9], 512, 512, 32
    $region17: #{tpu_custom_call.1} parent=1 // pred_fallthru
      _
    // Predicated region
    $region18: #{tpu_custom_call.1} parent=1 // pred_check
      _
    $region19: #{tpu_custom_call.1} parent=1 // pred_check_branch
      %65 = sbr.rel (0) target = $region21
    $region20: #{tpu_custom_call.1} parent=1 // pred_region
      %s67 = ssub.s32 64, 64
      %68 = vsyncadd [#allocation9], %s67
      %s70 = sshll.u32 [#allocation10], 4
      %s71 = int_to_ptr.vmem [resolvable:$true] %s70
      %73 = dma.hbm_to_vmem [thread:$0]  %s4, 64, %s71, [#allocation9]
    $region21: #{tpu_custom_call.1} parent=1 // pred_fallthru
      _
    // Predicated region
    $region22: #{tpu_custom_call.1} parent=1 // pred_check
      _
    $region23: #{tpu_custom_call.1} parent=1 // pred_check_branch
      %75 = sbr.rel (0) target = $region25
    $region24: #{tpu_custom_call.1} parent=1 // pred_region
      %s77 = ssub.s32 65536, 65536
      %78 = vsyncadd [#allocation12], %s77
      %s79 = sshll.u32 [#allocation11], 4
      %s80 = int_to_ptr.vmem [resolvable:$true] %s79
      %85 = dma.hbm_to_vmem [thread:$0]  %s5, 65536, %s80, [#allocation12], 1024, 1024, 64
    $region25: #{tpu_custom_call.1} parent=1 // pred_fallthru
      _
    // Predicated region
    $region26: #{tpu_custom_call.1} parent=1 // pred_check
      _
    $region27: #{tpu_custom_call.1} parent=1 // pred_check_branch
      %87 = sbr.rel (0) target = $region29
    $region28: #{tpu_custom_call.1} parent=1 // pred_region
      %s89 = ssub.s32 128, 128
      %90 = vsyncadd [#allocation12], %s89
      %s92 = sshll.u32 [#allocation13], 4
      %s93 = int_to_ptr.vmem [resolvable:$true] %s92
      %95 = dma.hbm_to_vmem [thread:$0]  %s6, 128, %s93, [#allocation12]
    $region29: #{tpu_custom_call.1} parent=1 // pred_fallthru
      _
    // Predicated region
    $region30: #{tpu_custom_call.1} parent=1 // pred_check
      _
    $region31: #{tpu_custom_call.1} parent=1 // pred_check_branch
      %97 = sbr.rel (0) target = $region33
    $region32: #{tpu_custom_call.1} parent=1 // pred_region
      %s99 = ssub.s32 16384, 16384
      %100 = vsyncadd [#allocation15], %s99
      %s101 = sshll.u32 [#allocation14], 4
      %s102 = int_to_ptr.vmem [resolvable:$true] %s101
      %107 = dma.hbm_to_vmem [thread:$0]  %s7, 16384, %s102, [#allocation15], 128, 128, 8
    $region33: #{tpu_custom_call.1} parent=1 // pred_fallthru
      _
    // Predicated region
    $region34: #{tpu_custom_call.1} parent=1 // pred_check
      _
    $region35: #{tpu_custom_call.1} parent=1 // pred_check_branch
      %109 = sbr.rel (0) target = $region37
    $region36: #{tpu_custom_call.1} parent=1 // pred_region
      %s111 = ssub.s32 16, 16
      %112 = vsyncadd [#allocation15], %s111
      %s114 = sshll.u32 [#allocation16], 4
      %s115 = int_to_ptr.vmem [resolvable:$true] %s114
      %117 = dma.hbm_to_vmem [thread:$0]  %s8, 16, %s115, [#allocation15]
    $region37: #{tpu_custom_call.1} parent=1 // pred_fallthru
      _
    // Predicated region
    $region38: #{tpu_custom_call.1} parent=1 // pred_check
      _
    $region39: #{tpu_custom_call.1} parent=1 // pred_check_branch
      %119 = sbr.rel (0) target = $region41
    $region40: #{tpu_custom_call.1} parent=1 // pred_region
      %120 = dma.done [#allocation3], 128
    $region41: #{tpu_custom_call.1} parent=1 // pred_fallthru
      _
    // Predicated region
    $region42: #{tpu_custom_call.1} parent=1 // pred_check
      _
    $region43: #{tpu_custom_call.1} parent=1 // pred_check_branch
      %122 = sbr.rel (0) target = $region45
    $region44: #{tpu_custom_call.1} parent=1 // pred_region
      %123 = dma.done [#allocation6], 512
    $region45: #{tpu_custom_call.1} parent=1 // pred_fallthru
      _
    // Predicated region
    $region46: #{tpu_custom_call.1} parent=1 // pred_check
      _
    $region47: #{tpu_custom_call.1} parent=1 // pred_check_branch
      %125 = sbr.rel (0) target = $region49
    $region48: #{tpu_custom_call.1} parent=1 // pred_region
      %126 = dma.done [#allocation6], 32
    $region49: #{tpu_custom_call.1} parent=1 // pred_fallthru
      _
    // Predicated region
    $region50: #{tpu_custom_call.1} parent=1 // pred_check
      _
    $region51: #{tpu_custom_call.1} parent=1 // pred_check_branch
      %128 = sbr.rel (0) target = $region53
    $region52: #{tpu_custom_call.1} parent=1 // pred_region
      %129 = dma.done [#allocation9], 16384
    $region53: #{tpu_custom_call.1} parent=1 // pred_fallthru
      _
    // Predicated region
    $region54: #{tpu_custom_call.1} parent=1 // pred_check
      _
    $region55: #{tpu_custom_call.1} parent=1 // pred_check_branch
      %131 = sbr.rel (0) target = $region57
    $region56: #{tpu_custom_call.1} parent=1 // pred_region
      %132 = dma.done [#allocation9], 64
    $region57: #{tpu_custom_call.1} parent=1 // pred_fallthru
      _
    // Predicated region
    $region58: #{tpu_custom_call.1} parent=1 // pred_check
      _
    $region59: #{tpu_custom_call.1} parent=1 // pred_check_branch
      %134 = sbr.rel (0) target = $region61
    $region60: #{tpu_custom_call.1} parent=1 // pred_region
      %135 = dma.done [#allocation12], 65536
    $region61: #{tpu_custom_call.1} parent=1 // pred_fallthru
      _
    // Predicated region
    $region62: #{tpu_custom_call.1} parent=1 // pred_check
      _
    $region63: #{tpu_custom_call.1} parent=1 // pred_check_branch
      %137 = sbr.rel (0) target = $region65
    $region64: #{tpu_custom_call.1} parent=1 // pred_region
      %138 = dma.done [#allocation12], 128
    $region65: #{tpu_custom_call.1} parent=1 // pred_fallthru
      _
    // Predicated region
    $region66: #{tpu_custom_call.1} parent=1 // pred_check
      _
    $region67: #{tpu_custom_call.1} parent=1 // pred_check_branch
      %140 = sbr.rel (0) target = $region69
    $region68: #{tpu_custom_call.1} parent=1 // pred_region
      %141 = dma.done [#allocation15], 16384
    $region69: #{tpu_custom_call.1} parent=1 // pred_fallthru
      _
    // Predicated region
    $region70: #{tpu_custom_call.1} parent=1 // pred_check
      _
    $region71: #{tpu_custom_call.1} parent=1 // pred_check_branch
      %143 = sbr.rel (0) target = $region73
    $region72: #{tpu_custom_call.1} parent=1 // pred_region
      %144 = dma.done [#allocation15], 16
    $region73: #{tpu_custom_call.1} parent=1 // pred_fallthru
      _
    %v145 = vld [vmem:[#allocation2] sm:$0xff]
    %v146 = vld [vmem:[#allocation5] sm:$0xff]
    %v147 = vld [vmem:[#allocation5 + $0x8] sm:$0xff]
    %v148 = vld [vmem:[#allocation5 + $0x10] sm:$0xff]
    %v149 = vld [vmem:[#allocation5 + $0x18] sm:$0xff]
    %v150 = vld [vmem:[#allocation7] sm:$0x3]
    %v152 = vlaneseq
    %v153 = vshrl.u32 %v152, 7
    %v154 = vsub.s32 0, %v153
    %v155 = vrot.slane %v150, %v154
    %v156 = vlaneseq
    %v157 = vshrl.u32 %v156, 7
    %v158 = vsub.s32 1, %v157
    %v159 = vrot.slane %v150, %v158
    %vm162 = vcmask 130048
    %v164 = vsel %vm162, %v145, 0
    %166 = vmatprep.subr.mxu0 %v147
    %167 = vmatpush1.msra.mxu0 %v146
    %168 = vmatprep.subr.mxu0 %v149
    %169 = vmatpush1.msra.mxu0 %v148
    %170 = vmatprep.subr.mxu0 0.0
    %171 = vmatpush1.msra.mxu0 0.0
    %172 = vmatprep.subr.mxu0 0.0
    %173 = vmatpush1.msra.mxu0 0.0
    %174 = vmatprep.subr.mxu0 0.0
    %175 = vmatpush1.msra.mxu0 0.0
    %176 = vmatprep.subr.mxu0 0.0
    %177 = vmatpush1.msra.mxu0 0.0
    %178 = vmatprep.subr.mxu0 0.0
    %179 = vmatpush1.msra.mxu0 0.0
    %180 = vmatprep.subr.mxu0 0.0
    %181 = vmatpush1.msra.mxu0 0.0
    %182 = vmatprep.subr.mxu0 0.0
    %183 = vmatpush1.msra.mxu0 0.0
    %184 = vmatprep.subr.mxu0 0.0
    %185 = vmatpush1.msra.mxu0 0.0
    %186 = vmatprep.subr.mxu0 0.0
    %187 = vmatpush1.msra.mxu0 0.0
    %188 = vmatprep.subr.mxu0 0.0
    %189 = vmatpush1.msra.mxu0 0.0
    %190 = vmatprep.subr.mxu0 0.0
    %191 = vmatpush1.msra.mxu0 0.0
    %192 = vmatprep.subr.mxu0 0.0
    %193 = vmatpush1.msra.mxu0 0.0
    %194 = vmatprep.subr.mxu0 0.0
    %195 = vmatpush1.msra.mxu0 0.0
    %196 = vmatprep.subr.mxu0 0.0
    %197 = vmatpush1.msra.mxu0 0.0
    %198 = vmatprep.subr.mxu0 0.0
    %199 = vmatpush1.msra.mxu0 0.0
    %200 = vmatprep.subr.mxu0 0.0
    %201 = vmatpush1.msra.mxu0 0.0
    %202 = vmatprep.subr.mxu0 0.0
    %203 = vmatpush1.msra.mxu0 0.0
    %204 = vmatprep.subr.mxu0 0.0
    %205 = vmatpush1.msra.mxu0 0.0
    %206 = vmatprep.subr.mxu0 0.0
    %207 = vmatpush1.msra.mxu0 0.0
    %208 = vmatprep.subr.mxu0 0.0
    %209 = vmatpush1.msra.mxu0 0.0
    %210 = vmatprep.subr.mxu0 0.0
    %211 = vmatpush1.msra.mxu0 0.0
    %212 = vmatprep.subr.mxu0 0.0
    %213 = vmatpush1.msra.mxu0 0.0
    %214 = vmatprep.subr.mxu0 0.0
    %215 = vmatpush1.msra.mxu0 0.0
    %216 = vmatprep.subr.mxu0 0.0
    %217 = vmatpush1.msra.mxu0 0.0
    %218 = vmatprep.subr.mxu0 0.0
    %219 = vmatpush1.msra.mxu0 0.0
    %220 = vmatprep.subr.mxu0 0.0
    %221 = vmatpush1.msra.mxu0 0.0
    %222 = vmatprep.subr.mxu0 0.0
    %223 = vmatpush1.msra.mxu0 0.0
    %224 = vmatprep.subr.mxu0 0.0
    %225 = vmatpush1.msra.mxu0 0.0
    %226 = vmatprep.subr.mxu0 0.0
    %227 = vmatpush1.msra.mxu0 0.0
    %228 = vmatprep.subr.mxu0 0.0
    %229 = vmatpush1.msra.mxu0 0.0
    %230 = vmatprep.mubr.f32.mxu0 0.0
    %231 = vmatmul.mubr.f32.gmra.mrb[0].mxu0 %v164
    %v232 = vpop.f32.mrb[0].mxu0
    %v233 = vadd.f32 %v155, %v232
    %v234 = vpop.f32.mrb[0].mxu0
    %v235 = vadd.f32 %v159, %v234
    %236 = vdwg.mxu0
    %v237 = vmax.f32 %v233, 0.0
    %v238 = vmax.f32 %v235, 0.0
    %v239 = vld [vmem:[#allocation8] sm:$0xff]
    %v240 = vld [vmem:[#allocation8 + $0x8] sm:$0xff]
    %v241 = vld [vmem:[#allocation8 + $0x10] sm:$0xff]
    %v242 = vld [vmem:[#allocation8 + $0x18] sm:$0xff]
    %v243 = vld [vmem:[#allocation8 + $0x20] sm:$0xff]
    %v244 = vld [vmem:[#allocation8 + $0x28] sm:$0xff]
    %v245 = vld [vmem:[#allocation8 + $0x30] sm:$0xff]
    %v246 = vld [vmem:[#allocation8 + $0x38] sm:$0xff]
    %v247 = vld [vmem:[#allocation8 + $0x40] sm:$0xff]
    %v248 = vld [vmem:[#allocation8 + $0x48] sm:$0xff]
    %v249 = vld [vmem:[#allocation8 + $0x50] sm:$0xff]
    %v250 = vld [vmem:[#allocation8 + $0x58] sm:$0xff]
    %v251 = vld [vmem:[#allocation8 + $0x60] sm:$0xff]
    %v252 = vld [vmem:[#allocation8 + $0x68] sm:$0xff]
    %v253 = vld [vmem:[#allocation8 + $0x70] sm:$0xff]
    %v254 = vld [vmem:[#allocation8 + $0x78] sm:$0xff]
    %v255 = vld [vmem:[#allocation8 + $0x80] sm:$0xff]
    %v256 = vld [vmem:[#allocation8 + $0x88] sm:$0xff]
    %v257 = vld [vmem:[#allocation8 + $0x90] sm:$0xff]
    %v258 = vld [vmem:[#allocation8 + $0x98] sm:$0xff]
    %v259 = vld [vmem:[#allocation8 + $0xa0] sm:$0xff]
    %v260 = vld [vmem:[#allocation8 + $0xa8] sm:$0xff]
    %v261 = vld [vmem:[#allocation8 + $0xb0] sm:$0xff]
    %v262 = vld [vmem:[#allocation8 + $0xb8] sm:$0xff]
    %v263 = vld [vmem:[#allocation8 + $0xc0] sm:$0xff]
    %v264 = vld [vmem:[#allocation8 + $0xc8] sm:$0xff]
    %v265 = vld [vmem:[#allocation8 + $0xd0] sm:$0xff]
    %v266 = vld [vmem:[#allocation8 + $0xd8] sm:$0xff]
    %v267 = vld [vmem:[#allocation8 + $0xe0] sm:$0xff]
    %v268 = vld [vmem:[#allocation8 + $0xe8] sm:$0xff]
    %v269 = vld [vmem:[#allocation8 + $0xf0] sm:$0xff]
    %v270 = vld [vmem:[#allocation8 + $0xf8] sm:$0xff]
    %v271 = vld [vmem:[#allocation8 + $0x100] sm:$0xff]
    %v272 = vld [vmem:[#allocation8 + $0x108] sm:$0xff]
    %v273 = vld [vmem:[#allocation8 + $0x110] sm:$0xff]
    %v274 = vld [vmem:[#allocation8 + $0x118] sm:$0xff]
    %v275 = vld [vmem:[#allocation8 + $0x120] sm:$0xff]
    %v276 = vld [vmem:[#allocation8 + $0x128] sm:$0xff]
    %v277 = vld [vmem:[#allocation8 + $0x130] sm:$0xff]
    %v278 = vld [vmem:[#allocation8 + $0x138] sm:$0xff]
    %v279 = vld [vmem:[#allocation8 + $0x140] sm:$0xff]
    %v280 = vld [vmem:[#allocation8 + $0x148] sm:$0xff]
    %v281 = vld [vmem:[#allocation8 + $0x150] sm:$0xff]
    %v282 = vld [vmem:[#allocation8 + $0x158] sm:$0xff]
    %v283 = vld [vmem:[#allocation8 + $0x160] sm:$0xff]
    %v284 = vld [vmem:[#allocation8 + $0x168] sm:$0xff]
    %v285 = vld [vmem:[#allocation8 + $0x170] sm:$0xff]
    %v286 = vld [vmem:[#allocation8 + $0x178] sm:$0xff]
    %v287 = vld [vmem:[#allocation8 + $0x180] sm:$0xff]
    %v288 = vld [vmem:[#allocation8 + $0x188] sm:$0xff]
    %v289 = vld [vmem:[#allocation8 + $0x190] sm:$0xff]
    %v290 = vld [vmem:[#allocation8 + $0x198] sm:$0xff]
    %v291 = vld [vmem:[#allocation8 + $0x1a0] sm:$0xff]
    %v292 = vld [vmem:[#allocation8 + $0x1a8] sm:$0xff]
    %v293 = vld [vmem:[#allocation8 + $0x1b0] sm:$0xff]
    %v294 = vld [vmem:[#allocation8 + $0x1b8] sm:$0xff]
    %v295 = vld [vmem:[#allocation8 + $0x1c0] sm:$0xff]
    %v296 = vld [vmem:[#allocation8 + $0x1c8] sm:$0xff]
    %v297 = vld [vmem:[#allocation8 + $0x1d0] sm:$0xff]
    %v298 = vld [vmem:[#allocation8 + $0x1d8] sm:$0xff]
    %v299 = vld [vmem:[#allocation8 + $0x1e0] sm:$0xff]
    %v300 = vld [vmem:[#allocation8 + $0x1e8] sm:$0xff]
    %v301 = vld [vmem:[#allocation8 + $0x1f0] sm:$0xff]
    %v302 = vld [vmem:[#allocation8 + $0x1f8] sm:$0xff]
    %v303 = vld [vmem:[#allocation8 + $0x200] sm:$0xff]
    %v304 = vld [vmem:[#allocation8 + $0x208] sm:$0xff]
    %v305 = vld [vmem:[#allocation8 + $0x210] sm:$0xff]
    %v306 = vld [vmem:[#allocation8 + $0x218] sm:$0xff]
    %v307 = vld [vmem:[#allocation8 + $0x220] sm:$0xff]
    %v308 = vld [vmem:[#allocation8 + $0x228] sm:$0xff]
    %v309 = vld [vmem:[#allocation8 + $0x230] sm:$0xff]
    %v310 = vld [vmem:[#allocation8 + $0x238] sm:$0xff]
    %v311 = vld [vmem:[#allocation8 + $0x240] sm:$0xff]
    %v312 = vld [vmem:[#allocation8 + $0x248] sm:$0xff]
    %v313 = vld [vmem:[#allocation8 + $0x250] sm:$0xff]
    %v314 = vld [vmem:[#allocation8 + $0x258] sm:$0xff]
    %v315 = vld [vmem:[#allocation8 + $0x260] sm:$0xff]
    %v316 = vld [vmem:[#allocation8 + $0x268] sm:$0xff]
    %v317 = vld [vmem:[#allocation8 + $0x270] sm:$0xff]
    %v318 = vld [vmem:[#allocation8 + $0x278] sm:$0xff]
    %v319 = vld [vmem:[#allocation8 + $0x280] sm:$0xff]
    %v320 = vld [vmem:[#allocation8 + $0x288] sm:$0xff]
    %v321 = vld [vmem:[#allocation8 + $0x290] sm:$0xff]
    %v322 = vld [vmem:[#allocation8 + $0x298] sm:$0xff]
    %v323 = vld [vmem:[#allocation8 + $0x2a0] sm:$0xff]
    %v324 = vld [vmem:[#allocation8 + $0x2a8] sm:$0xff]
    %v325 = vld [vmem:[#allocation8 + $0x2b0] sm:$0xff]
    %v326 = vld [vmem:[#allocation8 + $0x2b8] sm:$0xff]
    %v327 = vld [vmem:[#allocation8 + $0x2c0] sm:$0xff]
    %v328 = vld [vmem:[#allocation8 + $0x2c8] sm:$0xff]
    %v329 = vld [vmem:[#allocation8 + $0x2d0] sm:$0xff]
    %v330 = vld [vmem:[#allocation8 + $0x2d8] sm:$0xff]
    %v331 = vld [vmem:[#allocation8 + $0x2e0] sm:$0xff]
    %v332 = vld [vmem:[#allocation8 + $0x2e8] sm:$0xff]
    %v333 = vld [vmem:[#allocation8 + $0x2f0] sm:$0xff]
    %v334 = vld [vmem:[#allocation8 + $0x2f8] sm:$0xff]
    %v335 = vld [vmem:[#allocation8 + $0x300] sm:$0xff]
    %v336 = vld [vmem:[#allocation8 + $0x308] sm:$0xff]
    %v337 = vld [vmem:[#allocation8 + $0x310] sm:$0xff]
    %v338 = vld [vmem:[#allocation8 + $0x318] sm:$0xff]
    %v339 = vld [vmem:[#allocation8 + $0x320] sm:$0xff]
    %v340 = vld [vmem:[#allocation8 + $0x328] sm:$0xff]
    %v341 = vld [vmem:[#allocation8 + $0x330] sm:$0xff]
    %v342 = vld [vmem:[#allocation8 + $0x338] sm:$0xff]
    %v343 = vld [vmem:[#allocation8 + $0x340] sm:$0xff]
    %v344 = vld [vmem:[#allocation8 + $0x348] sm:$0xff]
    %v345 = vld [vmem:[#allocation8 + $0x350] sm:$0xff]
    %v346 = vld [vmem:[#allocation8 + $0x358] sm:$0xff]
    %v347 = vld [vmem:[#allocation8 + $0x360] sm:$0xff]
    %v348 = vld [vmem:[#allocation8 + $0x368] sm:$0xff]
    %v349 = vld [vmem:[#allocation8 + $0x370] sm:$0xff]
    %v350 = vld [vmem:[#allocation8 + $0x378] sm:$0xff]
    %v351 = vld [vmem:[#allocation8 + $0x380] sm:$0xff]
    %v352 = vld [vmem:[#allocation8 + $0x388] sm:$0xff]
    %v353 = vld [vmem:[#allocation8 + $0x390] sm:$0xff]
    %v354 = vld [vmem:[#allocation8 + $0x398] sm:$0xff]
    %v355 = vld [vmem:[#allocation8 + $0x3a0] sm:$0xff]
    %v356 = vld [vmem:[#allocation8 + $0x3a8] sm:$0xff]
    %v357 = vld [vmem:[#allocation8 + $0x3b0] sm:$0xff]
    %v358 = vld [vmem:[#allocation8 + $0x3b8] sm:$0xff]
    %v359 = vld [vmem:[#allocation8 + $0x3c0] sm:$0xff]
    %v360 = vld [vmem:[#allocation8 + $0x3c8] sm:$0xff]
    %v361 = vld [vmem:[#allocation8 + $0x3d0] sm:$0xff]
    %v362 = vld [vmem:[#allocation8 + $0x3d8] sm:$0xff]
    %v363 = vld [vmem:[#allocation8 + $0x3e0] sm:$0xff]
    %v364 = vld [vmem:[#allocation8 + $0x3e8] sm:$0xff]
    %v365 = vld [vmem:[#allocation8 + $0x3f0] sm:$0xff]
    %v366 = vld [vmem:[#allocation8 + $0x3f8] sm:$0xff]
    %v367 = vld [vmem:[#allocation10] sm:$0xf]
    %v369 = vlaneseq
    %v370 = vshrl.u32 %v369, 7
    %v371 = vsub.s32 0, %v370
    %v372 = vrot.slane %v367, %v371
    %v373 = vlaneseq
    %v374 = vshrl.u32 %v373, 7
    %v375 = vsub.s32 1, %v374
    %v376 = vrot.slane %v367, %v375
    %v377 = vlaneseq
    %v378 = vshrl.u32 %v377, 7
    %v379 = vsub.s32 2, %v378
    %v380 = vrot.slane %v367, %v379
    %v381 = vlaneseq
    %v382 = vshrl.u32 %v381, 7
    %v383 = vsub.s32 3, %v382
    %v384 = vrot.slane %v367, %v383
    %389 = vmatprep.subr.mxu0 %v240
    %390 = vmatpush1.msra.mxu0 %v239
    %391 = vmatprep.subr.mxu0 %v244
    %392 = vmatpush1.msra.mxu0 %v243
    %393 = vmatprep.subr.mxu0 %v248
    %394 = vmatpush1.msra.mxu0 %v247
    %395 = vmatprep.subr.mxu0 %v252
    %396 = vmatpush1.msra.mxu0 %v251
    %397 = vmatprep.subr.mxu0 %v256
    %398 = vmatpush1.msra.mxu0 %v255
    %399 = vmatprep.subr.mxu0 %v260
    %400 = vmatpush1.msra.mxu0 %v259
    %401 = vmatprep.subr.mxu0 %v264
    %402 = vmatpush1.msra.mxu0 %v263
    %403 = vmatprep.subr.mxu0 %v268
    %404 = vmatpush1.msra.mxu0 %v267
    %405 = vmatprep.subr.mxu0 %v272
    %406 = vmatpush1.msra.mxu0 %v271
    %407 = vmatprep.subr.mxu0 %v276
    %408 = vmatpush1.msra.mxu0 %v275
    %409 = vmatprep.subr.mxu0 %v280
    %410 = vmatpush1.msra.mxu0 %v279
    %411 = vmatprep.subr.mxu0 %v284
    %412 = vmatpush1.msra.mxu0 %v283
    %413 = vmatprep.subr.mxu0 %v288
    %414 = vmatpush1.msra.mxu0 %v287
    %415 = vmatprep.subr.mxu0 %v292
    %416 = vmatpush1.msra.mxu0 %v291
    %417 = vmatprep.subr.mxu0 %v296
    %418 = vmatpush1.msra.mxu0 %v295
    %419 = vmatprep.subr.mxu0 %v300
    %420 = vmatpush1.msra.mxu0 %v299
    %421 = vmatprep.subr.mxu0 %v304
    %422 = vmatpush1.msra.mxu0 %v303
    %423 = vmatprep.subr.mxu0 %v308
    %424 = vmatpush1.msra.mxu0 %v307
    %425 = vmatprep.subr.mxu0 %v312
    %426 = vmatpush1.msra.mxu0 %v311
    %427 = vmatprep.subr.mxu0 %v316
    %428 = vmatpush1.msra.mxu0 %v315
    %429 = vmatprep.subr.mxu0 %v320
    %430 = vmatpush1.msra.mxu0 %v319
    %431 = vmatprep.subr.mxu0 %v324
    %432 = vmatpush1.msra.mxu0 %v323
    %433 = vmatprep.subr.mxu0 %v328
    %434 = vmatpush1.msra.mxu0 %v327
    %435 = vmatprep.subr.mxu0 %v332
    %436 = vmatpush1.msra.mxu0 %v331
    %437 = vmatprep.subr.mxu0 %v336
    %438 = vmatpush1.msra.mxu0 %v335
    %439 = vmatprep.subr.mxu0 %v340
    %440 = vmatpush1.msra.mxu0 %v339
    %441 = vmatprep.subr.mxu0 %v344
    %442 = vmatpush1.msra.mxu0 %v343
    %443 = vmatprep.subr.mxu0 %v348
    %444 = vmatpush1.msra.mxu0 %v347
    %445 = vmatprep.subr.mxu0 %v352
    %446 = vmatpush1.msra.mxu0 %v351
    %447 = vmatprep.subr.mxu0 %v356
    %448 = vmatpush1.msra.mxu0 %v355
    %449 = vmatprep.subr.mxu0 %v360
    %450 = vmatpush1.msra.mxu0 %v359
    %451 = vmatprep.subr.mxu0 %v364
    %452 = vmatpush1.msra.mxu0 %v363
    %453 = vmatprep.mubr.f32.mxu0 %v238
    %454 = vmatmul.mubr.f32.gmra.mrb[0].mxu0 %v237
    %v455 = vpop.f32.mrb[0].mxu0
    %v456 = vadd.f32 %v372, %v455
    %v457 = vpop.f32.mrb[0].mxu0
    %v458 = vadd.f32 %v376, %v457
    %459 = vdwg.mxu0
    %460 = vmatprep.subr.mxu0 %v242
    %461 = vmatpush1.msra.mxu0 %v241
    %462 = vmatprep.subr.mxu0 %v246
    %463 = vmatpush1.msra.mxu0 %v245
    %464 = vmatprep.subr.mxu0 %v250
    %465 = vmatpush1.msra.mxu0 %v249
    %466 = vmatprep.subr.mxu0 %v254
    %467 = vmatpush1.msra.mxu0 %v253
    %468 = vmatprep.subr.mxu0 %v258
    %469 = vmatpush1.msra.mxu0 %v257
    %470 = vmatprep.subr.mxu0 %v262
    %471 = vmatpush1.msra.mxu0 %v261
    %472 = vmatprep.subr.mxu0 %v266
    %473 = vmatpush1.msra.mxu0 %v265
    %474 = vmatprep.subr.mxu0 %v270
    %475 = vmatpush1.msra.mxu0 %v269
    %476 = vmatprep.subr.mxu0 %v274
    %477 = vmatpush1.msra.mxu0 %v273
    %478 = vmatprep.subr.mxu0 %v278
    %479 = vmatpush1.msra.mxu0 %v277
    %480 = vmatprep.subr.mxu0 %v282
    %481 = vmatpush1.msra.mxu0 %v281
    %482 = vmatprep.subr.mxu0 %v286
    %483 = vmatpush1.msra.mxu0 %v285
    %484 = vmatprep.subr.mxu0 %v290
    %485 = vmatpush1.msra.mxu0 %v289
    %486 = vmatprep.subr.mxu0 %v294
    %487 = vmatpush1.msra.mxu0 %v293
    %488 = vmatprep.subr.mxu0 %v298
    %489 = vmatpush1.msra.mxu0 %v297
    %490 = vmatprep.subr.mxu0 %v302
    %491 = vmatpush1.msra.mxu0 %v301
    %492 = vmatprep.subr.mxu0 %v306
    %493 = vmatpush1.msra.mxu0 %v305
    %494 = vmatprep.subr.mxu0 %v310
    %495 = vmatpush1.msra.mxu0 %v309
    %496 = vmatprep.subr.mxu0 %v314
    %497 = vmatpush1.msra.mxu0 %v313
    %498 = vmatprep.subr.mxu0 %v318
    %499 = vmatpush1.msra.mxu0 %v317
    %500 = vmatprep.subr.mxu0 %v322
    %501 = vmatpush1.msra.mxu0 %v321
    %502 = vmatprep.subr.mxu0 %v326
    %503 = vmatpush1.msra.mxu0 %v325
    %504 = vmatprep.subr.mxu0 %v330
    %505 = vmatpush1.msra.mxu0 %v329
    %506 = vmatprep.subr.mxu0 %v334
    %507 = vmatpush1.msra.mxu0 %v333
    %508 = vmatprep.subr.mxu0 %v338
    %509 = vmatpush1.msra.mxu0 %v337
    %510 = vmatprep.subr.mxu0 %v342
    %511 = vmatpush1.msra.mxu0 %v341
    %512 = vmatprep.subr.mxu0 %v346
    %513 = vmatpush1.msra.mxu0 %v345
    %514 = vmatprep.subr.mxu0 %v350
    %515 = vmatpush1.msra.mxu0 %v349
    %516 = vmatprep.subr.mxu0 %v354
    %517 = vmatpush1.msra.mxu0 %v353
    %518 = vmatprep.subr.mxu0 %v358
    %519 = vmatpush1.msra.mxu0 %v357
    %520 = vmatprep.subr.mxu0 %v362
    %521 = vmatpush1.msra.mxu0 %v361
    %522 = vmatprep.subr.mxu0 %v366
    %523 = vmatpush1.msra.mxu0 %v365
    %524 = vmatprep.mubr.f32.mxu0 %v238
    %525 = vmatmul.mubr.f32.gmra.mrb[0].mxu0 %v237
    %v526 = vpop.f32.mrb[0].mxu0
    %v527 = vadd.f32 %v380, %v526
    %v528 = vpop.f32.mrb[0].mxu0
    %v529 = vadd.f32 %v384, %v528
    %530 = vdwg.mxu0
    %v531 = vmax.f32 %v456, 0.0
    %v532 = vmax.f32 %v458, 0.0
    %v533 = vmax.f32 %v527, 0.0
    %v534 = vmax.f32 %v529, 0.0
    %v535 = vld [vmem:[#allocation11] sm:$0xff]
    %v536 = vld [vmem:[#allocation11 + $0x8] sm:$0xff]
    %v537 = vld [vmem:[#allocation11 + $0x10] sm:$0xff]
    %v538 = vld [vmem:[#allocation11 + $0x18] sm:$0xff]
    %v539 = vld [vmem:[#allocation11 + $0x20] sm:$0xff]
    %v540 = vld [vmem:[#allocation11 + $0x28] sm:$0xff]
    %v541 = vld [vmem:[#allocation11 + $0x30] sm:$0xff]
    %v542 = vld [vmem:[#allocation11 + $0x38] sm:$0xff]
    %v543 = vld [vmem:[#allocation11 + $0x40] sm:$0xff]
    %v544 = vld [vmem:[#allocation11 + $0x48] sm:$0xff]
    %v545 = vld [vmem:[#allocation11 + $0x50] sm:$0xff]
    %v546 = vld [vmem:[#allocation11 + $0x58] sm:$0xff]
    %v547 = vld [vmem:[#allocation11 + $0x60] sm:$0xff]
    %v548 = vld [vmem:[#allocation11 + $0x68] sm:$0xff]
    %v549 = vld [vmem:[#allocation11 + $0x70] sm:$0xff]
    %v550 = vld [vmem:[#allocation11 + $0x78] sm:$0xff]
    %v551 = vld [vmem:[#allocation11 + $0x80] sm:$0xff]
    %v552 = vld [vmem:[#allocation11 + $0x88] sm:$0xff]
    %v553 = vld [vmem:[#allocation11 + $0x90] sm:$0xff]
    %v554 = vld [vmem:[#allocation11 + $0x98] sm:$0xff]
    %v555 = vld [vmem:[#allocation11 + $0xa0] sm:$0xff]
    %v556 = vld [vmem:[#allocation11 + $0xa8] sm:$0xff]
    %v557 = vld [vmem:[#allocation11 + $0xb0] sm:$0xff]
    %v558 = vld [vmem:[#allocation11 + $0xb8] sm:$0xff]
    %v559 = vld [vmem:[#allocation11 + $0xc0] sm:$0xff]
    %v560 = vld [vmem:[#allocation11 + $0xc8] sm:$0xff]
    %v561 = vld [vmem:[#allocation11 + $0xd0] sm:$0xff]
    %v562 = vld [vmem:[#allocation11 + $0xd8] sm:$0xff]
    %v563 = vld [vmem:[#allocation11 + $0xe0] sm:$0xff]
    %v564 = vld [vmem:[#allocation11 + $0xe8] sm:$0xff]
    %v565 = vld [vmem:[#allocation11 + $0xf0] sm:$0xff]
    %v566 = vld [vmem:[#allocation11 + $0xf8] sm:$0xff]
    %v567 = vld [vmem:[#allocation11 + $0x100] sm:$0xff]
    %v568 = vld [vmem:[#allocation11 + $0x108] sm:$0xff]
    %v569 = vld [vmem:[#allocation11 + $0x110] sm:$0xff]
    %v570 = vld [vmem:[#allocation11 + $0x118] sm:$0xff]
    %v571 = vld [vmem:[#allocation11 + $0x120] sm:$0xff]
    %v572 = vld [vmem:[#allocation11 + $0x128] sm:$0xff]
    %v573 = vld [vmem:[#allocation11 + $0x130] sm:$0xff]
    %v574 = vld [vmem:[#allocation11 + $0x138] sm:$0xff]
    %v575 = vld [vmem:[#allocation11 + $0x140] sm:$0xff]
    %v576 = vld [vmem:[#allocation11 + $0x148] sm:$0xff]
    %v577 = vld [vmem:[#allocation11 + $0x150] sm:$0xff]
    %v578 = vld [vmem:[#allocation11 + $0x158] sm:$0xff]
    %v579 = vld [vmem:[#allocation11 + $0x160] sm:$0xff]
    %v580 = vld [vmem:[#allocation11 + $0x168] sm:$0xff]
    %v581 = vld [vmem:[#allocation11 + $0x170] sm:$0xff]
    %v582 = vld [vmem:[#allocation11 + $0x178] sm:$0xff]
    %v583 = vld [vmem:[#allocation11 + $0x180] sm:$0xff]
    %v584 = vld [vmem:[#allocation11 + $0x188] sm:$0xff]
    %v585 = vld [vmem:[#allocation11 + $0x190] sm:$0xff]
    %v586 = vld [vmem:[#allocation11 + $0x198] sm:$0xff]
    %v587 = vld [vmem:[#allocation11 + $0x1a0] sm:$0xff]
    %v588 = vld [vmem:[#allocation11 + $0x1a8] sm:$0xff]
    %v589 = vld [vmem:[#allocation11 + $0x1b0] sm:$0xff]
    %v590 = vld [vmem:[#allocation11 + $0x1b8] sm:$0xff]
    %v591 = vld [vmem:[#allocation11 + $0x1c0] sm:$0xff]
    %v592 = vld [vmem:[#allocation11 + $0x1c8] sm:$0xff]
    %v593 = vld [vmem:[#allocation11 + $0x1d0] sm:$0xff]
    %v594 = vld [vmem:[#allocation11 + $0x1d8] sm:$0xff]
    %v595 = vld [vmem:[#allocation11 + $0x1e0] sm:$0xff]
    %v596 = vld [vmem:[#allocation11 + $0x1e8] sm:$0xff]
    %v597 = vld [vmem:[#allocation11 + $0x1f0] sm:$0xff]
    %v598 = vld [vmem:[#allocation11 + $0x1f8] sm:$0xff]
    %v599 = vld [vmem:[#allocation11 + $0x200] sm:$0xff]
    %v600 = vld [vmem:[#allocation11 + $0x208] sm:$0xff]
    %v601 = vld [vmem:[#allocation11 + $0x210] sm:$0xff]
    %v602 = vld [vmem:[#allocation11 + $0x218] sm:$0xff]
    %v603 = vld [vmem:[#allocation11 + $0x220] sm:$0xff]
    %v604 = vld [vmem:[#allocation11 + $0x228] sm:$0xff]
    %v605 = vld [vmem:[#allocation11 + $0x230] sm:$0xff]
    %v606 = vld [vmem:[#allocation11 + $0x238] sm:$0xff]
    %v607 = vld [vmem:[#allocation11 + $0x240] sm:$0xff]
    %v608 = vld [vmem:[#allocation11 + $0x248] sm:$0xff]
    %v609 = vld [vmem:[#allocation11 + $0x250] sm:$0xff]
    %v610 = vld [vmem:[#allocation11 + $0x258] sm:$0xff]
    %v611 = vld [vmem:[#allocation11 + $0x260] sm:$0xff]
    %v612 = vld [vmem:[#allocation11 + $0x268] sm:$0xff]
    %v613 = vld [vmem:[#allocation11 + $0x270] sm:$0xff]
    %v614 = vld [vmem:[#allocation11 + $0x278] sm:$0xff]
    %v615 = vld [vmem:[#allocation11 + $0x280] sm:$0xff]
    %v616 = vld [vmem:[#allocation11 + $0x288] sm:$0xff]
    %v617 = vld [vmem:[#allocation11 + $0x290] sm:$0xff]
    %v618 = vld [vmem:[#allocation11 + $0x298] sm:$0xff]
    %v619 = vld [vmem:[#allocation11 + $0x2a0] sm:$0xff]
    %v620 = vld [vmem:[#allocation11 + $0x2a8] sm:$0xff]
    %v621 = vld [vmem:[#allocation11 + $0x2b0] sm:$0xff]
    %v622 = vld [vmem:[#allocation11 + $0x2b8] sm:$0xff]
    %v623 = vld [vmem:[#allocation11 + $0x2c0] sm:$0xff]
    %v624 = vld [vmem:[#allocation11 + $0x2c8] sm:$0xff]
    %v625 = vld [vmem:[#allocation11 + $0x2d0] sm:$0xff]
    %v626 = vld [vmem:[#allocation11 + $0x2d8] sm:$0xff]
    %v627 = vld [vmem:[#allocation11 + $0x2e0] sm:$0xff]
    %v628 = vld [vmem:[#allocation11 + $0x2e8] sm:$0xff]
    %v629 = vld [vmem:[#allocation11 + $0x2f0] sm:$0xff]
    %v630 = vld [vmem:[#allocation11 + $0x2f8] sm:$0xff]
    %v631 = vld [vmem:[#allocation11 + $0x300] sm:$0xff]
    %v632 = vld [vmem:[#allocation11 + $0x308] sm:$0xff]
    %v633 = vld [vmem:[#allocation11 + $0x310] sm:$0xff]
    %v634 = vld [vmem:[#allocation11 + $0x318] sm:$0xff]
    %v635 = vld [vmem:[#allocation11 + $0x320] sm:$0xff]
    %v636 = vld [vmem:[#allocation11 + $0x328] sm:$0xff]
    %v637 = vld [vmem:[#allocation11 + $0x330] sm:$0xff]
    %v638 = vld [vmem:[#allocation11 + $0x338] sm:$0xff]
    %v639 = vld [vmem:[#allocation11 + $0x340] sm:$0xff]
    %v640 = vld [vmem:[#allocation11 + $0x348] sm:$0xff]
    %v641 = vld [vmem:[#allocation11 + $0x350] sm:$0xff]
    %v642 = vld [vmem:[#allocation11 + $0x358] sm:$0xff]
    %v643 = vld [vmem:[#allocation11 + $0x360] sm:$0xff]
    %v644 = vld [vmem:[#allocation11 + $0x368] sm:$0xff]
    %v645 = vld [vmem:[#allocation11 + $0x370] sm:$0xff]
    %v646 = vld [vmem:[#allocation11 + $0x378] sm:$0xff]
    %v647 = vld [vmem:[#allocation11 + $0x380] sm:$0xff]
    %v648 = vld [vmem:[#allocation11 + $0x388] sm:$0xff]
    %v649 = vld [vmem:[#allocation11 + $0x390] sm:$0xff]
    %v650 = vld [vmem:[#allocation11 + $0x398] sm:$0xff]
    %v651 = vld [vmem:[#allocation11 + $0x3a0] sm:$0xff]
    %v652 = vld [vmem:[#allocation11 + $0x3a8] sm:$0xff]
    %v653 = vld [vmem:[#allocation11 + $0x3b0] sm:$0xff]
    %v654 = vld [vmem:[#allocation11 + $0x3b8] sm:$0xff]
    %v655 = vld [vmem:[#allocation11 + $0x3c0] sm:$0xff]
    %v656 = vld [vmem:[#allocation11 + $0x3c8] sm:$0xff]
    %v657 = vld [vmem:[#allocation11 + $0x3d0] sm:$0xff]
    %v658 = vld [vmem:[#allocation11 + $0x3d8] sm:$0xff]
    %v659 = vld [vmem:[#allocation11 + $0x3e0] sm:$0xff]
    %v660 = vld [vmem:[#allocation11 + $0x3e8] sm:$0xff]
    %v661 = vld [vmem:[#allocation11 + $0x3f0] sm:$0xff]
    %v662 = vld [vmem:[#allocation11 + $0x3f8] sm:$0xff]
    %v663 = vld [vmem:[#allocation11 + $0x400] sm:$0xff]
    %v664 = vld [vmem:[#allocation11 + $0x408] sm:$0xff]
    %v665 = vld [vmem:[#allocation11 + $0x410] sm:$0xff]
    %v666 = vld [vmem:[#allocation11 + $0x418] sm:$0xff]
    %v667 = vld [vmem:[#allocation11 + $0x420] sm:$0xff]
    %v668 = vld [vmem:[#allocation11 + $0x428] sm:$0xff]
    %v669 = vld [vmem:[#allocation11 + $0x430] sm:$0xff]
    %v670 = vld [vmem:[#allocation11 + $0x438] sm:$0xff]
    %v671 = vld [vmem:[#allocation11 + $0x440] sm:$0xff]
    %v672 = vld [vmem:[#allocation11 + $0x448] sm:$0xff]
    %v673 = vld [vmem:[#allocation11 + $0x450] sm:$0xff]
    %v674 = vld [vmem:[#allocation11 + $0x458] sm:$0xff]
    %v675 = vld [vmem:[#allocation11 + $0x460] sm:$0xff]
    %v676 = vld [vmem:[#allocation11 + $0x468] sm:$0xff]
    %v677 = vld [vmem:[#allocation11 + $0x470] sm:$0xff]
    %v678 = vld [vmem:[#allocation11 + $0x478] sm:$0xff]
    %v679 = vld [vmem:[#allocation11 + $0x480] sm:$0xff]
    %v680 = vld [vmem:[#allocation11 + $0x488] sm:$0xff]
    %v681 = vld [vmem:[#allocation11 + $0x490] sm:$0xff]
    %v682 = vld [vmem:[#allocation11 + $0x498] sm:$0xff]
    %v683 = vld [vmem:[#allocation11 + $0x4a0] sm:$0xff]
    %v684 = vld [vmem:[#allocation11 + $0x4a8] sm:$0xff]
    %v685 = vld [vmem:[#allocation11 + $0x4b0] sm:$0xff]
    %v686 = vld [vmem:[#allocation11 + $0x4b8] sm:$0xff]
    %v687 = vld [vmem:[#allocation11 + $0x4c0] sm:$0xff]
    %v688 = vld [vmem:[#allocation11 + $0x4c8] sm:$0xff]
    %v689 = vld [vmem:[#allocation11 + $0x4d0] sm:$0xff]
    %v690 = vld [vmem:[#allocation11 + $0x4d8] sm:$0xff]
    %v691 = vld [vmem:[#allocation11 + $0x4e0] sm:$0xff]
    %v692 = vld [vmem:[#allocation11 + $0x4e8] sm:$0xff]
    %v693 = vld [vmem:[#allocation11 + $0x4f0] sm:$0xff]
    %v694 = vld [vmem:[#allocation11 + $0x4f8] sm:$0xff]
    %v695 = vld [vmem:[#allocation11 + $0x500] sm:$0xff]
    %v696 = vld [vmem:[#allocation11 + $0x508] sm:$0xff]
    %v697 = vld [vmem:[#allocation11 + $0x510] sm:$0xff]
    %v698 = vld [vmem:[#allocation11 + $0x518] sm:$0xff]
    %v699 = vld [vmem:[#allocation11 + $0x520] sm:$0xff]
    %v700 = vld [vmem:[#allocation11 + $0x528] sm:$0xff]
    %v701 = vld [vmem:[#allocation11 + $0x530] sm:$0xff]
    %v702 = vld [vmem:[#allocation11 + $0x538] sm:$0xff]
    %v703 = vld [vmem:[#allocation11 + $0x540] sm:$0xff]
    %v704 = vld [vmem:[#allocation11 + $0x548] sm:$0xff]
    %v705 = vld [vmem:[#allocation11 + $0x550] sm:$0xff]
    %v706 = vld [vmem:[#allocation11 + $0x558] sm:$0xff]
    %v707 = vld [vmem:[#allocation11 + $0x560] sm:$0xff]
    %v708 = vld [vmem:[#allocation11 + $0x568] sm:$0xff]
    %v709 = vld [vmem:[#allocation11 + $0x570] sm:$0xff]
    %v710 = vld [vmem:[#allocation11 + $0x578] sm:$0xff]
    %v711 = vld [vmem:[#allocation11 + $0x580] sm:$0xff]
    %v712 = vld [vmem:[#allocation11 + $0x588] sm:$0xff]
    %v713 = vld [vmem:[#allocation11 + $0x590] sm:$0xff]
    %v714 = vld [vmem:[#allocation11 + $0x598] sm:$0xff]
    %v715 = vld [vmem:[#allocation11 + $0x5a0] sm:$0xff]
    %v716 = vld [vmem:[#allocation11 + $0x5a8] sm:$0xff]
    %v717 = vld [vmem:[#allocation11 + $0x5b0] sm:$0xff]
    %v718 = vld [vmem:[#allocation11 + $0x5b8] sm:$0xff]
    %v719 = vld [vmem:[#allocation11 + $0x5c0] sm:$0xff]
    %v720 = vld [vmem:[#allocation11 + $0x5c8] sm:$0xff]
    %v721 = vld [vmem:[#allocation11 + $0x5d0] sm:$0xff]
    %v722 = vld [vmem:[#allocation11 + $0x5d8] sm:$0xff]
    %v723 = vld [vmem:[#allocation11 + $0x5e0] sm:$0xff]
    %v724 = vld [vmem:[#allocation11 + $0x5e8] sm:$0xff]
    %v725 = vld [vmem:[#allocation11 + $0x5f0] sm:$0xff]
    %v726 = vld [vmem:[#allocation11 + $0x5f8] sm:$0xff]
    %v727 = vld [vmem:[#allocation11 + $0x600] sm:$0xff]
    %v728 = vld [vmem:[#allocation11 + $0x608] sm:$0xff]
    %v729 = vld [vmem:[#allocation11 + $0x610] sm:$0xff]
    %v730 = vld [vmem:[#allocation11 + $0x618] sm:$0xff]
    %v731 = vld [vmem:[#allocation11 + $0x620] sm:$0xff]
    %v732 = vld [vmem:[#allocation11 + $0x628] sm:$0xff]
    %v733 = vld [vmem:[#allocation11 + $0x630] sm:$0xff]
    %v734 = vld [vmem:[#allocation11 + $0x638] sm:$0xff]
    %v735 = vld [vmem:[#allocation11 + $0x640] sm:$0xff]
    %v736 = vld [vmem:[#allocation11 + $0x648] sm:$0xff]
    %v737 = vld [vmem:[#allocation11 + $0x650] sm:$0xff]
    %v738 = vld [vmem:[#allocation11 + $0x658] sm:$0xff]
    %v739 = vld [vmem:[#allocation11 + $0x660] sm:$0xff]
    %v740 = vld [vmem:[#allocation11 + $0x668] sm:$0xff]
    %v741 = vld [vmem:[#allocation11 + $0x670] sm:$0xff]
    %v742 = vld [vmem:[#allocation11 + $0x678] sm:$0xff]
    %v743 = vld [vmem:[#allocation11 + $0x680] sm:$0xff]
    %v744 = vld [vmem:[#allocation11 + $0x688] sm:$0xff]
    %v745 = vld [vmem:[#allocation11 + $0x690] sm:$0xff]
    %v746 = vld [vmem:[#allocation11 + $0x698] sm:$0xff]
    %v747 = vld [vmem:[#allocation11 + $0x6a0] sm:$0xff]
    %v748 = vld [vmem:[#allocation11 + $0x6a8] sm:$0xff]
    %v749 = vld [vmem:[#allocation11 + $0x6b0] sm:$0xff]
    %v750 = vld [vmem:[#allocation11 + $0x6b8] sm:$0xff]
    %v751 = vld [vmem:[#allocation11 + $0x6c0] sm:$0xff]
    %v752 = vld [vmem:[#allocation11 + $0x6c8] sm:$0xff]
    %v753 = vld [vmem:[#allocation11 + $0x6d0] sm:$0xff]
    %v754 = vld [vmem:[#allocation11 + $0x6d8] sm:$0xff]
    %v755 = vld [vmem:[#allocation11 + $0x6e0] sm:$0xff]
    %v756 = vld [vmem:[#allocation11 + $0x6e8] sm:$0xff]
    %v757 = vld [vmem:[#allocation11 + $0x6f0] sm:$0xff]
    %v758 = vld [vmem:[#allocation11 + $0x6f8] sm:$0xff]
    %v759 = vld [vmem:[#allocation11 + $0x700] sm:$0xff]
    %v760 = vld [vmem:[#allocation11 + $0x708] sm:$0xff]
    %v761 = vld [vmem:[#allocation11 + $0x710] sm:$0xff]
    %v762 = vld [vmem:[#allocation11 + $0x718] sm:$0xff]
    %v763 = vld [vmem:[#allocation11 + $0x720] sm:$0xff]
    %v764 = vld [vmem:[#allocation11 + $0x728] sm:$0xff]
    %v765 = vld [vmem:[#allocation11 + $0x730] sm:$0xff]
    %v766 = vld [vmem:[#allocation11 + $0x738] sm:$0xff]
    %v767 = vld [vmem:[#allocation11 + $0x740] sm:$0xff]
    %v768 = vld [vmem:[#allocation11 + $0x748] sm:$0xff]
    %v769 = vld [vmem:[#allocation11 + $0x750] sm:$0xff]
    %v770 = vld [vmem:[#allocation11 + $0x758] sm:$0xff]
    %v771 = vld [vmem:[#allocation11 + $0x760] sm:$0xff]
    %v772 = vld [vmem:[#allocation11 + $0x768] sm:$0xff]
    %v773 = vld [vmem:[#allocation11 + $0x770] sm:$0xff]
    %v774 = vld [vmem:[#allocation11 + $0x778] sm:$0xff]
    %v775 = vld [vmem:[#allocation11 + $0x780] sm:$0xff]
    %v776 = vld [vmem:[#allocation11 + $0x788] sm:$0xff]
    %v777 = vld [vmem:[#allocation11 + $0x790] sm:$0xff]
    %v778 = vld [vmem:[#allocation11 + $0x798] sm:$0xff]
    %v779 = vld [vmem:[#allocation11 + $0x7a0] sm:$0xff]
    %v780 = vld [vmem:[#allocation11 + $0x7a8] sm:$0xff]
    %v781 = vld [vmem:[#allocation11 + $0x7b0] sm:$0xff]
    %v782 = vld [vmem:[#allocation11 + $0x7b8] sm:$0xff]
    %v783 = vld [vmem:[#allocation11 + $0x7c0] sm:$0xff]
    %v784 = vld [vmem:[#allocation11 + $0x7c8] sm:$0xff]
    %v785 = vld [vmem:[#allocation11 + $0x7d0] sm:$0xff]
    %v786 = vld [vmem:[#allocation11 + $0x7d8] sm:$0xff]
    %v787 = vld [vmem:[#allocation11 + $0x7e0] sm:$0xff]
    %v788 = vld [vmem:[#allocation11 + $0x7e8] sm:$0xff]
    %v789 = vld [vmem:[#allocation11 + $0x7f0] sm:$0xff]
    %v790 = vld [vmem:[#allocation11 + $0x7f8] sm:$0xff]
    %v791 = vld [vmem:[#allocation11 + $0x800] sm:$0xff]
    %v792 = vld [vmem:[#allocation11 + $0x808] sm:$0xff]
    %v793 = vld [vmem:[#allocation11 + $0x810] sm:$0xff]
    %v794 = vld [vmem:[#allocation11 + $0x818] sm:$0xff]
    %v795 = vld [vmem:[#allocation11 + $0x820] sm:$0xff]
    %v796 = vld [vmem:[#allocation11 + $0x828] sm:$0xff]
    %v797 = vld [vmem:[#allocation11 + $0x830] sm:$0xff]
    %v798 = vld [vmem:[#allocation11 + $0x838] sm:$0xff]
    %v799 = vld [vmem:[#allocation11 + $0x840] sm:$0xff]
    %v800 = vld [vmem:[#allocation11 + $0x848] sm:$0xff]
    %v801 = vld [vmem:[#allocation11 + $0x850] sm:$0xff]
    %v802 = vld [vmem:[#allocation11 + $0x858] sm:$0xff]
    %v803 = vld [vmem:[#allocation11 + $0x860] sm:$0xff]
    %v804 = vld [vmem:[#allocation11 + $0x868] sm:$0xff]
    %v805 = vld [vmem:[#allocation11 + $0x870] sm:$0xff]
    %v806 = vld [vmem:[#allocation11 + $0x878] sm:$0xff]
    %v807 = vld [vmem:[#allocation11 + $0x880] sm:$0xff]
    %v808 = vld [vmem:[#allocation11 + $0x888] sm:$0xff]
    %v809 = vld [vmem:[#allocation11 + $0x890] sm:$0xff]
    %v810 = vld [vmem:[#allocation11 + $0x898] sm:$0xff]
    %v811 = vld [vmem:[#allocation11 + $0x8a0] sm:$0xff]
    %v812 = vld [vmem:[#allocation11 + $0x8a8] sm:$0xff]
    %v813 = vld [vmem:[#allocation11 + $0x8b0] sm:$0xff]
    %v814 = vld [vmem:[#allocation11 + $0x8b8] sm:$0xff]
    %v815 = vld [vmem:[#allocation11 + $0x8c0] sm:$0xff]
    %v816 = vld [vmem:[#allocation11 + $0x8c8] sm:$0xff]
    %v817 = vld [vmem:[#allocation11 + $0x8d0] sm:$0xff]
    %v818 = vld [vmem:[#allocation11 + $0x8d8] sm:$0xff]
    %v819 = vld [vmem:[#allocation11 + $0x8e0] sm:$0xff]
    %v820 = vld [vmem:[#allocation11 + $0x8e8] sm:$0xff]
    %v821 = vld [vmem:[#allocation11 + $0x8f0] sm:$0xff]
    %v822 = vld [vmem:[#allocation11 + $0x8f8] sm:$0xff]
    %v823 = vld [vmem:[#allocation11 + $0x900] sm:$0xff]
    %v824 = vld [vmem:[#allocation11 + $0x908] sm:$0xff]
    %v825 = vld [vmem:[#allocation11 + $0x910] sm:$0xff]
    %v826 = vld [vmem:[#allocation11 + $0x918] sm:$0xff]
    %v827 = vld [vmem:[#allocation11 + $0x920] sm:$0xff]
    %v828 = vld [vmem:[#allocation11 + $0x928] sm:$0xff]
    %v829 = vld [vmem:[#allocation11 + $0x930] sm:$0xff]
    %v830 = vld [vmem:[#allocation11 + $0x938] sm:$0xff]
    %v831 = vld [vmem:[#allocation11 + $0x940] sm:$0xff]
    %v832 = vld [vmem:[#allocation11 + $0x948] sm:$0xff]
    %v833 = vld [vmem:[#allocation11 + $0x950] sm:$0xff]
    %v834 = vld [vmem:[#allocation11 + $0x958] sm:$0xff]
    %v835 = vld [vmem:[#allocation11 + $0x960] sm:$0xff]
    %v836 = vld [vmem:[#allocation11 + $0x968] sm:$0xff]
    %v837 = vld [vmem:[#allocation11 + $0x970] sm:$0xff]
    %v838 = vld [vmem:[#allocation11 + $0x978] sm:$0xff]
    %v839 = vld [vmem:[#allocation11 + $0x980] sm:$0xff]
    %v840 = vld [vmem:[#allocation11 + $0x988] sm:$0xff]
    %v841 = vld [vmem:[#allocation11 + $0x990] sm:$0xff]
    %v842 = vld [vmem:[#allocation11 + $0x998] sm:$0xff]
    %v843 = vld [vmem:[#allocation11 + $0x9a0] sm:$0xff]
    %v844 = vld [vmem:[#allocation11 + $0x9a8] sm:$0xff]
    %v845 = vld [vmem:[#allocation11 + $0x9b0] sm:$0xff]
    %v846 = vld [vmem:[#allocation11 + $0x9b8] sm:$0xff]
    %v847 = vld [vmem:[#allocation11 + $0x9c0] sm:$0xff]
    %v848 = vld [vmem:[#allocation11 + $0x9c8] sm:$0xff]
    %v849 = vld [vmem:[#allocation11 + $0x9d0] sm:$0xff]
    %v850 = vld [vmem:[#allocation11 + $0x9d8] sm:$0xff]
    %v851 = vld [vmem:[#allocation11 + $0x9e0] sm:$0xff]
    %v852 = vld [vmem:[#allocation11 + $0x9e8] sm:$0xff]
    %v853 = vld [vmem:[#allocation11 + $0x9f0] sm:$0xff]
    %v854 = vld [vmem:[#allocation11 + $0x9f8] sm:$0xff]
    %v855 = vld [vmem:[#allocation11 + $0xa00] sm:$0xff]
    %v856 = vld [vmem:[#allocation11 + $0xa08] sm:$0xff]
    %v857 = vld [vmem:[#allocation11 + $0xa10] sm:$0xff]
    %v858 = vld [vmem:[#allocation11 + $0xa18] sm:$0xff]
    %v859 = vld [vmem:[#allocation11 + $0xa20] sm:$0xff]
    %v860 = vld [vmem:[#allocation11 + $0xa28] sm:$0xff]
    %v861 = vld [vmem:[#allocation11 + $0xa30] sm:$0xff]
    %v862 = vld [vmem:[#allocation11 + $0xa38] sm:$0xff]
    %v863 = vld [vmem:[#allocation11 + $0xa40] sm:$0xff]
    %v864 = vld [vmem:[#allocation11 + $0xa48] sm:$0xff]
    %v865 = vld [vmem:[#allocation11 + $0xa50] sm:$0xff]
    %v866 = vld [vmem:[#allocation11 + $0xa58] sm:$0xff]
    %v867 = vld [vmem:[#allocation11 + $0xa60] sm:$0xff]
    %v868 = vld [vmem:[#allocation11 + $0xa68] sm:$0xff]
    %v869 = vld [vmem:[#allocation11 + $0xa70] sm:$0xff]
    %v870 = vld [vmem:[#allocation11 + $0xa78] sm:$0xff]
    %v871 = vld [vmem:[#allocation11 + $0xa80] sm:$0xff]
    %v872 = vld [vmem:[#allocation11 + $0xa88] sm:$0xff]
    %v873 = vld [vmem:[#allocation11 + $0xa90] sm:$0xff]
    %v874 = vld [vmem:[#allocation11 + $0xa98] sm:$0xff]
    %v875 = vld [vmem:[#allocation11 + $0xaa0] sm:$0xff]
    %v876 = vld [vmem:[#allocation11 + $0xaa8] sm:$0xff]
    %v877 = vld [vmem:[#allocation11 + $0xab0] sm:$0xff]
    %v878 = vld [vmem:[#allocation11 + $0xab8] sm:$0xff]
    %v879 = vld [vmem:[#allocation11 + $0xac0] sm:$0xff]
    %v880 = vld [vmem:[#allocation11 + $0xac8] sm:$0xff]
    %v881 = vld [vmem:[#allocation11 + $0xad0] sm:$0xff]
    %v882 = vld [vmem:[#allocation11 + $0xad8] sm:$0xff]
    %v883 = vld [vmem:[#allocation11 + $0xae0] sm:$0xff]
    %v884 = vld [vmem:[#allocation11 + $0xae8] sm:$0xff]
    %v885 = vld [vmem:[#allocation11 + $0xaf0] sm:$0xff]
    %v886 = vld [vmem:[#allocation11 + $0xaf8] sm:$0xff]
    %v887 = vld [vmem:[#allocation11 + $0xb00] sm:$0xff]
    %v888 = vld [vmem:[#allocation11 + $0xb08] sm:$0xff]
    %v889 = vld [vmem:[#allocation11 + $0xb10] sm:$0xff]
    %v890 = vld [vmem:[#allocation11 + $0xb18] sm:$0xff]
    %v891 = vld [vmem:[#allocation11 + $0xb20] sm:$0xff]
    %v892 = vld [vmem:[#allocation11 + $0xb28] sm:$0xff]
    %v893 = vld [vmem:[#allocation11 + $0xb30] sm:$0xff]
    %v894 = vld [vmem:[#allocation11 + $0xb38] sm:$0xff]
    %v895 = vld [vmem:[#allocation11 + $0xb40] sm:$0xff]
    %v896 = vld [vmem:[#allocation11 + $0xb48] sm:$0xff]
    %v897 = vld [vmem:[#allocation11 + $0xb50] sm:$0xff]
    %v898 = vld [vmem:[#allocation11 + $0xb58] sm:$0xff]
    %v899 = vld [vmem:[#allocation11 + $0xb60] sm:$0xff]
    %v900 = vld [vmem:[#allocation11 + $0xb68] sm:$0xff]
    %v901 = vld [vmem:[#allocation11 + $0xb70] sm:$0xff]
    %v902 = vld [vmem:[#allocation11 + $0xb78] sm:$0xff]
    %v903 = vld [vmem:[#allocation11 + $0xb80] sm:$0xff]
    %v904 = vld [vmem:[#allocation11 + $0xb88] sm:$0xff]
    %v905 = vld [vmem:[#allocation11 + $0xb90] sm:$0xff]
    %v906 = vld [vmem:[#allocation11 + $0xb98] sm:$0xff]
    %v907 = vld [vmem:[#allocation11 + $0xba0] sm:$0xff]
    %v908 = vld [vmem:[#allocation11 + $0xba8] sm:$0xff]
    %v909 = vld [vmem:[#allocation11 + $0xbb0] sm:$0xff]
    %v910 = vld [vmem:[#allocation11 + $0xbb8] sm:$0xff]
    %v911 = vld [vmem:[#allocation11 + $0xbc0] sm:$0xff]
    %v912 = vld [vmem:[#allocation11 + $0xbc8] sm:$0xff]
    %v913 = vld [vmem:[#allocation11 + $0xbd0] sm:$0xff]
    %v914 = vld [vmem:[#allocation11 + $0xbd8] sm:$0xff]
    %v915 = vld [vmem:[#allocation11 + $0xbe0] sm:$0xff]
    %v916 = vld [vmem:[#allocation11 + $0xbe8] sm:$0xff]
    %v917 = vld [vmem:[#allocation11 + $0xbf0] sm:$0xff]
    %v918 = vld [vmem:[#allocation11 + $0xbf8] sm:$0xff]
    %v919 = vld [vmem:[#allocation11 + $0xc00] sm:$0xff]
    %v920 = vld [vmem:[#allocation11 + $0xc08] sm:$0xff]
    %v921 = vld [vmem:[#allocation11 + $0xc10] sm:$0xff]
    %v922 = vld [vmem:[#allocation11 + $0xc18] sm:$0xff]
    %v923 = vld [vmem:[#allocation11 + $0xc20] sm:$0xff]
    %v924 = vld [vmem:[#allocation11 + $0xc28] sm:$0xff]
    %v925 = vld [vmem:[#allocation11 + $0xc30] sm:$0xff]
    %v926 = vld [vmem:[#allocation11 + $0xc38] sm:$0xff]
    %v927 = vld [vmem:[#allocation11 + $0xc40] sm:$0xff]
    %v928 = vld [vmem:[#allocation11 + $0xc48] sm:$0xff]
    %v929 = vld [vmem:[#allocation11 + $0xc50] sm:$0xff]
    %v930 = vld [vmem:[#allocation11 + $0xc58] sm:$0xff]
    %v931 = vld [vmem:[#allocation11 + $0xc60] sm:$0xff]
    %v932 = vld [vmem:[#allocation11 + $0xc68] sm:$0xff]
    %v933 = vld [vmem:[#allocation11 + $0xc70] sm:$0xff]
    %v934 = vld [vmem:[#allocation11 + $0xc78] sm:$0xff]
    %v935 = vld [vmem:[#allocation11 + $0xc80] sm:$0xff]
    %v936 = vld [vmem:[#allocation11 + $0xc88] sm:$0xff]
    %v937 = vld [vmem:[#allocation11 + $0xc90] sm:$0xff]
    %v938 = vld [vmem:[#allocation11 + $0xc98] sm:$0xff]
    %v939 = vld [vmem:[#allocation11 + $0xca0] sm:$0xff]
    %v940 = vld [vmem:[#allocation11 + $0xca8] sm:$0xff]
    %v941 = vld [vmem:[#allocation11 + $0xcb0] sm:$0xff]
    %v942 = vld [vmem:[#allocation11 + $0xcb8] sm:$0xff]
    %v943 = vld [vmem:[#allocation11 + $0xcc0] sm:$0xff]
    %v944 = vld [vmem:[#allocation11 + $0xcc8] sm:$0xff]
    %v945 = vld [vmem:[#allocation11 + $0xcd0] sm:$0xff]
    %v946 = vld [vmem:[#allocation11 + $0xcd8] sm:$0xff]
    %v947 = vld [vmem:[#allocation11 + $0xce0] sm:$0xff]
    %v948 = vld [vmem:[#allocation11 + $0xce8] sm:$0xff]
    %v949 = vld [vmem:[#allocation11 + $0xcf0] sm:$0xff]
    %v950 = vld [vmem:[#allocation11 + $0xcf8] sm:$0xff]
    %v951 = vld [vmem:[#allocation11 + $0xd00] sm:$0xff]
    %v952 = vld [vmem:[#allocation11 + $0xd08] sm:$0xff]
    %v953 = vld [vmem:[#allocation11 + $0xd10] sm:$0xff]
    %v954 = vld [vmem:[#allocation11 + $0xd18] sm:$0xff]
    %v955 = vld [vmem:[#allocation11 + $0xd20] sm:$0xff]
    %v956 = vld [vmem:[#allocation11 + $0xd28] sm:$0xff]
    %v957 = vld [vmem:[#allocation11 + $0xd30] sm:$0xff]
    %v958 = vld [vmem:[#allocation11 + $0xd38] sm:$0xff]
    %v959 = vld [vmem:[#allocation11 + $0xd40] sm:$0xff]
    %v960 = vld [vmem:[#allocation11 + $0xd48] sm:$0xff]
    %v961 = vld [vmem:[#allocation11 + $0xd50] sm:$0xff]
    %v962 = vld [vmem:[#allocation11 + $0xd58] sm:$0xff]
    %v963 = vld [vmem:[#allocation11 + $0xd60] sm:$0xff]
    %v964 = vld [vmem:[#allocation11 + $0xd68] sm:$0xff]
    %v965 = vld [vmem:[#allocation11 + $0xd70] sm:$0xff]
    %v966 = vld [vmem:[#allocation11 + $0xd78] sm:$0xff]
    %v967 = vld [vmem:[#allocation11 + $0xd80] sm:$0xff]
    %v968 = vld [vmem:[#allocation11 + $0xd88] sm:$0xff]
    %v969 = vld [vmem:[#allocation11 + $0xd90] sm:$0xff]
    %v970 = vld [vmem:[#allocation11 + $0xd98] sm:$0xff]
    %v971 = vld [vmem:[#allocation11 + $0xda0] sm:$0xff]
    %v972 = vld [vmem:[#allocation11 + $0xda8] sm:$0xff]
    %v973 = vld [vmem:[#allocation11 + $0xdb0] sm:$0xff]
    %v974 = vld [vmem:[#allocation11 + $0xdb8] sm:$0xff]
    %v975 = vld [vmem:[#allocation11 + $0xdc0] sm:$0xff]
    %v976 = vld [vmem:[#allocation11 + $0xdc8] sm:$0xff]
    %v977 = vld [vmem:[#allocation11 + $0xdd0] sm:$0xff]
    %v978 = vld [vmem:[#allocation11 + $0xdd8] sm:$0xff]
    %v979 = vld [vmem:[#allocation11 + $0xde0] sm:$0xff]
    %v980 = vld [vmem:[#allocation11 + $0xde8] sm:$0xff]
    %v981 = vld [vmem:[#allocation11 + $0xdf0] sm:$0xff]
    %v982 = vld [vmem:[#allocation11 + $0xdf8] sm:$0xff]
    %v983 = vld [vmem:[#allocation11 + $0xe00] sm:$0xff]
    %v984 = vld [vmem:[#allocation11 + $0xe08] sm:$0xff]
    %v985 = vld [vmem:[#allocation11 + $0xe10] sm:$0xff]
    %v986 = vld [vmem:[#allocation11 + $0xe18] sm:$0xff]
    %v987 = vld [vmem:[#allocation11 + $0xe20] sm:$0xff]
    %v988 = vld [vmem:[#allocation11 + $0xe28] sm:$0xff]
    %v989 = vld [vmem:[#allocation11 + $0xe30] sm:$0xff]
    %v990 = vld [vmem:[#allocation11 + $0xe38] sm:$0xff]
    %v991 = vld [vmem:[#allocation11 + $0xe40] sm:$0xff]
    %v992 = vld [vmem:[#allocation11 + $0xe48] sm:$0xff]
    %v993 = vld [vmem:[#allocation11 + $0xe50] sm:$0xff]
    %v994 = vld [vmem:[#allocation11 + $0xe58] sm:$0xff]
    %v995 = vld [vmem:[#allocation11 + $0xe60] sm:$0xff]
    %v996 = vld [vmem:[#allocation11 + $0xe68] sm:$0xff]
    %v997 = vld [vmem:[#allocation11 + $0xe70] sm:$0xff]
    %v998 = vld [vmem:[#allocation11 + $0xe78] sm:$0xff]
    %v999 = vld [vmem:[#allocation11 + $0xe80] sm:$0xff]
    %v1000 = vld [vmem:[#allocation11 + $0xe88] sm:$0xff]
    %v1001 = vld [vmem:[#allocation11 + $0xe90] sm:$0xff]
    %v1002 = vld [vmem:[#allocation11 + $0xe98] sm:$0xff]
    %v1003 = vld [vmem:[#allocation11 + $0xea0] sm:$0xff]
    %v1004 = vld [vmem:[#allocation11 + $0xea8] sm:$0xff]
    %v1005 = vld [vmem:[#allocation11 + $0xeb0] sm:$0xff]
    %v1006 = vld [vmem:[#allocation11 + $0xeb8] sm:$0xff]
    %v1007 = vld [vmem:[#allocation11 + $0xec0] sm:$0xff]
    %v1008 = vld [vmem:[#allocation11 + $0xec8] sm:$0xff]
    %v1009 = vld [vmem:[#allocation11 + $0xed0] sm:$0xff]
    %v1010 = vld [vmem:[#allocation11 + $0xed8] sm:$0xff]
    %v1011 = vld [vmem:[#allocation11 + $0xee0] sm:$0xff]
    %v1012 = vld [vmem:[#allocation11 + $0xee8] sm:$0xff]
    %v1013 = vld [vmem:[#allocation11 + $0xef0] sm:$0xff]
    %v1014 = vld [vmem:[#allocation11 + $0xef8] sm:$0xff]
    %v1015 = vld [vmem:[#allocation11 + $0xf00] sm:$0xff]
    %v1016 = vld [vmem:[#allocation11 + $0xf08] sm:$0xff]
    %v1017 = vld [vmem:[#allocation11 + $0xf10] sm:$0xff]
    %v1018 = vld [vmem:[#allocation11 + $0xf18] sm:$0xff]
    %v1019 = vld [vmem:[#allocation11 + $0xf20] sm:$0xff]
    %v1020 = vld [vmem:[#allocation11 + $0xf28] sm:$0xff]
    %v1021 = vld [vmem:[#allocation11 + $0xf30] sm:$0xff]
    %v1022 = vld [vmem:[#allocation11 + $0xf38] sm:$0xff]
    %v1023 = vld [vmem:[#allocation11 + $0xf40] sm:$0xff]
    %v1024 = vld [vmem:[#allocation11 + $0xf48] sm:$0xff]
    %v1025 = vld [vmem:[#allocation11 + $0xf50] sm:$0xff]
    %v1026 = vld [vmem:[#allocation11 + $0xf58] sm:$0xff]
    %v1027 = vld [vmem:[#allocation11 + $0xf60] sm:$0xff]
    %v1028 = vld [vmem:[#allocation11 + $0xf68] sm:$0xff]
    %v1029 = vld [vmem:[#allocation11 + $0xf70] sm:$0xff]
    %v1030 = vld [vmem:[#allocation11 + $0xf78] sm:$0xff]
    %v1031 = vld [vmem:[#allocation11 + $0xf80] sm:$0xff]
    %v1032 = vld [vmem:[#allocation11 + $0xf88] sm:$0xff]
    %v1033 = vld [vmem:[#allocation11 + $0xf90] sm:$0xff]
    %v1034 = vld [vmem:[#allocation11 + $0xf98] sm:$0xff]
    %v1035 = vld [vmem:[#allocation11 + $0xfa0] sm:$0xff]
    %v1036 = vld [vmem:[#allocation11 + $0xfa8] sm:$0xff]
    %v1037 = vld [vmem:[#allocation11 + $0xfb0] sm:$0xff]
    %v1038 = vld [vmem:[#allocation11 + $0xfb8] sm:$0xff]
    %v1039 = vld [vmem:[#allocation11 + $0xfc0] sm:$0xff]
    %v1040 = vld [vmem:[#allocation11 + $0xfc8] sm:$0xff]
    %v1041 = vld [vmem:[#allocation11 + $0xfd0] sm:$0xff]
    %v1042 = vld [vmem:[#allocation11 + $0xfd8] sm:$0xff]
    %v1043 = vld [vmem:[#allocation11 + $0xfe0] sm:$0xff]
    %v1044 = vld [vmem:[#allocation11 + $0xfe8] sm:$0xff]
    %v1045 = vld [vmem:[#allocation11 + $0xff0] sm:$0xff]
    %v1046 = vld [vmem:[#allocation11 + $0xff8] sm:$0xff]
    %v1047 = vld [vmem:[#allocation13] sm:$0xff]
    %v1049 = vlaneseq
    %v1050 = vshrl.u32 %v1049, 7
    %v1051 = vsub.s32 0, %v1050
    %v1052 = vrot.slane %v1047, %v1051
    %v1053 = vlaneseq
    %v1054 = vshrl.u32 %v1053, 7
    %v1055 = vsub.s32 1, %v1054
    %v1056 = vrot.slane %v1047, %v1055
    %v1057 = vlaneseq
    %v1058 = vshrl.u32 %v1057, 7
    %v1059 = vsub.s32 2, %v1058
    %v1060 = vrot.slane %v1047, %v1059
    %v1061 = vlaneseq
    %v1062 = vshrl.u32 %v1061, 7
    %v1063 = vsub.s32 3, %v1062
    %v1064 = vrot.slane %v1047, %v1063
    %v1065 = vlaneseq
    %v1066 = vshrl.u32 %v1065, 7
    %v1067 = vsub.s32 4, %v1066
    %v1068 = vrot.slane %v1047, %v1067
    %v1069 = vlaneseq
    %v1070 = vshrl.u32 %v1069, 7
    %v1071 = vsub.s32 5, %v1070
    %v1072 = vrot.slane %v1047, %v1071
    %v1073 = vlaneseq
    %v1074 = vshrl.u32 %v1073, 7
    %v1075 = vsub.s32 6, %v1074
    %v1076 = vrot.slane %v1047, %v1075
    %v1077 = vlaneseq
    %v1078 = vshrl.u32 %v1077, 7
    %v1079 = vsub.s32 7, %v1078
    %v1080 = vrot.slane %v1047, %v1079
    %1089 = vmatprep.subr.mxu0 %v536
    %1090 = vmatpush1.msra.mxu0 %v535
    %1091 = vmatprep.subr.mxu0 %v544
    %1092 = vmatpush1.msra.mxu0 %v543
    %1093 = vmatprep.subr.mxu0 %v552
    %1094 = vmatpush1.msra.mxu0 %v551
    %1095 = vmatprep.subr.mxu0 %v560
    %1096 = vmatpush1.msra.mxu0 %v559
    %1097 = vmatprep.subr.mxu0 %v568
    %1098 = vmatpush1.msra.mxu0 %v567
    %1099 = vmatprep.subr.mxu0 %v576
    %1100 = vmatpush1.msra.mxu0 %v575
    %1101 = vmatprep.subr.mxu0 %v584
    %1102 = vmatpush1.msra.mxu0 %v583
    %1103 = vmatprep.subr.mxu0 %v592
    %1104 = vmatpush1.msra.mxu0 %v591
    %1105 = vmatprep.subr.mxu0 %v600
    %1106 = vmatpush1.msra.mxu0 %v599
    %1107 = vmatprep.subr.mxu0 %v608
    %1108 = vmatpush1.msra.mxu0 %v607
    %1109 = vmatprep.subr.mxu0 %v616
    %1110 = vmatpush1.msra.mxu0 %v615
    %1111 = vmatprep.subr.mxu0 %v624
    %1112 = vmatpush1.msra.mxu0 %v623
    %1113 = vmatprep.subr.mxu0 %v632
    %1114 = vmatpush1.msra.mxu0 %v631
    %1115 = vmatprep.subr.mxu0 %v640
    %1116 = vmatpush1.msra.mxu0 %v639
    %1117 = vmatprep.subr.mxu0 %v648
    %1118 = vmatpush1.msra.mxu0 %v647
    %1119 = vmatprep.subr.mxu0 %v656
    %1120 = vmatpush1.msra.mxu0 %v655
    %1121 = vmatprep.subr.mxu0 %v664
    %1122 = vmatpush1.msra.mxu0 %v663
    %1123 = vmatprep.subr.mxu0 %v672
    %1124 = vmatpush1.msra.mxu0 %v671
    %1125 = vmatprep.subr.mxu0 %v680
    %1126 = vmatpush1.msra.mxu0 %v679
    %1127 = vmatprep.subr.mxu0 %v688
    %1128 = vmatpush1.msra.mxu0 %v687
    %1129 = vmatprep.subr.mxu0 %v696
    %1130 = vmatpush1.msra.mxu0 %v695
    %1131 = vmatprep.subr.mxu0 %v704
    %1132 = vmatpush1.msra.mxu0 %v703
    %1133 = vmatprep.subr.mxu0 %v712
    %1134 = vmatpush1.msra.mxu0 %v711
    %1135 = vmatprep.subr.mxu0 %v720
    %1136 = vmatpush1.msra.mxu0 %v719
    %1137 = vmatprep.subr.mxu0 %v728
    %1138 = vmatpush1.msra.mxu0 %v727
    %1139 = vmatprep.subr.mxu0 %v736
    %1140 = vmatpush1.msra.mxu0 %v735
    %1141 = vmatprep.subr.mxu0 %v744
    %1142 = vmatpush1.msra.mxu0 %v743
    %1143 = vmatprep.subr.mxu0 %v752
    %1144 = vmatpush1.msra.mxu0 %v751
    %1145 = vmatprep.subr.mxu0 %v760
    %1146 = vmatpush1.msra.mxu0 %v759
    %1147 = vmatprep.subr.mxu0 %v768
    %1148 = vmatpush1.msra.mxu0 %v767
    %1149 = vmatprep.subr.mxu0 %v776
    %1150 = vmatpush1.msra.mxu0 %v775
    %1151 = vmatprep.subr.mxu0 %v784
    %1152 = vmatpush1.msra.mxu0 %v783
    %1153 = vmatprep.mubr.f32.mxu0 %v532
    %1154 = vmatmul.mubr.f32.gmra.mrb[0].mxu0 %v531
    %v1155 = vpop.f32.mrb[0].mxu0
    %v1156 = vadd.f32 %v1052, %v1155
    %v1157 = vpop.f32.mrb[0].mxu0
    %v1158 = vadd.f32 %v1056, %v1157
    %1159 = vdwg.mxu0
    %1160 = vmatprep.subr.mxu0 %v792
    %1161 = vmatpush1.msra.mxu0 %v791
    %1162 = vmatprep.subr.mxu0 %v800
    %1163 = vmatpush1.msra.mxu0 %v799
    %1164 = vmatprep.subr.mxu0 %v808
    %1165 = vmatpush1.msra.mxu0 %v807
    %1166 = vmatprep.subr.mxu0 %v816
    %1167 = vmatpush1.msra.mxu0 %v815
    %1168 = vmatprep.subr.mxu0 %v824
    %1169 = vmatpush1.msra.mxu0 %v823
    %1170 = vmatprep.subr.mxu0 %v832
    %1171 = vmatpush1.msra.mxu0 %v831
    %1172 = vmatprep.subr.mxu0 %v840
    %1173 = vmatpush1.msra.mxu0 %v839
    %1174 = vmatprep.subr.mxu0 %v848
    %1175 = vmatpush1.msra.mxu0 %v847
    %1176 = vmatprep.subr.mxu0 %v856
    %1177 = vmatpush1.msra.mxu0 %v855
    %1178 = vmatprep.subr.mxu0 %v864
    %1179 = vmatpush1.msra.mxu0 %v863
    %1180 = vmatprep.subr.mxu0 %v872
    %1181 = vmatpush1.msra.mxu0 %v871
    %1182 = vmatprep.subr.mxu0 %v880
    %1183 = vmatpush1.msra.mxu0 %v879
    %1184 = vmatprep.subr.mxu0 %v888
    %1185 = vmatpush1.msra.mxu0 %v887
    %1186 = vmatprep.subr.mxu0 %v896
    %1187 = vmatpush1.msra.mxu0 %v895
    %1188 = vmatprep.subr.mxu0 %v904
    %1189 = vmatpush1.msra.mxu0 %v903
    %1190 = vmatprep.subr.mxu0 %v912
    %1191 = vmatpush1.msra.mxu0 %v911
    %1192 = vmatprep.subr.mxu0 %v920
    %1193 = vmatpush1.msra.mxu0 %v919
    %1194 = vmatprep.subr.mxu0 %v928
    %1195 = vmatpush1.msra.mxu0 %v927
    %1196 = vmatprep.subr.mxu0 %v936
    %1197 = vmatpush1.msra.mxu0 %v935
    %1198 = vmatprep.subr.mxu0 %v944
    %1199 = vmatpush1.msra.mxu0 %v943
    %1200 = vmatprep.subr.mxu0 %v952
    %1201 = vmatpush1.msra.mxu0 %v951
    %1202 = vmatprep.subr.mxu0 %v960
    %1203 = vmatpush1.msra.mxu0 %v959
    %1204 = vmatprep.subr.mxu0 %v968
    %1205 = vmatpush1.msra.mxu0 %v967
    %1206 = vmatprep.subr.mxu0 %v976
    %1207 = vmatpush1.msra.mxu0 %v975
    %1208 = vmatprep.subr.mxu0 %v984
    %1209 = vmatpush1.msra.mxu0 %v983
    %1210 = vmatprep.subr.mxu0 %v992
    %1211 = vmatpush1.msra.mxu0 %v991
    %1212 = vmatprep.subr.mxu0 %v1000
    %1213 = vmatpush1.msra.mxu0 %v999
    %1214 = vmatprep.subr.mxu0 %v1008
    %1215 = vmatpush1.msra.mxu0 %v1007
    %1216 = vmatprep.subr.mxu0 %v1016
    %1217 = vmatpush1.msra.mxu0 %v1015
    %1218 = vmatprep.subr.mxu0 %v1024
    %1219 = vmatpush1.msra.mxu0 %v1023
    %1220 = vmatprep.subr.mxu0 %v1032
    %1221 = vmatpush1.msra.mxu0 %v1031
    %1222 = vmatprep.subr.mxu0 %v1040
    %1223 = vmatpush1.msra.mxu0 %v1039
    %1224 = vmatprep.mubr.f32.mxu0 %v534
    %1225 = vmatmul.mubr.f32.gmra.mrb[0].mxu0 %v533
    %v1226 = vpop.f32.mrb[0].mxu0
    %v1227 = vadd.f32 %v1156, %v1226
    %v1228 = vpop.f32.mrb[0].mxu0
    %v1229 = vadd.f32 %v1158, %v1228
    %1230 = vdwg.mxu0
    %1231 = vmatprep.subr.mxu0 %v538
    %1232 = vmatpush1.msra.mxu0 %v537
    %1233 = vmatprep.subr.mxu0 %v546
    %1234 = vmatpush1.msra.mxu0 %v545
    %1235 = vmatprep.subr.mxu0 %v554
    %1236 = vmatpush1.msra.mxu0 %v553
    %1237 = vmatprep.subr.mxu0 %v562
    %1238 = vmatpush1.msra.mxu0 %v561
    %1239 = vmatprep.subr.mxu0 %v570
    %1240 = vmatpush1.msra.mxu0 %v569
    %1241 = vmatprep.subr.mxu0 %v578
    %1242 = vmatpush1.msra.mxu0 %v577
    %1243 = vmatprep.subr.mxu0 %v586
    %1244 = vmatpush1.msra.mxu0 %v585
    %1245 = vmatprep.subr.mxu0 %v594
    %1246 = vmatpush1.msra.mxu0 %v593
    %1247 = vmatprep.subr.mxu0 %v602
    %1248 = vmatpush1.msra.mxu0 %v601
    %1249 = vmatprep.subr.mxu0 %v610
    %1250 = vmatpush1.msra.mxu0 %v609
    %1251 = vmatprep.subr.mxu0 %v618
    %1252 = vmatpush1.msra.mxu0 %v617
    %1253 = vmatprep.subr.mxu0 %v626
    %1254 = vmatpush1.msra.mxu0 %v625
    %1255 = vmatprep.subr.mxu0 %v634
    %1256 = vmatpush1.msra.mxu0 %v633
    %1257 = vmatprep.subr.mxu0 %v642
    %1258 = vmatpush1.msra.mxu0 %v641
    %1259 = vmatprep.subr.mxu0 %v650
    %1260 = vmatpush1.msra.mxu0 %v649
    %1261 = vmatprep.subr.mxu0 %v658
    %1262 = vmatpush1.msra.mxu0 %v657
    %1263 = vmatprep.subr.mxu0 %v666
    %1264 = vmatpush1.msra.mxu0 %v665
    %1265 = vmatprep.subr.mxu0 %v674
    %1266 = vmatpush1.msra.mxu0 %v673
    %1267 = vmatprep.subr.mxu0 %v682
    %1268 = vmatpush1.msra.mxu0 %v681
    %1269 = vmatprep.subr.mxu0 %v690
    %1270 = vmatpush1.msra.mxu0 %v689
    %1271 = vmatprep.subr.mxu0 %v698
    %1272 = vmatpush1.msra.mxu0 %v697
    %1273 = vmatprep.subr.mxu0 %v706
    %1274 = vmatpush1.msra.mxu0 %v705
    %1275 = vmatprep.subr.mxu0 %v714
    %1276 = vmatpush1.msra.mxu0 %v713
    %1277 = vmatprep.subr.mxu0 %v722
    %1278 = vmatpush1.msra.mxu0 %v721
    %1279 = vmatprep.subr.mxu0 %v730
    %1280 = vmatpush1.msra.mxu0 %v729
    %1281 = vmatprep.subr.mxu0 %v738
    %1282 = vmatpush1.msra.mxu0 %v737
    %1283 = vmatprep.subr.mxu0 %v746
    %1284 = vmatpush1.msra.mxu0 %v745
    %1285 = vmatprep.subr.mxu0 %v754
    %1286 = vmatpush1.msra.mxu0 %v753
    %1287 = vmatprep.subr.mxu0 %v762
    %1288 = vmatpush1.msra.mxu0 %v761
    %1289 = vmatprep.subr.mxu0 %v770
    %1290 = vmatpush1.msra.mxu0 %v769
    %1291 = vmatprep.subr.mxu0 %v778
    %1292 = vmatpush1.msra.mxu0 %v777
    %1293 = vmatprep.subr.mxu0 %v786
    %1294 = vmatpush1.msra.mxu0 %v785
    %1295 = vmatprep.mubr.f32.mxu0 %v532
    %1296 = vmatmul.mubr.f32.gmra.mrb[0].mxu0 %v531
    %v1297 = vpop.f32.mrb[0].mxu0
    %v1298 = vadd.f32 %v1060, %v1297
    %v1299 = vpop.f32.mrb[0].mxu0
    %v1300 = vadd.f32 %v1064, %v1299
    %1301 = vdwg.mxu0
    %1302 = vmatprep.subr.mxu0 %v794
    %1303 = vmatpush1.msra.mxu0 %v793
    %1304 = vmatprep.subr.mxu0 %v802
    %1305 = vmatpush1.msra.mxu0 %v801
    %1306 = vmatprep.subr.mxu0 %v810
    %1307 = vmatpush1.msra.mxu0 %v809
    %1308 = vmatprep.subr.mxu0 %v818
    %1309 = vmatpush1.msra.mxu0 %v817
    %1310 = vmatprep.subr.mxu0 %v826
    %1311 = vmatpush1.msra.mxu0 %v825
    %1312 = vmatprep.subr.mxu0 %v834
    %1313 = vmatpush1.msra.mxu0 %v833
    %1314 = vmatprep.subr.mxu0 %v842
    %1315 = vmatpush1.msra.mxu0 %v841
    %1316 = vmatprep.subr.mxu0 %v850
    %1317 = vmatpush1.msra.mxu0 %v849
    %1318 = vmatprep.subr.mxu0 %v858
    %1319 = vmatpush1.msra.mxu0 %v857
    %1320 = vmatprep.subr.mxu0 %v866
    %1321 = vmatpush1.msra.mxu0 %v865
    %1322 = vmatprep.subr.mxu0 %v874
    %1323 = vmatpush1.msra.mxu0 %v873
    %1324 = vmatprep.subr.mxu0 %v882
    %1325 = vmatpush1.msra.mxu0 %v881
    %1326 = vmatprep.subr.mxu0 %v890
    %1327 = vmatpush1.msra.mxu0 %v889
    %1328 = vmatprep.subr.mxu0 %v898
    %1329 = vmatpush1.msra.mxu0 %v897
    %1330 = vmatprep.subr.mxu0 %v906
    %1331 = vmatpush1.msra.mxu0 %v905
    %1332 = vmatprep.subr.mxu0 %v914
    %1333 = vmatpush1.msra.mxu0 %v913
    %1334 = vmatprep.subr.mxu0 %v922
    %1335 = vmatpush1.msra.mxu0 %v921
    %1336 = vmatprep.subr.mxu0 %v930
    %1337 = vmatpush1.msra.mxu0 %v929
    %1338 = vmatprep.subr.mxu0 %v938
    %1339 = vmatpush1.msra.mxu0 %v937
    %1340 = vmatprep.subr.mxu0 %v946
    %1341 = vmatpush1.msra.mxu0 %v945
    %1342 = vmatprep.subr.mxu0 %v954
    %1343 = vmatpush1.msra.mxu0 %v953
    %1344 = vmatprep.subr.mxu0 %v962
    %1345 = vmatpush1.msra.mxu0 %v961
    %1346 = vmatprep.subr.mxu0 %v970
    %1347 = vmatpush1.msra.mxu0 %v969
    %1348 = vmatprep.subr.mxu0 %v978
    %1349 = vmatpush1.msra.mxu0 %v977
    %1350 = vmatprep.subr.mxu0 %v986
    %1351 = vmatpush1.msra.mxu0 %v985
    %1352 = vmatprep.subr.mxu0 %v994
    %1353 = vmatpush1.msra.mxu0 %v993
    %1354 = vmatprep.subr.mxu0 %v1002
    %1355 = vmatpush1.msra.mxu0 %v1001
    %1356 = vmatprep.subr.mxu0 %v1010
    %1357 = vmatpush1.msra.mxu0 %v1009
    %1358 = vmatprep.subr.mxu0 %v1018
    %1359 = vmatpush1.msra.mxu0 %v1017
    %1360 = vmatprep.subr.mxu0 %v1026
    %1361 = vmatpush1.msra.mxu0 %v1025
    %1362 = vmatprep.subr.mxu0 %v1034
    %1363 = vmatpush1.msra.mxu0 %v1033
    %1364 = vmatprep.subr.mxu0 %v1042
    %1365 = vmatpush1.msra.mxu0 %v1041
    %1366 = vmatprep.mubr.f32.mxu0 %v534
    %1367 = vmatmul.mubr.f32.gmra.mrb[0].mxu0 %v533
    %v1368 = vpop.f32.mrb[0].mxu0
    %v1369 = vadd.f32 %v1298, %v1368
    %v1370 = vpop.f32.mrb[0].mxu0
    %v1371 = vadd.f32 %v1300, %v1370
    %1372 = vdwg.mxu0
    %1373 = vmatprep.subr.mxu0 %v540
    %1374 = vmatpush1.msra.mxu0 %v539
    %1375 = vmatprep.subr.mxu0 %v548
    %1376 = vmatpush1.msra.mxu0 %v547
    %1377 = vmatprep.subr.mxu0 %v556
    %1378 = vmatpush1.msra.mxu0 %v555
    %1379 = vmatprep.subr.mxu0 %v564
    %1380 = vmatpush1.msra.mxu0 %v563
    %1381 = vmatprep.subr.mxu0 %v572
    %1382 = vmatpush1.msra.mxu0 %v571
    %1383 = vmatprep.subr.mxu0 %v580
    %1384 = vmatpush1.msra.mxu0 %v579
    %1385 = vmatprep.subr.mxu0 %v588
    %1386 = vmatpush1.msra.mxu0 %v587
    %1387 = vmatprep.subr.mxu0 %v596
    %1388 = vmatpush1.msra.mxu0 %v595
    %1389 = vmatprep.subr.mxu0 %v604
    %1390 = vmatpush1.msra.mxu0 %v603
    %1391 = vmatprep.subr.mxu0 %v612
    %1392 = vmatpush1.msra.mxu0 %v611
    %1393 = vmatprep.subr.mxu0 %v620
    %1394 = vmatpush1.msra.mxu0 %v619
    %1395 = vmatprep.subr.mxu0 %v628
    %1396 = vmatpush1.msra.mxu0 %v627
    %1397 = vmatprep.subr.mxu0 %v636
    %1398 = vmatpush1.msra.mxu0 %v635
    %1399 = vmatprep.subr.mxu0 %v644
    %1400 = vmatpush1.msra.mxu0 %v643
    %1401 = vmatprep.subr.mxu0 %v652
    %1402 = vmatpush1.msra.mxu0 %v651
    %1403 = vmatprep.subr.mxu0 %v660
    %1404 = vmatpush1.msra.mxu0 %v659
    %1405 = vmatprep.subr.mxu0 %v668
    %1406 = vmatpush1.msra.mxu0 %v667
    %1407 = vmatprep.subr.mxu0 %v676
    %1408 = vmatpush1.msra.mxu0 %v675
    %1409 = vmatprep.subr.mxu0 %v684
    %1410 = vmatpush1.msra.mxu0 %v683
    %1411 = vmatprep.subr.mxu0 %v692
    %1412 = vmatpush1.msra.mxu0 %v691
    %1413 = vmatprep.subr.mxu0 %v700
    %1414 = vmatpush1.msra.mxu0 %v699
    %1415 = vmatprep.subr.mxu0 %v708
    %1416 = vmatpush1.msra.mxu0 %v707
    %1417 = vmatprep.subr.mxu0 %v716
    %1418 = vmatpush1.msra.mxu0 %v715
    %1419 = vmatprep.subr.mxu0 %v724
    %1420 = vmatpush1.msra.mxu0 %v723
    %1421 = vmatprep.subr.mxu0 %v732
    %1422 = vmatpush1.msra.mxu0 %v731
    %1423 = vmatprep.subr.mxu0 %v740
    %1424 = vmatpush1.msra.mxu0 %v739
    %1425 = vmatprep.subr.mxu0 %v748
    %1426 = vmatpush1.msra.mxu0 %v747
    %1427 = vmatprep.subr.mxu0 %v756
    %1428 = vmatpush1.msra.mxu0 %v755
    %1429 = vmatprep.subr.mxu0 %v764
    %1430 = vmatpush1.msra.mxu0 %v763
    %1431 = vmatprep.subr.mxu0 %v772
    %1432 = vmatpush1.msra.mxu0 %v771
    %1433 = vmatprep.subr.mxu0 %v780
    %1434 = vmatpush1.msra.mxu0 %v779
    %1435 = vmatprep.subr.mxu0 %v788
    %1436 = vmatpush1.msra.mxu0 %v787
    %1437 = vmatprep.mubr.f32.mxu0 %v532
    %1438 = vmatmul.mubr.f32.gmra.mrb[0].mxu0 %v531
    %v1439 = vpop.f32.mrb[0].mxu0
    %v1440 = vadd.f32 %v1068, %v1439
    %v1441 = vpop.f32.mrb[0].mxu0
    %v1442 = vadd.f32 %v1072, %v1441
    %1443 = vdwg.mxu0
    %1444 = vmatprep.subr.mxu0 %v796
    %1445 = vmatpush1.msra.mxu0 %v795
    %1446 = vmatprep.subr.mxu0 %v804
    %1447 = vmatpush1.msra.mxu0 %v803
    %1448 = vmatprep.subr.mxu0 %v812
    %1449 = vmatpush1.msra.mxu0 %v811
    %1450 = vmatprep.subr.mxu0 %v820
    %1451 = vmatpush1.msra.mxu0 %v819
    %1452 = vmatprep.subr.mxu0 %v828
    %1453 = vmatpush1.msra.mxu0 %v827
    %1454 = vmatprep.subr.mxu0 %v836
    %1455 = vmatpush1.msra.mxu0 %v835
    %1456 = vmatprep.subr.mxu0 %v844
    %1457 = vmatpush1.msra.mxu0 %v843
    %1458 = vmatprep.subr.mxu0 %v852
    %1459 = vmatpush1.msra.mxu0 %v851
    %1460 = vmatprep.subr.mxu0 %v860
    %1461 = vmatpush1.msra.mxu0 %v859
    %1462 = vmatprep.subr.mxu0 %v868
    %1463 = vmatpush1.msra.mxu0 %v867
    %1464 = vmatprep.subr.mxu0 %v876
    %1465 = vmatpush1.msra.mxu0 %v875
    %1466 = vmatprep.subr.mxu0 %v884
    %1467 = vmatpush1.msra.mxu0 %v883
    %1468 = vmatprep.subr.mxu0 %v892
    %1469 = vmatpush1.msra.mxu0 %v891
    %1470 = vmatprep.subr.mxu0 %v900
    %1471 = vmatpush1.msra.mxu0 %v899
    %1472 = vmatprep.subr.mxu0 %v908
    %1473 = vmatpush1.msra.mxu0 %v907
    %1474 = vmatprep.subr.mxu0 %v916
    %1475 = vmatpush1.msra.mxu0 %v915
    %1476 = vmatprep.subr.mxu0 %v924
    %1477 = vmatpush1.msra.mxu0 %v923
    %1478 = vmatprep.subr.mxu0 %v932
    %1479 = vmatpush1.msra.mxu0 %v931
    %1480 = vmatprep.subr.mxu0 %v940
    %1481 = vmatpush1.msra.mxu0 %v939
    %1482 = vmatprep.subr.mxu0 %v948
    %1483 = vmatpush1.msra.mxu0 %v947
    %1484 = vmatprep.subr.mxu0 %v956
    %1485 = vmatpush1.msra.mxu0 %v955
    %1486 = vmatprep.subr.mxu0 %v964
    %1487 = vmatpush1.msra.mxu0 %v963
    %1488 = vmatprep.subr.mxu0 %v972
    %1489 = vmatpush1.msra.mxu0 %v971
    %1490 = vmatprep.subr.mxu0 %v980
    %1491 = vmatpush1.msra.mxu0 %v979
    %1492 = vmatprep.subr.mxu0 %v988
    %1493 = vmatpush1.msra.mxu0 %v987
    %1494 = vmatprep.subr.mxu0 %v996
    %1495 = vmatpush1.msra.mxu0 %v995
    %1496 = vmatprep.subr.mxu0 %v1004
    %1497 = vmatpush1.msra.mxu0 %v1003
    %1498 = vmatprep.subr.mxu0 %v1012
    %1499 = vmatpush1.msra.mxu0 %v1011
    %1500 = vmatprep.subr.mxu0 %v1020
    %1501 = vmatpush1.msra.mxu0 %v1019
    %1502 = vmatprep.subr.mxu0 %v1028
    %1503 = vmatpush1.msra.mxu0 %v1027
    %1504 = vmatprep.subr.mxu0 %v1036
    %1505 = vmatpush1.msra.mxu0 %v1035
    %1506 = vmatprep.subr.mxu0 %v1044
    %1507 = vmatpush1.msra.mxu0 %v1043
    %1508 = vmatprep.mubr.f32.mxu0 %v534
    %1509 = vmatmul.mubr.f32.gmra.mrb[0].mxu0 %v533
    %v1510 = vpop.f32.mrb[0].mxu0
    %v1511 = vadd.f32 %v1440, %v1510
    %v1512 = vpop.f32.mrb[0].mxu0
    %v1513 = vadd.f32 %v1442, %v1512
    %1514 = vdwg.mxu0
    %1515 = vmatprep.subr.mxu0 %v542
    %1516 = vmatpush1.msra.mxu0 %v541
    %1517 = vmatprep.subr.mxu0 %v550
    %1518 = vmatpush1.msra.mxu0 %v549
    %1519 = vmatprep.subr.mxu0 %v558
    %1520 = vmatpush1.msra.mxu0 %v557
    %1521 = vmatprep.subr.mxu0 %v566
    %1522 = vmatpush1.msra.mxu0 %v565
    %1523 = vmatprep.subr.mxu0 %v574
    %1524 = vmatpush1.msra.mxu0 %v573
    %1525 = vmatprep.subr.mxu0 %v582
    %1526 = vmatpush1.msra.mxu0 %v581
    %1527 = vmatprep.subr.mxu0 %v590
    %1528 = vmatpush1.msra.mxu0 %v589
    %1529 = vmatprep.subr.mxu0 %v598
    %1530 = vmatpush1.msra.mxu0 %v597
    %1531 = vmatprep.subr.mxu0 %v606
    %1532 = vmatpush1.msra.mxu0 %v605
    %1533 = vmatprep.subr.mxu0 %v614
    %1534 = vmatpush1.msra.mxu0 %v613
    %1535 = vmatprep.subr.mxu0 %v622
    %1536 = vmatpush1.msra.mxu0 %v621
    %1537 = vmatprep.subr.mxu0 %v630
    %1538 = vmatpush1.msra.mxu0 %v629
    %1539 = vmatprep.subr.mxu0 %v638
    %1540 = vmatpush1.msra.mxu0 %v637
    %1541 = vmatprep.subr.mxu0 %v646
    %1542 = vmatpush1.msra.mxu0 %v645
    %1543 = vmatprep.subr.mxu0 %v654
    %1544 = vmatpush1.msra.mxu0 %v653
    %1545 = vmatprep.subr.mxu0 %v662
    %1546 = vmatpush1.msra.mxu0 %v661
    %1547 = vmatprep.subr.mxu0 %v670
    %1548 = vmatpush1.msra.mxu0 %v669
    %1549 = vmatprep.subr.mxu0 %v678
    %1550 = vmatpush1.msra.mxu0 %v677
    %1551 = vmatprep.subr.mxu0 %v686
    %1552 = vmatpush1.msra.mxu0 %v685
    %1553 = vmatprep.subr.mxu0 %v694
    %1554 = vmatpush1.msra.mxu0 %v693
    %1555 = vmatprep.subr.mxu0 %v702
    %1556 = vmatpush1.msra.mxu0 %v701
    %1557 = vmatprep.subr.mxu0 %v710
    %1558 = vmatpush1.msra.mxu0 %v709
    %1559 = vmatprep.subr.mxu0 %v718
    %1560 = vmatpush1.msra.mxu0 %v717
    %1561 = vmatprep.subr.mxu0 %v726
    %1562 = vmatpush1.msra.mxu0 %v725
    %1563 = vmatprep.subr.mxu0 %v734
    %1564 = vmatpush1.msra.mxu0 %v733
    %1565 = vmatprep.subr.mxu0 %v742
    %1566 = vmatpush1.msra.mxu0 %v741
    %1567 = vmatprep.subr.mxu0 %v750
    %1568 = vmatpush1.msra.mxu0 %v749
    %1569 = vmatprep.subr.mxu0 %v758
    %1570 = vmatpush1.msra.mxu0 %v757
    %1571 = vmatprep.subr.mxu0 %v766
    %1572 = vmatpush1.msra.mxu0 %v765
    %1573 = vmatprep.subr.mxu0 %v774
    %1574 = vmatpush1.msra.mxu0 %v773
    %1575 = vmatprep.subr.mxu0 %v782
    %1576 = vmatpush1.msra.mxu0 %v781
    %1577 = vmatprep.subr.mxu0 %v790
    %1578 = vmatpush1.msra.mxu0 %v789
    %1579 = vmatprep.mubr.f32.mxu0 %v532
    %1580 = vmatmul.mubr.f32.gmra.mrb[0].mxu0 %v531
    %v1581 = vpop.f32.mrb[0].mxu0
    %v1582 = vadd.f32 %v1076, %v1581
    %v1583 = vpop.f32.mrb[0].mxu0
    %v1584 = vadd.f32 %v1080, %v1583
    %1585 = vdwg.mxu0
    %1586 = vmatprep.subr.mxu0 %v798
    %1587 = vmatpush1.msra.mxu0 %v797
    %1588 = vmatprep.subr.mxu0 %v806
    %1589 = vmatpush1.msra.mxu0 %v805
    %1590 = vmatprep.subr.mxu0 %v814
    %1591 = vmatpush1.msra.mxu0 %v813
    %1592 = vmatprep.subr.mxu0 %v822
    %1593 = vmatpush1.msra.mxu0 %v821
    %1594 = vmatprep.subr.mxu0 %v830
    %1595 = vmatpush1.msra.mxu0 %v829
    %1596 = vmatprep.subr.mxu0 %v838
    %1597 = vmatpush1.msra.mxu0 %v837
    %1598 = vmatprep.subr.mxu0 %v846
    %1599 = vmatpush1.msra.mxu0 %v845
    %1600 = vmatprep.subr.mxu0 %v854
    %1601 = vmatpush1.msra.mxu0 %v853
    %1602 = vmatprep.subr.mxu0 %v862
    %1603 = vmatpush1.msra.mxu0 %v861
    %1604 = vmatprep.subr.mxu0 %v870
    %1605 = vmatpush1.msra.mxu0 %v869
    %1606 = vmatprep.subr.mxu0 %v878
    %1607 = vmatpush1.msra.mxu0 %v877
    %1608 = vmatprep.subr.mxu0 %v886
    %1609 = vmatpush1.msra.mxu0 %v885
    %1610 = vmatprep.subr.mxu0 %v894
    %1611 = vmatpush1.msra.mxu0 %v893
    %1612 = vmatprep.subr.mxu0 %v902
    %1613 = vmatpush1.msra.mxu0 %v901
    %1614 = vmatprep.subr.mxu0 %v910
    %1615 = vmatpush1.msra.mxu0 %v909
    %1616 = vmatprep.subr.mxu0 %v918
    %1617 = vmatpush1.msra.mxu0 %v917
    %1618 = vmatprep.subr.mxu0 %v926
    %1619 = vmatpush1.msra.mxu0 %v925
    %1620 = vmatprep.subr.mxu0 %v934
    %1621 = vmatpush1.msra.mxu0 %v933
    %1622 = vmatprep.subr.mxu0 %v942
    %1623 = vmatpush1.msra.mxu0 %v941
    %1624 = vmatprep.subr.mxu0 %v950
    %1625 = vmatpush1.msra.mxu0 %v949
    %1626 = vmatprep.subr.mxu0 %v958
    %1627 = vmatpush1.msra.mxu0 %v957
    %1628 = vmatprep.subr.mxu0 %v966
    %1629 = vmatpush1.msra.mxu0 %v965
    %1630 = vmatprep.subr.mxu0 %v974
    %1631 = vmatpush1.msra.mxu0 %v973
    %1632 = vmatprep.subr.mxu0 %v982
    %1633 = vmatpush1.msra.mxu0 %v981
    %1634 = vmatprep.subr.mxu0 %v990
    %1635 = vmatpush1.msra.mxu0 %v989
    %1636 = vmatprep.subr.mxu0 %v998
    %1637 = vmatpush1.msra.mxu0 %v997
    %1638 = vmatprep.subr.mxu0 %v1006
    %1639 = vmatpush1.msra.mxu0 %v1005
    %1640 = vmatprep.subr.mxu0 %v1014
    %1641 = vmatpush1.msra.mxu0 %v1013
    %1642 = vmatprep.subr.mxu0 %v1022
    %1643 = vmatpush1.msra.mxu0 %v1021
    %1644 = vmatprep.subr.mxu0 %v1030
    %1645 = vmatpush1.msra.mxu0 %v1029
    %1646 = vmatprep.subr.mxu0 %v1038
    %1647 = vmatpush1.msra.mxu0 %v1037
    %1648 = vmatprep.subr.mxu0 %v1046
    %1649 = vmatpush1.msra.mxu0 %v1045
    %1650 = vmatprep.mubr.f32.mxu0 %v534
    %1651 = vmatmul.mubr.f32.gmra.mrb[0].mxu0 %v533
    %v1652 = vpop.f32.mrb[0].mxu0
    %v1653 = vadd.f32 %v1582, %v1652
    %v1654 = vpop.f32.mrb[0].mxu0
    %v1655 = vadd.f32 %v1584, %v1654
    %1656 = vdwg.mxu0
    %v1657 = vmax.f32 %v1227, 0.0
    %v1658 = vmax.f32 %v1229, 0.0
    %v1659 = vmax.f32 %v1369, 0.0
    %v1660 = vmax.f32 %v1371, 0.0
    %v1661 = vmax.f32 %v1511, 0.0
    %v1662 = vmax.f32 %v1513, 0.0
    %v1663 = vmax.f32 %v1653, 0.0
    %v1664 = vmax.f32 %v1655, 0.0
    %v1665 = vld [vmem:[#allocation14] sm:$0xff]
    %v1666 = vld [vmem:[#allocation14 + $0x8] sm:$0xff]
    %v1667 = vld [vmem:[#allocation14 + $0x10] sm:$0xff]
    %v1668 = vld [vmem:[#allocation14 + $0x18] sm:$0xff]
    %v1669 = vld [vmem:[#allocation14 + $0x20] sm:$0xff]
    %v1670 = vld [vmem:[#allocation14 + $0x28] sm:$0xff]
    %v1671 = vld [vmem:[#allocation14 + $0x30] sm:$0xff]
    %v1672 = vld [vmem:[#allocation14 + $0x38] sm:$0xff]
    %v1673 = vld [vmem:[#allocation14 + $0x40] sm:$0xff]
    %v1674 = vld [vmem:[#allocation14 + $0x48] sm:$0xff]
    %v1675 = vld [vmem:[#allocation14 + $0x50] sm:$0xff]
    %v1676 = vld [vmem:[#allocation14 + $0x58] sm:$0xff]
    %v1677 = vld [vmem:[#allocation14 + $0x60] sm:$0xff]
    %v1678 = vld [vmem:[#allocation14 + $0x68] sm:$0xff]
    %v1679 = vld [vmem:[#allocation14 + $0x70] sm:$0xff]
    %v1680 = vld [vmem:[#allocation14 + $0x78] sm:$0xff]
    %v1681 = vld [vmem:[#allocation14 + $0x80] sm:$0xff]
    %v1682 = vld [vmem:[#allocation14 + $0x88] sm:$0xff]
    %v1683 = vld [vmem:[#allocation14 + $0x90] sm:$0xff]
    %v1684 = vld [vmem:[#allocation14 + $0x98] sm:$0xff]
    %v1685 = vld [vmem:[#allocation14 + $0xa0] sm:$0xff]
    %v1686 = vld [vmem:[#allocation14 + $0xa8] sm:$0xff]
    %v1687 = vld [vmem:[#allocation14 + $0xb0] sm:$0xff]
    %v1688 = vld [vmem:[#allocation14 + $0xb8] sm:$0xff]
    %v1689 = vld [vmem:[#allocation14 + $0xc0] sm:$0xff]
    %v1690 = vld [vmem:[#allocation14 + $0xc8] sm:$0xff]
    %v1691 = vld [vmem:[#allocation14 + $0xd0] sm:$0xff]
    %v1692 = vld [vmem:[#allocation14 + $0xd8] sm:$0xff]
    %v1693 = vld [vmem:[#allocation14 + $0xe0] sm:$0xff]
    %v1694 = vld [vmem:[#allocation14 + $0xe8] sm:$0xff]
    %v1695 = vld [vmem:[#allocation14 + $0xf0] sm:$0xff]
    %v1696 = vld [vmem:[#allocation14 + $0xf8] sm:$0xff]
    %v1697 = vld [vmem:[#allocation14 + $0x100] sm:$0xff]
    %v1698 = vld [vmem:[#allocation14 + $0x108] sm:$0xff]
    %v1699 = vld [vmem:[#allocation14 + $0x110] sm:$0xff]
    %v1700 = vld [vmem:[#allocation14 + $0x118] sm:$0xff]
    %v1701 = vld [vmem:[#allocation14 + $0x120] sm:$0xff]
    %v1702 = vld [vmem:[#allocation14 + $0x128] sm:$0xff]
    %v1703 = vld [vmem:[#allocation14 + $0x130] sm:$0xff]
    %v1704 = vld [vmem:[#allocation14 + $0x138] sm:$0xff]
    %v1705 = vld [vmem:[#allocation14 + $0x140] sm:$0xff]
    %v1706 = vld [vmem:[#allocation14 + $0x148] sm:$0xff]
    %v1707 = vld [vmem:[#allocation14 + $0x150] sm:$0xff]
    %v1708 = vld [vmem:[#allocation14 + $0x158] sm:$0xff]
    %v1709 = vld [vmem:[#allocation14 + $0x160] sm:$0xff]
    %v1710 = vld [vmem:[#allocation14 + $0x168] sm:$0xff]
    %v1711 = vld [vmem:[#allocation14 + $0x170] sm:$0xff]
    %v1712 = vld [vmem:[#allocation14 + $0x178] sm:$0xff]
    %v1713 = vld [vmem:[#allocation14 + $0x180] sm:$0xff]
    %v1714 = vld [vmem:[#allocation14 + $0x188] sm:$0xff]
    %v1715 = vld [vmem:[#allocation14 + $0x190] sm:$0xff]
    %v1716 = vld [vmem:[#allocation14 + $0x198] sm:$0xff]
    %v1717 = vld [vmem:[#allocation14 + $0x1a0] sm:$0xff]
    %v1718 = vld [vmem:[#allocation14 + $0x1a8] sm:$0xff]
    %v1719 = vld [vmem:[#allocation14 + $0x1b0] sm:$0xff]
    %v1720 = vld [vmem:[#allocation14 + $0x1b8] sm:$0xff]
    %v1721 = vld [vmem:[#allocation14 + $0x1c0] sm:$0xff]
    %v1722 = vld [vmem:[#allocation14 + $0x1c8] sm:$0xff]
    %v1723 = vld [vmem:[#allocation14 + $0x1d0] sm:$0xff]
    %v1724 = vld [vmem:[#allocation14 + $0x1d8] sm:$0xff]
    %v1725 = vld [vmem:[#allocation14 + $0x1e0] sm:$0xff]
    %v1726 = vld [vmem:[#allocation14 + $0x1e8] sm:$0xff]
    %v1727 = vld [vmem:[#allocation14 + $0x1f0] sm:$0xff]
    %v1728 = vld [vmem:[#allocation14 + $0x1f8] sm:$0xff]
    %v1729 = vld [vmem:[#allocation14 + $0x200] sm:$0xff]
    %v1730 = vld [vmem:[#allocation14 + $0x208] sm:$0xff]
    %v1731 = vld [vmem:[#allocation14 + $0x210] sm:$0xff]
    %v1732 = vld [vmem:[#allocation14 + $0x218] sm:$0xff]
    %v1733 = vld [vmem:[#allocation14 + $0x220] sm:$0xff]
    %v1734 = vld [vmem:[#allocation14 + $0x228] sm:$0xff]
    %v1735 = vld [vmem:[#allocation14 + $0x230] sm:$0xff]
    %v1736 = vld [vmem:[#allocation14 + $0x238] sm:$0xff]
    %v1737 = vld [vmem:[#allocation14 + $0x240] sm:$0xff]
    %v1738 = vld [vmem:[#allocation14 + $0x248] sm:$0xff]
    %v1739 = vld [vmem:[#allocation14 + $0x250] sm:$0xff]
    %v1740 = vld [vmem:[#allocation14 + $0x258] sm:$0xff]
    %v1741 = vld [vmem:[#allocation14 + $0x260] sm:$0xff]
    %v1742 = vld [vmem:[#allocation14 + $0x268] sm:$0xff]
    %v1743 = vld [vmem:[#allocation14 + $0x270] sm:$0xff]
    %v1744 = vld [vmem:[#allocation14 + $0x278] sm:$0xff]
    %v1745 = vld [vmem:[#allocation14 + $0x280] sm:$0xff]
    %v1746 = vld [vmem:[#allocation14 + $0x288] sm:$0xff]
    %v1747 = vld [vmem:[#allocation14 + $0x290] sm:$0xff]
    %v1748 = vld [vmem:[#allocation14 + $0x298] sm:$0xff]
    %v1749 = vld [vmem:[#allocation14 + $0x2a0] sm:$0xff]
    %v1750 = vld [vmem:[#allocation14 + $0x2a8] sm:$0xff]
    %v1751 = vld [vmem:[#allocation14 + $0x2b0] sm:$0xff]
    %v1752 = vld [vmem:[#allocation14 + $0x2b8] sm:$0xff]
    %v1753 = vld [vmem:[#allocation14 + $0x2c0] sm:$0xff]
    %v1754 = vld [vmem:[#allocation14 + $0x2c8] sm:$0xff]
    %v1755 = vld [vmem:[#allocation14 + $0x2d0] sm:$0xff]
    %v1756 = vld [vmem:[#allocation14 + $0x2d8] sm:$0xff]
    %v1757 = vld [vmem:[#allocation14 + $0x2e0] sm:$0xff]
    %v1758 = vld [vmem:[#allocation14 + $0x2e8] sm:$0xff]
    %v1759 = vld [vmem:[#allocation14 + $0x2f0] sm:$0xff]
    %v1760 = vld [vmem:[#allocation14 + $0x2f8] sm:$0xff]
    %v1761 = vld [vmem:[#allocation14 + $0x300] sm:$0xff]
    %v1762 = vld [vmem:[#allocation14 + $0x308] sm:$0xff]
    %v1763 = vld [vmem:[#allocation14 + $0x310] sm:$0xff]
    %v1764 = vld [vmem:[#allocation14 + $0x318] sm:$0xff]
    %v1765 = vld [vmem:[#allocation14 + $0x320] sm:$0xff]
    %v1766 = vld [vmem:[#allocation14 + $0x328] sm:$0xff]
    %v1767 = vld [vmem:[#allocation14 + $0x330] sm:$0xff]
    %v1768 = vld [vmem:[#allocation14 + $0x338] sm:$0xff]
    %v1769 = vld [vmem:[#allocation14 + $0x340] sm:$0xff]
    %v1770 = vld [vmem:[#allocation14 + $0x348] sm:$0xff]
    %v1771 = vld [vmem:[#allocation14 + $0x350] sm:$0xff]
    %v1772 = vld [vmem:[#allocation14 + $0x358] sm:$0xff]
    %v1773 = vld [vmem:[#allocation14 + $0x360] sm:$0xff]
    %v1774 = vld [vmem:[#allocation14 + $0x368] sm:$0xff]
    %v1775 = vld [vmem:[#allocation14 + $0x370] sm:$0xff]
    %v1776 = vld [vmem:[#allocation14 + $0x378] sm:$0xff]
    %v1777 = vld [vmem:[#allocation14 + $0x380] sm:$0xff]
    %v1778 = vld [vmem:[#allocation14 + $0x388] sm:$0xff]
    %v1779 = vld [vmem:[#allocation14 + $0x390] sm:$0xff]
    %v1780 = vld [vmem:[#allocation14 + $0x398] sm:$0xff]
    %v1781 = vld [vmem:[#allocation14 + $0x3a0] sm:$0xff]
    %v1782 = vld [vmem:[#allocation14 + $0x3a8] sm:$0xff]
    %v1783 = vld [vmem:[#allocation14 + $0x3b0] sm:$0xff]
    %v1784 = vld [vmem:[#allocation14 + $0x3b8] sm:$0xff]
    %v1785 = vld [vmem:[#allocation14 + $0x3c0] sm:$0xff]
    %v1786 = vld [vmem:[#allocation14 + $0x3c8] sm:$0xff]
    %v1787 = vld [vmem:[#allocation14 + $0x3d0] sm:$0xff]
    %v1788 = vld [vmem:[#allocation14 + $0x3d8] sm:$0xff]
    %v1789 = vld [vmem:[#allocation14 + $0x3e0] sm:$0xff]
    %v1790 = vld [vmem:[#allocation14 + $0x3e8] sm:$0xff]
    %v1791 = vld [vmem:[#allocation14 + $0x3f0] sm:$0xff]
    %v1792 = vld [vmem:[#allocation14 + $0x3f8] sm:$0xff]
    %v1793 = vld [vmem:[#allocation16] sm:$0x1]
    %v1795 = vlaneseq
    %v1796 = vshrl.u32 %v1795, 7
    %v1797 = vsub.s32 0, %v1796
    %v1798 = vrot.slane %v1793, %v1797
    %1800 = vmatprep.subr.mxu0 0.0
    %1801 = vmatpush1.msra.mxu0 %v1665
    %1802 = vmatprep.subr.mxu0 0.0
    %1803 = vmatpush1.msra.mxu0 %v1666
    %1804 = vmatprep.subr.mxu0 0.0
    %1805 = vmatpush1.msra.mxu0 %v1667
    %1806 = vmatprep.subr.mxu0 0.0
    %1807 = vmatpush1.msra.mxu0 %v1668
    %1808 = vmatprep.subr.mxu0 0.0
    %1809 = vmatpush1.msra.mxu0 %v1669
    %1810 = vmatprep.subr.mxu0 0.0
    %1811 = vmatpush1.msra.mxu0 %v1670
    %1812 = vmatprep.subr.mxu0 0.0
    %1813 = vmatpush1.msra.mxu0 %v1671
    %1814 = vmatprep.subr.mxu0 0.0
    %1815 = vmatpush1.msra.mxu0 %v1672
    %1816 = vmatprep.subr.mxu0 0.0
    %1817 = vmatpush1.msra.mxu0 %v1673
    %1818 = vmatprep.subr.mxu0 0.0
    %1819 = vmatpush1.msra.mxu0 %v1674
    %1820 = vmatprep.subr.mxu0 0.0
    %1821 = vmatpush1.msra.mxu0 %v1675
    %1822 = vmatprep.subr.mxu0 0.0
    %1823 = vmatpush1.msra.mxu0 %v1676
    %1824 = vmatprep.subr.mxu0 0.0
    %1825 = vmatpush1.msra.mxu0 %v1677
    %1826 = vmatprep.subr.mxu0 0.0
    %1827 = vmatpush1.msra.mxu0 %v1678
    %1828 = vmatprep.subr.mxu0 0.0
    %1829 = vmatpush1.msra.mxu0 %v1679
    %1830 = vmatprep.subr.mxu0 0.0
    %1831 = vmatpush1.msra.mxu0 %v1680
    %1832 = vmatprep.subr.mxu0 0.0
    %1833 = vmatpush1.msra.mxu0 %v1681
    %1834 = vmatprep.subr.mxu0 0.0
    %1835 = vmatpush1.msra.mxu0 %v1682
    %1836 = vmatprep.subr.mxu0 0.0
    %1837 = vmatpush1.msra.mxu0 %v1683
    %1838 = vmatprep.subr.mxu0 0.0
    %1839 = vmatpush1.msra.mxu0 %v1684
    %1840 = vmatprep.subr.mxu0 0.0
    %1841 = vmatpush1.msra.mxu0 %v1685
    %1842 = vmatprep.subr.mxu0 0.0
    %1843 = vmatpush1.msra.mxu0 %v1686
    %1844 = vmatprep.subr.mxu0 0.0
    %1845 = vmatpush1.msra.mxu0 %v1687
    %1846 = vmatprep.subr.mxu0 0.0
    %1847 = vmatpush1.msra.mxu0 %v1688
    %1848 = vmatprep.subr.mxu0 0.0
    %1849 = vmatpush1.msra.mxu0 %v1689
    %1850 = vmatprep.subr.mxu0 0.0
    %1851 = vmatpush1.msra.mxu0 %v1690
    %1852 = vmatprep.subr.mxu0 0.0
    %1853 = vmatpush1.msra.mxu0 %v1691
    %1854 = vmatprep.subr.mxu0 0.0
    %1855 = vmatpush1.msra.mxu0 %v1692
    %1856 = vmatprep.subr.mxu0 0.0
    %1857 = vmatpush1.msra.mxu0 %v1693
    %1858 = vmatprep.subr.mxu0 0.0
    %1859 = vmatpush1.msra.mxu0 %v1694
    %1860 = vmatprep.subr.mxu0 0.0
    %1861 = vmatpush1.msra.mxu0 %v1695
    %1862 = vmatprep.subr.mxu0 0.0
    %1863 = vmatpush1.msra.mxu0 %v1696
    %1864 = vmatprep.mubr.f32.mxu0 %v1658
    %1865 = vmatmul.mubr.f32.gmra.mrb[0].mxu0 %v1657
    %v1866 = vpop.f32.mrb[0].mxu0
    %v1867 = vadd.f32 %v1798, %v1866
    %v1868 = vpop.f32.mrb[0].mxu0
    %1869 = vdwg.mxu0
    %1870 = vmatprep.subr.mxu0 0.0
    %1871 = vmatpush1.msra.mxu0 %v1697
    %1872 = vmatprep.subr.mxu0 0.0
    %1873 = vmatpush1.msra.mxu0 %v1698
    %1874 = vmatprep.subr.mxu0 0.0
    %1875 = vmatpush1.msra.mxu0 %v1699
    %1876 = vmatprep.subr.mxu0 0.0
    %1877 = vmatpush1.msra.mxu0 %v1700
    %1878 = vmatprep.subr.mxu0 0.0
    %1879 = vmatpush1.msra.mxu0 %v1701
    %1880 = vmatprep.subr.mxu0 0.0
    %1881 = vmatpush1.msra.mxu0 %v1702
    %1882 = vmatprep.subr.mxu0 0.0
    %1883 = vmatpush1.msra.mxu0 %v1703
    %1884 = vmatprep.subr.mxu0 0.0
    %1885 = vmatpush1.msra.mxu0 %v1704
    %1886 = vmatprep.subr.mxu0 0.0
    %1887 = vmatpush1.msra.mxu0 %v1705
    %1888 = vmatprep.subr.mxu0 0.0
    %1889 = vmatpush1.msra.mxu0 %v1706
    %1890 = vmatprep.subr.mxu0 0.0
    %1891 = vmatpush1.msra.mxu0 %v1707
    %1892 = vmatprep.subr.mxu0 0.0
    %1893 = vmatpush1.msra.mxu0 %v1708
    %1894 = vmatprep.subr.mxu0 0.0
    %1895 = vmatpush1.msra.mxu0 %v1709
    %1896 = vmatprep.subr.mxu0 0.0
    %1897 = vmatpush1.msra.mxu0 %v1710
    %1898 = vmatprep.subr.mxu0 0.0
    %1899 = vmatpush1.msra.mxu0 %v1711
    %1900 = vmatprep.subr.mxu0 0.0
    %1901 = vmatpush1.msra.mxu0 %v1712
    %1902 = vmatprep.subr.mxu0 0.0
    %1903 = vmatpush1.msra.mxu0 %v1713
    %1904 = vmatprep.subr.mxu0 0.0
    %1905 = vmatpush1.msra.mxu0 %v1714
    %1906 = vmatprep.subr.mxu0 0.0
    %1907 = vmatpush1.msra.mxu0 %v1715
    %1908 = vmatprep.subr.mxu0 0.0
    %1909 = vmatpush1.msra.mxu0 %v1716
    %1910 = vmatprep.subr.mxu0 0.0
    %1911 = vmatpush1.msra.mxu0 %v1717
    %1912 = vmatprep.subr.mxu0 0.0
    %1913 = vmatpush1.msra.mxu0 %v1718
    %1914 = vmatprep.subr.mxu0 0.0
    %1915 = vmatpush1.msra.mxu0 %v1719
    %1916 = vmatprep.subr.mxu0 0.0
    %1917 = vmatpush1.msra.mxu0 %v1720
    %1918 = vmatprep.subr.mxu0 0.0
    %1919 = vmatpush1.msra.mxu0 %v1721
    %1920 = vmatprep.subr.mxu0 0.0
    %1921 = vmatpush1.msra.mxu0 %v1722
    %1922 = vmatprep.subr.mxu0 0.0
    %1923 = vmatpush1.msra.mxu0 %v1723
    %1924 = vmatprep.subr.mxu0 0.0
    %1925 = vmatpush1.msra.mxu0 %v1724
    %1926 = vmatprep.subr.mxu0 0.0
    %1927 = vmatpush1.msra.mxu0 %v1725
    %1928 = vmatprep.subr.mxu0 0.0
    %1929 = vmatpush1.msra.mxu0 %v1726
    %1930 = vmatprep.subr.mxu0 0.0
    %1931 = vmatpush1.msra.mxu0 %v1727
    %1932 = vmatprep.subr.mxu0 0.0
    %1933 = vmatpush1.msra.mxu0 %v1728
    %1934 = vmatprep.mubr.f32.mxu0 %v1660
    %1935 = vmatmul.mubr.f32.gmra.mrb[0].mxu0 %v1659
    %v1936 = vpop.f32.mrb[0].mxu0
    %v1937 = vadd.f32 %v1867, %v1936
    %v1938 = vpop.f32.mrb[0].mxu0
    %1939 = vdwg.mxu0
    %1940 = vmatprep.subr.mxu0 0.0
    %1941 = vmatpush1.msra.mxu0 %v1729
    %1942 = vmatprep.subr.mxu0 0.0
    %1943 = vmatpush1.msra.mxu0 %v1730
    %1944 = vmatprep.subr.mxu0 0.0
    %1945 = vmatpush1.msra.mxu0 %v1731
    %1946 = vmatprep.subr.mxu0 0.0
    %1947 = vmatpush1.msra.mxu0 %v1732
    %1948 = vmatprep.subr.mxu0 0.0
    %1949 = vmatpush1.msra.mxu0 %v1733
    %1950 = vmatprep.subr.mxu0 0.0
    %1951 = vmatpush1.msra.mxu0 %v1734
    %1952 = vmatprep.subr.mxu0 0.0
    %1953 = vmatpush1.msra.mxu0 %v1735
    %1954 = vmatprep.subr.mxu0 0.0
    %1955 = vmatpush1.msra.mxu0 %v1736
    %1956 = vmatprep.subr.mxu0 0.0
    %1957 = vmatpush1.msra.mxu0 %v1737
    %1958 = vmatprep.subr.mxu0 0.0
    %1959 = vmatpush1.msra.mxu0 %v1738
    %1960 = vmatprep.subr.mxu0 0.0
    %1961 = vmatpush1.msra.mxu0 %v1739
    %1962 = vmatprep.subr.mxu0 0.0
    %1963 = vmatpush1.msra.mxu0 %v1740
    %1964 = vmatprep.subr.mxu0 0.0
    %1965 = vmatpush1.msra.mxu0 %v1741
    %1966 = vmatprep.subr.mxu0 0.0
    %1967 = vmatpush1.msra.mxu0 %v1742
    %1968 = vmatprep.subr.mxu0 0.0
    %1969 = vmatpush1.msra.mxu0 %v1743
    %1970 = vmatprep.subr.mxu0 0.0
    %1971 = vmatpush1.msra.mxu0 %v1744
    %1972 = vmatprep.subr.mxu0 0.0
    %1973 = vmatpush1.msra.mxu0 %v1745
    %1974 = vmatprep.subr.mxu0 0.0
    %1975 = vmatpush1.msra.mxu0 %v1746
    %1976 = vmatprep.subr.mxu0 0.0
    %1977 = vmatpush1.msra.mxu0 %v1747
    %1978 = vmatprep.subr.mxu0 0.0
    %1979 = vmatpush1.msra.mxu0 %v1748
    %1980 = vmatprep.subr.mxu0 0.0
    %1981 = vmatpush1.msra.mxu0 %v1749
    %1982 = vmatprep.subr.mxu0 0.0
    %1983 = vmatpush1.msra.mxu0 %v1750
    %1984 = vmatprep.subr.mxu0 0.0
    %1985 = vmatpush1.msra.mxu0 %v1751
    %1986 = vmatprep.subr.mxu0 0.0
    %1987 = vmatpush1.msra.mxu0 %v1752
    %1988 = vmatprep.subr.mxu0 0.0
    %1989 = vmatpush1.msra.mxu0 %v1753
    %1990 = vmatprep.subr.mxu0 0.0
    %1991 = vmatpush1.msra.mxu0 %v1754
    %1992 = vmatprep.subr.mxu0 0.0
    %1993 = vmatpush1.msra.mxu0 %v1755
    %1994 = vmatprep.subr.mxu0 0.0
    %1995 = vmatpush1.msra.mxu0 %v1756
    %1996 = vmatprep.subr.mxu0 0.0
    %1997 = vmatpush1.msra.mxu0 %v1757
    %1998 = vmatprep.subr.mxu0 0.0
    %1999 = vmatpush1.msra.mxu0 %v1758
    %2000 = vmatprep.subr.mxu0 0.0
    %2001 = vmatpush1.msra.mxu0 %v1759
    %2002 = vmatprep.subr.mxu0 0.0
    %2003 = vmatpush1.msra.mxu0 %v1760
    %2004 = vmatprep.mubr.f32.mxu0 %v1662
    %2005 = vmatmul.mubr.f32.gmra.mrb[0].mxu0 %v1661
    %v2006 = vpop.f32.mrb[0].mxu0
    %v2007 = vadd.f32 %v1937, %v2006
    %v2008 = vpop.f32.mrb[0].mxu0
    %2009 = vdwg.mxu0
    %2010 = vmatprep.subr.mxu0 0.0
    %2011 = vmatpush1.msra.mxu0 %v1761
    %2012 = vmatprep.subr.mxu0 0.0
    %2013 = vmatpush1.msra.mxu0 %v1762
    %2014 = vmatprep.subr.mxu0 0.0
    %2015 = vmatpush1.msra.mxu0 %v1763
    %2016 = vmatprep.subr.mxu0 0.0
    %2017 = vmatpush1.msra.mxu0 %v1764
    %2018 = vmatprep.subr.mxu0 0.0
    %2019 = vmatpush1.msra.mxu0 %v1765
    %2020 = vmatprep.subr.mxu0 0.0
    %2021 = vmatpush1.msra.mxu0 %v1766
    %2022 = vmatprep.subr.mxu0 0.0
    %2023 = vmatpush1.msra.mxu0 %v1767
    %2024 = vmatprep.subr.mxu0 0.0
    %2025 = vmatpush1.msra.mxu0 %v1768
    %2026 = vmatprep.subr.mxu0 0.0
    %2027 = vmatpush1.msra.mxu0 %v1769
    %2028 = vmatprep.subr.mxu0 0.0
    %2029 = vmatpush1.msra.mxu0 %v1770
    %2030 = vmatprep.subr.mxu0 0.0
    %2031 = vmatpush1.msra.mxu0 %v1771
    %2032 = vmatprep.subr.mxu0 0.0
    %2033 = vmatpush1.msra.mxu0 %v1772
    %2034 = vmatprep.subr.mxu0 0.0
    %2035 = vmatpush1.msra.mxu0 %v1773
    %2036 = vmatprep.subr.mxu0 0.0
    %2037 = vmatpush1.msra.mxu0 %v1774
    %2038 = vmatprep.subr.mxu0 0.0
    %2039 = vmatpush1.msra.mxu0 %v1775
    %2040 = vmatprep.subr.mxu0 0.0
    %2041 = vmatpush1.msra.mxu0 %v1776
    %2042 = vmatprep.subr.mxu0 0.0
    %2043 = vmatpush1.msra.mxu0 %v1777
    %2044 = vmatprep.subr.mxu0 0.0
    %2045 = vmatpush1.msra.mxu0 %v1778
    %2046 = vmatprep.subr.mxu0 0.0
    %2047 = vmatpush1.msra.mxu0 %v1779
    %2048 = vmatprep.subr.mxu0 0.0
    %2049 = vmatpush1.msra.mxu0 %v1780
    %2050 = vmatprep.subr.mxu0 0.0
    %2051 = vmatpush1.msra.mxu0 %v1781
    %2052 = vmatprep.subr.mxu0 0.0
    %2053 = vmatpush1.msra.mxu0 %v1782
    %2054 = vmatprep.subr.mxu0 0.0
    %2055 = vmatpush1.msra.mxu0 %v1783
    %2056 = vmatprep.subr.mxu0 0.0
    %2057 = vmatpush1.msra.mxu0 %v1784
    %2058 = vmatprep.subr.mxu0 0.0
    %2059 = vmatpush1.msra.mxu0 %v1785
    %2060 = vmatprep.subr.mxu0 0.0
    %2061 = vmatpush1.msra.mxu0 %v1786
    %2062 = vmatprep.subr.mxu0 0.0
    %2063 = vmatpush1.msra.mxu0 %v1787
    %2064 = vmatprep.subr.mxu0 0.0
    %2065 = vmatpush1.msra.mxu0 %v1788
    %2066 = vmatprep.subr.mxu0 0.0
    %2067 = vmatpush1.msra.mxu0 %v1789
    %2068 = vmatprep.subr.mxu0 0.0
    %2069 = vmatpush1.msra.mxu0 %v1790
    %2070 = vmatprep.subr.mxu0 0.0
    %2071 = vmatpush1.msra.mxu0 %v1791
    %2072 = vmatprep.subr.mxu0 0.0
    %2073 = vmatpush1.msra.mxu0 %v1792
    %2074 = vmatprep.mubr.f32.mxu0 %v1664
    %2075 = vmatmul.mubr.f32.gmra.mrb[0].mxu0 %v1663
    %v2076 = vpop.f32.mrb[0].mxu0
    %v2077 = vadd.f32 %v2007, %v2076
    %v2078 = vpop.f32.mrb[0].mxu0
    %2079 = vdwg.mxu0
    %2080 = vst [vmem:[#allocation17] sm:$0xff] %v2077
    // Predicated region
    $region74: #{tpu_custom_call.1} parent=1 // pred_check
      _
    $region75: #{tpu_custom_call.1} parent=1 // pred_check_branch
      %2082 = sbr.rel (0) target = $region77
    $region76: #{tpu_custom_call.1} parent=1 // pred_region
      %s2084 = ssub.s32 128, 128
      %2085 = vsyncadd [#allocation4], %s2084
      %s2087 = sshll.u32 [#allocation17], 4
      %s2088 = int_to_ptr.vmem [resolvable:$true] %s2087
      %2090 = dma.vmem_to_hbm [thread:$0]  %s2088, 128, %s9, [#allocation4]
    $region77: #{tpu_custom_call.1} parent=1 // pred_fallthru
      _
    // Predicated region
    $region78: #{tpu_custom_call.1} parent=1 // pred_check
      _
    $region79: #{tpu_custom_call.1} parent=1 // pred_check_branch
      %2092 = sbr.rel (0) target = $region81
    $region80: #{tpu_custom_call.1} parent=1 // pred_region
      %2093 = dma.done [#allocation4], 128
    $region81: #{tpu_custom_call.1} parent=1 // pred_fallthru
      _
    %2094 = vsyncpa [#allocation3], 1
    %2095 = vsyncpa [#allocation6], 1
    %2096 = vsyncpa [#allocation9], 1
    %2097 = vsyncpa [#allocation12], 1
    %2098 = vsyncpa [#allocation15], 1
    %2099 = vsyncpa [#allocation4], 1

// kernel: tpu_custom_call.1
$region0: #{tpu_custom_call.1}
  #allocation0 [shape = 'u32[]', space=smem, size = 0x4, offset = 0x4, fixed_abs, tag = 'smem constant byte address 0x4 - core index']
  #allocation1 [shape = 'u32[144,128]{1,0:T(1,128)}', space=vmem, size = 0x12000, scoped, tag = 'internal scratch']
  %s0 = inlined_call_operand.hbm [shape: f32[8,16], index: 0, kind: input, shape index: {}]
  %s1 = inlined_call_operand.hbm [shape: f32[16,256], index: 1, kind: input, shape index: {}]
  %s2 = inlined_call_operand.hbm [shape: f32[1,256], index: 2, kind: input, shape index: {}]
  %s3 = inlined_call_operand.hbm [shape: f32[256,512], index: 3, kind: input, shape index: {}]
  %s4 = inlined_call_operand.hbm [shape: f32[1,512], index: 4, kind: input, shape index: {}]
  %s5 = inlined_call_operand.hbm [shape: f32[512,1024], index: 5, kind: input, shape index: {}]
  %s6 = inlined_call_operand.hbm [shape: f32[1,1024], index: 6, kind: input, shape index: {}]
  %s7 = inlined_call_operand.hbm [shape: f32[1024,128], index: 7, kind: input, shape index: {}]
  %s8 = inlined_call_operand.hbm [shape: f32[1,128], index: 8, kind: input, shape index: {}]
  %s9 = inlined_call_operand.hbm [shape: f32[8,128], index: 9, kind: output, shape index: {}]
  %s10 = sld [smem:[#allocation0]]
  $region82: #{tpu_custom_call.1} parent=0
    _
  %s12 = ssub.s32 1, %s10
  %s13 = scalar_select 0, %s12, %s10
  $region1: #{tpu_custom_call.1} parent=0
    #allocation2 [shape = 'u8[4096]{0}', space=vmem, size = 0x1000, scoped, tag = 'input window, operand 0, single buffered']
    #allocation3 [shape = 's32[1]{0}', space=sflag, size = 0x4, scoped, tag = 'scoped memory for tpu_custom_call.1']
    #allocation4 [shape = 's32[1]{0}', space=sflag, size = 0x4, scoped, tag = 'scoped memory for tpu_custom_call.1']
    #allocation5 [shape = 'u8[16384]{0}', space=vmem, size = 0x4000, scoped, tag = 'input window, operand 1, single buffered']
    #allocation6 [shape = 's32[1]{0}', space=sflag, size = 0x4, scoped, tag = 'scoped memory for tpu_custom_call.1']
    #allocation7 [shape = 'u8[1024]{0}', space=vmem, size = 0x400, scoped, tag = 'input window, operand 2, single buffered']
    #allocation8 [shape = 'u8[524288]{0}', space=vmem, size = 0x80000, scoped, tag = 'input window, operand 3, single buffered']
    #allocation9 [shape = 's32[1]{0}', space=sflag, size = 0x4, scoped, tag = 'scoped memory for tpu_custom_call.1']
    #allocation10 [shape = 'u8[2048]{0}', space=vmem, size = 0x800, scoped, tag = 'input window, operand 4, single buffered']
    #allocation11 [shape = 'u8[2097152]{0}', space=vmem, size = 0x200000, scoped, tag = 'input window, operand 5, single buffered']
    #allocation12 [shape = 's32[1]{0}', space=sflag, size = 0x4, scoped, tag = 'scoped memory for tpu_custom_call.1']
    #allocation13 [shape = 'u8[4096]{0}', space=vmem, size = 0x1000, scoped, tag = 'input window, operand 6, single buffered']
    #allocation14 [shape = 'u8[524288]{0}', space=vmem, size = 0x80000, scoped, tag = 'input window, operand 7, single buffered']
    #allocation15 [shape = 's32[1]{0}', space=sflag, size = 0x4, scoped, tag = 'scoped memory for tpu_custom_call.1']
    #allocation16 [shape = 'u8[512]{0}', space=vmem, size = 0x400, scoped, tag = 'input window, operand 8, single buffered']
    #allocation17 [shape = 'u8[4096]{0}', space=vmem, size = 0x1000, scoped, tag = 'output window, operand 0, single buffered']
    %14 = vsyncpa [#allocation3], 0
    %15 = vsyncpa [#allocation6], 0
    %16 = vsyncpa [#allocation9], 0
    %17 = vsyncpa [#allocation12], 0
    %18 = vsyncpa [#allocation15], 0
    %19 = vsyncpa [#allocation4], 0
    // Predicated region
    $region2: #{tpu_custom_call.1} parent=1 // pred_check
      _
    $region3: #{tpu_custom_call.1} parent=1 // pred_check_branch
      %21 = sbr.rel (0) target = $region5
    $region4: #{tpu_custom_call.1} parent=1 // pred_region
      %s23 = ssub.s32 128, 128
      %24 = vsyncadd [#allocation3], %s23
      %s26 = sshll.u32 [#allocation2], 4
      %s27 = int_to_ptr.vmem [resolvable:$true] %s26
      %29 = dma.hbm_to_vmem [thread:$0]  %s0, 128, %s27, [#allocation3]
    $region5: #{tpu_custom_call.1} parent=1 // pred_fallthru
      _
    // Predicated region
    $region6: #{tpu_custom_call.1} parent=1 // pred_check
      _
    $region7: #{tpu_custom_call.1} parent=1 // pred_check_branch
      %31 = sbr.rel (0) target = $region9
    $region8: #{tpu_custom_call.1} parent=1 // pred_region
      %s33 = ssub.s32 512, 512
      %34 = vsyncadd [#allocation6], %s33
      %s35 = sshll.u32 [#allocation5], 4
      %s36 = int_to_ptr.vmem [resolvable:$true] %s35
      %41 = dma.hbm_to_vmem [thread:$0]  %s1, 512, %s36, [#allocation6], 256, 256, 16
    $region9: #{tpu_custom_call.1} parent=1 // pred_fallthru
      _
    // Predicated region
    $region10: #{tpu_custom_call.1} parent=1 // pred_check
      _
    $region11: #{tpu_custom_call.1} parent=1 // pred_check_branch
      %43 = sbr.rel (0) target = $region13
    $region12: #{tpu_custom_call.1} parent=1 // pred_region
      %s45 = ssub.s32 32, 32
      %46 = vsyncadd [#allocation6], %s45
      %s48 = sshll.u32 [#allocation7], 4
      %s49 = int_to_ptr.vmem [resolvable:$true] %s48
      %51 = dma.hbm_to_vmem [thread:$0]  %s2, 32, %s49, [#allocation6]
    $region13: #{tpu_custom_call.1} parent=1 // pred_fallthru
      _
    // Predicated region
    $region14: #{tpu_custom_call.1} parent=1 // pred_check
      _
    $region15: #{tpu_custom_call.1} parent=1 // pred_check_branch
      %53 = sbr.rel (0) target = $region17
    $region16: #{tpu_custom_call.1} parent=1 // pred_region
      %s55 = ssub.s32 16384, 16384
      %56 = vsyncadd [#allocation9], %s55
      %s57 = sshll.u32 [#allocation8], 4
      %s58 = int_to_ptr.vmem [resolvable:$true] %s57
      %63 = dma.hbm_to_vmem [thread:$0]  %s3, 16384, %s58, [#allocation9], 512, 512, 32
    $region17: #{tpu_custom_call.1} parent=1 // pred_fallthru
      _
    // Predicated region
    $region18: #{tpu_custom_call.1} parent=1 // pred_check
      _
    $region19: #{tpu_custom_call.1} parent=1 // pred_check_branch
      %65 = sbr.rel (0) target = $region21
    $region20: #{tpu_custom_call.1} parent=1 // pred_region
      %s67 = ssub.s32 64, 64
      %68 = vsyncadd [#allocation9], %s67
      %s70 = sshll.u32 [#allocation10], 4
      %s71 = int_to_ptr.vmem [resolvable:$true] %s70
      %73 = dma.hbm_to_vmem [thread:$0]  %s4, 64, %s71, [#allocation9]
    $region21: #{tpu_custom_call.1} parent=1 // pred_fallthru
      _
    // Predicated region
    $region22: #{tpu_custom_call.1} parent=1 // pred_check
      _
    $region23: #{tpu_custom_call.1} parent=1 // pred_check_branch
      %75 = sbr.rel (0) target = $region25
    $region24: #{tpu_custom_call.1} parent=1 // pred_region
      %s77 = ssub.s32 65536, 65536
      %78 = vsyncadd [#allocation12], %s77
      %s79 = sshll.u32 [#allocation11], 4
      %s80 = int_to_ptr.vmem [resolvable:$true] %s79
      %85 = dma.hbm_to_vmem [thread:$0]  %s5, 65536, %s80, [#allocation12], 1024, 1024, 64
    $region25: #{tpu_custom_call.1} parent=1 // pred_fallthru
      _
    // Predicated region
    $region26: #{tpu_custom_call.1} parent=1 // pred_check
      _
    $region27: #{tpu_custom_call.1} parent=1 // pred_check_branch
      %87 = sbr.rel (0) target = $region29
    $region28: #{tpu_custom_call.1} parent=1 // pred_region
      %s89 = ssub.s32 128, 128
      %90 = vsyncadd [#allocation12], %s89
      %s92 = sshll.u32 [#allocation13], 4
      %s93 = int_to_ptr.vmem [resolvable:$true] %s92
      %95 = dma.hbm_to_vmem [thread:$0]  %s6, 128, %s93, [#allocation12]
    $region29: #{tpu_custom_call.1} parent=1 // pred_fallthru
      _
    // Predicated region
    $region30: #{tpu_custom_call.1} parent=1 // pred_check
      _
    $region31: #{tpu_custom_call.1} parent=1 // pred_check_branch
      %97 = sbr.rel (0) target = $region33
    $region32: #{tpu_custom_call.1} parent=1 // pred_region
      %s99 = ssub.s32 16384, 16384
      %100 = vsyncadd [#allocation15], %s99
      %s101 = sshll.u32 [#allocation14], 4
      %s102 = int_to_ptr.vmem [resolvable:$true] %s101
      %107 = dma.hbm_to_vmem [thread:$0]  %s7, 16384, %s102, [#allocation15], 128, 128, 8
    $region33: #{tpu_custom_call.1} parent=1 // pred_fallthru
      _
    // Predicated region
    $region34: #{tpu_custom_call.1} parent=1 // pred_check
      _
    $region35: #{tpu_custom_call.1} parent=1 // pred_check_branch
      %109 = sbr.rel (0) target = $region37
    $region36: #{tpu_custom_call.1} parent=1 // pred_region
      %s111 = ssub.s32 16, 16
      %112 = vsyncadd [#allocation15], %s111
      %s114 = sshll.u32 [#allocation16], 4
      %s115 = int_to_ptr.vmem [resolvable:$true] %s114
      %117 = dma.hbm_to_vmem [thread:$0]  %s8, 16, %s115, [#allocation15]
    $region37: #{tpu_custom_call.1} parent=1 // pred_fallthru
      _
    // Predicated region
    $region38: #{tpu_custom_call.1} parent=1 // pred_check
      _
    $region39: #{tpu_custom_call.1} parent=1 // pred_check_branch
      %119 = sbr.rel (0) target = $region41
    $region40: #{tpu_custom_call.1} parent=1 // pred_region
      %120 = dma.done [#allocation3], 128
    $region41: #{tpu_custom_call.1} parent=1 // pred_fallthru
      _
    // Predicated region
    $region42: #{tpu_custom_call.1} parent=1 // pred_check
      _
    $region43: #{tpu_custom_call.1} parent=1 // pred_check_branch
      %122 = sbr.rel (0) target = $region45
    $region44: #{tpu_custom_call.1} parent=1 // pred_region
      %123 = dma.done [#allocation6], 512
    $region45: #{tpu_custom_call.1} parent=1 // pred_fallthru
      _
    // Predicated region
    $region46: #{tpu_custom_call.1} parent=1 // pred_check
      _
    $region47: #{tpu_custom_call.1} parent=1 // pred_check_branch
      %125 = sbr.rel (0) target = $region49
    $region48: #{tpu_custom_call.1} parent=1 // pred_region
      %126 = dma.done [#allocation6], 32
    $region49: #{tpu_custom_call.1} parent=1 // pred_fallthru
      _
    // Predicated region
    $region50: #{tpu_custom_call.1} parent=1 // pred_check
      _
    $region51: #{tpu_custom_call.1} parent=1 // pred_check_branch
      %128 = sbr.rel (0) target = $region53
    $region52: #{tpu_custom_call.1} parent=1 // pred_region
      %129 = dma.done [#allocation9], 16384
    $region53: #{tpu_custom_call.1} parent=1 // pred_fallthru
      _
    // Predicated region
    $region54: #{tpu_custom_call.1} parent=1 // pred_check
      _
    $region55: #{tpu_custom_call.1} parent=1 // pred_check_branch
      %131 = sbr.rel (0) target = $region57
    $region56: #{tpu_custom_call.1} parent=1 // pred_region
      %132 = dma.done [#allocation9], 64
    $region57: #{tpu_custom_call.1} parent=1 // pred_fallthru
      _
    // Predicated region
    $region58: #{tpu_custom_call.1} parent=1 // pred_check
      _
    $region59: #{tpu_custom_call.1} parent=1 // pred_check_branch
      %134 = sbr.rel (0) target = $region61
    $region60: #{tpu_custom_call.1} parent=1 // pred_region
      %135 = dma.done [#allocation12], 65536
    $region61: #{tpu_custom_call.1} parent=1 // pred_fallthru
      _
    // Predicated region
    $region62: #{tpu_custom_call.1} parent=1 // pred_check
      _
    $region63: #{tpu_custom_call.1} parent=1 // pred_check_branch
      %137 = sbr.rel (0) target = $region65
    $region64: #{tpu_custom_call.1} parent=1 // pred_region
      %138 = dma.done [#allocation12], 128
    $region65: #{tpu_custom_call.1} parent=1 // pred_fallthru
      _
    // Predicated region
    $region66: #{tpu_custom_call.1} parent=1 // pred_check
      _
    $region67: #{tpu_custom_call.1} parent=1 // pred_check_branch
      %140 = sbr.rel (0) target = $region69
    $region68: #{tpu_custom_call.1} parent=1 // pred_region
      %141 = dma.done [#allocation15], 16384
    $region69: #{tpu_custom_call.1} parent=1 // pred_fallthru
      _
    // Predicated region
    $region70: #{tpu_custom_call.1} parent=1 // pred_check
      _
    $region71: #{tpu_custom_call.1} parent=1 // pred_check_branch
      %143 = sbr.rel (0) target = $region73
    $region72: #{tpu_custom_call.1} parent=1 // pred_region
      %144 = dma.done [#allocation15], 16
    $region73: #{tpu_custom_call.1} parent=1 // pred_fallthru
      _
    %v145 = vld [vmem:[#allocation2] sm:$0xff]
    %v146 = vld [vmem:[#allocation5] sm:$0xff]
    %v147 = vld [vmem:[#allocation5 + $0x8] sm:$0xff]
    %v148 = vld [vmem:[#allocation5 + $0x10] sm:$0xff]
    %v149 = vld [vmem:[#allocation5 + $0x18] sm:$0xff]
    %v150 = vld [vmem:[#allocation7] sm:$0x3]
    %v152 = vlaneseq
    %v153 = vshrl.u32 %v152, 7
    %v154 = vsub.s32 0, %v153
    %v155 = vrot.slane %v150, %v154
    %v156 = vlaneseq
    %v157 = vshrl.u32 %v156, 7
    %v158 = vsub.s32 1, %v157
    %v159 = vrot.slane %v150, %v158
    %vm162 = vcmask 130048
    %v164 = vsel %vm162, %v145, 0
    %166 = vmatprep.subr.mxu0 %v147
    %167 = vmatpush1.msra.mxu0 %v146
    %168 = vmatprep.subr.mxu0 %v149
    %169 = vmatpush1.msra.mxu0 %v148
    %170 = vmatprep.subr.mxu0 0.0
    %171 = vmatpush1.msra.mxu0 0.0
    %172 = vmatprep.subr.mxu0 0.0
    %173 = vmatpush1.msra.mxu0 0.0
    %174 = vmatprep.subr.mxu0 0.0
    %175 = vmatpush1.msra.mxu0 0.0
    %176 = vmatprep.subr.mxu0 0.0
    %177 = vmatpush1.msra.mxu0 0.0
    %178 = vmatprep.subr.mxu0 0.0
    %179 = vmatpush1.msra.mxu0 0.0
    %180 = vmatprep.subr.mxu0 0.0
    %181 = vmatpush1.msra.mxu0 0.0
    %182 = vmatprep.subr.mxu0 0.0
    %183 = vmatpush1.msra.mxu0 0.0
    %184 = vmatprep.subr.mxu0 0.0
    %185 = vmatpush1.msra.mxu0 0.0
    %186 = vmatprep.subr.mxu0 0.0
    %187 = vmatpush1.msra.mxu0 0.0
    %188 = vmatprep.subr.mxu0 0.0
    %189 = vmatpush1.msra.mxu0 0.0
    %190 = vmatprep.subr.mxu0 0.0
    %191 = vmatpush1.msra.mxu0 0.0
    %192 = vmatprep.subr.mxu0 0.0
    %193 = vmatpush1.msra.mxu0 0.0
    %194 = vmatprep.subr.mxu0 0.0
    %195 = vmatpush1.msra.mxu0 0.0
    %196 = vmatprep.subr.mxu0 0.0
    %197 = vmatpush1.msra.mxu0 0.0
    %198 = vmatprep.subr.mxu0 0.0
    %199 = vmatpush1.msra.mxu0 0.0
    %200 = vmatprep.subr.mxu0 0.0
    %201 = vmatpush1.msra.mxu0 0.0
    %202 = vmatprep.subr.mxu0 0.0
    %203 = vmatpush1.msra.mxu0 0.0
    %204 = vmatprep.subr.mxu0 0.0
    %205 = vmatpush1.msra.mxu0 0.0
    %206 = vmatprep.subr.mxu0 0.0
    %207 = vmatpush1.msra.mxu0 0.0
    %208 = vmatprep.subr.mxu0 0.0
    %209 = vmatpush1.msra.mxu0 0.0
    %210 = vmatprep.subr.mxu0 0.0
    %211 = vmatpush1.msra.mxu0 0.0
    %212 = vmatprep.subr.mxu0 0.0
    %213 = vmatpush1.msra.mxu0 0.0
    %214 = vmatprep.subr.mxu0 0.0
    %215 = vmatpush1.msra.mxu0 0.0
    %216 = vmatprep.subr.mxu0 0.0
    %217 = vmatpush1.msra.mxu0 0.0
    %218 = vmatprep.subr.mxu0 0.0
    %219 = vmatpush1.msra.mxu0 0.0
    %220 = vmatprep.subr.mxu0 0.0
    %221 = vmatpush1.msra.mxu0 0.0
    %222 = vmatprep.subr.mxu0 0.0
    %223 = vmatpush1.msra.mxu0 0.0
    %224 = vmatprep.subr.mxu0 0.0
    %225 = vmatpush1.msra.mxu0 0.0
    %226 = vmatprep.subr.mxu0 0.0
    %227 = vmatpush1.msra.mxu0 0.0
    %228 = vmatprep.subr.mxu0 0.0
    %229 = vmatpush1.msra.mxu0 0.0
    %230 = vmatprep.mubr.f32.mxu0 0.0
    %231 = vmatmul.mubr.f32.gmra.mrb[0].mxu0 %v164
    %v232 = vpop.f32.mrb[0].mxu0
    %v233 = vadd.f32 %v155, %v232
    %v234 = vpop.f32.mrb[0].mxu0
    %v235 = vadd.f32 %v159, %v234
    %236 = vdwg.mxu0
    %v237 = vmax.f32 %v233, 0.0
    %v238 = vmax.f32 %v235, 0.0
    %v239 = vld [vmem:[#allocation8] sm:$0xff]
    %v240 = vld [vmem:[#allocation8 + $0x8] sm:$0xff]
    %v241 = vld [vmem:[#allocation8 + $0x10] sm:$0xff]
    %v242 = vld [vmem:[#allocation8 + $0x18] sm:$0xff]
    %v243 = vld [vmem:[#allocation8 + $0x20] sm:$0xff]
    %v244 = vld [vmem:[#allocation8 + $0x28] sm:$0xff]
    %v245 = vld [vmem:[#allocation8 + $0x30] sm:$0xff]
    %v246 = vld [vmem:[#allocation8 + $0x38] sm:$0xff]
    %v247 = vld [vmem:[#allocation8 + $0x40] sm:$0xff]
    %v248 = vld [vmem:[#allocation8 + $0x48] sm:$0xff]
    %v249 = vld [vmem:[#allocation8 + $0x50] sm:$0xff]
    %v250 = vld [vmem:[#allocation8 + $0x58] sm:$0xff]
    %v251 = vld [vmem:[#allocation8 + $0x60] sm:$0xff]
    %v252 = vld [vmem:[#allocation8 + $0x68] sm:$0xff]
    %v253 = vld [vmem:[#allocation8 + $0x70] sm:$0xff]
    %v254 = vld [vmem:[#allocation8 + $0x78] sm:$0xff]
    %v255 = vld [vmem:[#allocation8 + $0x80] sm:$0xff]
    %v256 = vld [vmem:[#allocation8 + $0x88] sm:$0xff]
    %v257 = vld [vmem:[#allocation8 + $0x90] sm:$0xff]
    %v258 = vld [vmem:[#allocation8 + $0x98] sm:$0xff]
    %v259 = vld [vmem:[#allocation8 + $0xa0] sm:$0xff]
    %v260 = vld [vmem:[#allocation8 + $0xa8] sm:$0xff]
    %v261 = vld [vmem:[#allocation8 + $0xb0] sm:$0xff]
    %v262 = vld [vmem:[#allocation8 + $0xb8] sm:$0xff]
    %v263 = vld [vmem:[#allocation8 + $0xc0] sm:$0xff]
    %v264 = vld [vmem:[#allocation8 + $0xc8] sm:$0xff]
    %v265 = vld [vmem:[#allocation8 + $0xd0] sm:$0xff]
    %v266 = vld [vmem:[#allocation8 + $0xd8] sm:$0xff]
    %v267 = vld [vmem:[#allocation8 + $0xe0] sm:$0xff]
    %v268 = vld [vmem:[#allocation8 + $0xe8] sm:$0xff]
    %v269 = vld [vmem:[#allocation8 + $0xf0] sm:$0xff]
    %v270 = vld [vmem:[#allocation8 + $0xf8] sm:$0xff]
    %v271 = vld [vmem:[#allocation8 + $0x100] sm:$0xff]
    %v272 = vld [vmem:[#allocation8 + $0x108] sm:$0xff]
    %v273 = vld [vmem:[#allocation8 + $0x110] sm:$0xff]
    %v274 = vld [vmem:[#allocation8 + $0x118] sm:$0xff]
    %v275 = vld [vmem:[#allocation8 + $0x120] sm:$0xff]
    %v276 = vld [vmem:[#allocation8 + $0x128] sm:$0xff]
    %v277 = vld [vmem:[#allocation8 + $0x130] sm:$0xff]
    %v278 = vld [vmem:[#allocation8 + $0x138] sm:$0xff]
    %v279 = vld [vmem:[#allocation8 + $0x140] sm:$0xff]
    %v280 = vld [vmem:[#allocation8 + $0x148] sm:$0xff]
    %v281 = vld [vmem:[#allocation8 + $0x150] sm:$0xff]
    %v282 = vld [vmem:[#allocation8 + $0x158] sm:$0xff]
    %v283 = vld [vmem:[#allocation8 + $0x160] sm:$0xff]
    %v284 = vld [vmem:[#allocation8 + $0x168] sm:$0xff]
    %v285 = vld [vmem:[#allocation8 + $0x170] sm:$0xff]
    %v286 = vld [vmem:[#allocation8 + $0x178] sm:$0xff]
    %v287 = vld [vmem:[#allocation8 + $0x180] sm:$0xff]
    %v288 = vld [vmem:[#allocation8 + $0x188] sm:$0xff]
    %v289 = vld [vmem:[#allocation8 + $0x190] sm:$0xff]
    %v290 = vld [vmem:[#allocation8 + $0x198] sm:$0xff]
    %v291 = vld [vmem:[#allocation8 + $0x1a0] sm:$0xff]
    %v292 = vld [vmem:[#allocation8 + $0x1a8] sm:$0xff]
    %v293 = vld [vmem:[#allocation8 + $0x1b0] sm:$0xff]
    %v294 = vld [vmem:[#allocation8 + $0x1b8] sm:$0xff]
    %v295 = vld [vmem:[#allocation8 + $0x1c0] sm:$0xff]
    %v296 = vld [vmem:[#allocation8 + $0x1c8] sm:$0xff]
    %v297 = vld [vmem:[#allocation8 + $0x1d0] sm:$0xff]
    %v298 = vld [vmem:[#allocation8 + $0x1d8] sm:$0xff]
    %v299 = vld [vmem:[#allocation8 + $0x1e0] sm:$0xff]
    %v300 = vld [vmem:[#allocation8 + $0x1e8] sm:$0xff]
    %v301 = vld [vmem:[#allocation8 + $0x1f0] sm:$0xff]
    %v302 = vld [vmem:[#allocation8 + $0x1f8] sm:$0xff]
    %v303 = vld [vmem:[#allocation8 + $0x200] sm:$0xff]
    %v304 = vld [vmem:[#allocation8 + $0x208] sm:$0xff]
    %v305 = vld [vmem:[#allocation8 + $0x210] sm:$0xff]
    %v306 = vld [vmem:[#allocation8 + $0x218] sm:$0xff]
    %v307 = vld [vmem:[#allocation8 + $0x220] sm:$0xff]
    %v308 = vld [vmem:[#allocation8 + $0x228] sm:$0xff]
    %v309 = vld [vmem:[#allocation8 + $0x230] sm:$0xff]
    %v310 = vld [vmem:[#allocation8 + $0x238] sm:$0xff]
    %v311 = vld [vmem:[#allocation8 + $0x240] sm:$0xff]
    %v312 = vld [vmem:[#allocation8 + $0x248] sm:$0xff]
    %v313 = vld [vmem:[#allocation8 + $0x250] sm:$0xff]
    %v314 = vld [vmem:[#allocation8 + $0x258] sm:$0xff]
    %v315 = vld [vmem:[#allocation8 + $0x260] sm:$0xff]
    %v316 = vld [vmem:[#allocation8 + $0x268] sm:$0xff]
    %v317 = vld [vmem:[#allocation8 + $0x270] sm:$0xff]
    %v318 = vld [vmem:[#allocation8 + $0x278] sm:$0xff]
    %v319 = vld [vmem:[#allocation8 + $0x280] sm:$0xff]
    %v320 = vld [vmem:[#allocation8 + $0x288] sm:$0xff]
    %v321 = vld [vmem:[#allocation8 + $0x290] sm:$0xff]
    %v322 = vld [vmem:[#allocation8 + $0x298] sm:$0xff]
    %v323 = vld [vmem:[#allocation8 + $0x2a0] sm:$0xff]
    %v324 = vld [vmem:[#allocation8 + $0x2a8] sm:$0xff]
    %v325 = vld [vmem:[#allocation8 + $0x2b0] sm:$0xff]
    %v326 = vld [vmem:[#allocation8 + $0x2b8] sm:$0xff]
    %v327 = vld [vmem:[#allocation8 + $0x2c0] sm:$0xff]
    %v328 = vld [vmem:[#allocation8 + $0x2c8] sm:$0xff]
    %v329 = vld [vmem:[#allocation8 + $0x2d0] sm:$0xff]
    %v330 = vld [vmem:[#allocation8 + $0x2d8] sm:$0xff]
    %v331 = vld [vmem:[#allocation8 + $0x2e0] sm:$0xff]
    %v332 = vld [vmem:[#allocation8 + $0x2e8] sm:$0xff]
    %v333 = vld [vmem:[#allocation8 + $0x2f0] sm:$0xff]
    %v334 = vld [vmem:[#allocation8 + $0x2f8] sm:$0xff]
    %v335 = vld [vmem:[#allocation8 + $0x300] sm:$0xff]
    %v336 = vld [vmem:[#allocation8 + $0x308] sm:$0xff]
    %v337 = vld [vmem:[#allocation8 + $0x310] sm:$0xff]
    %v338 = vld [vmem:[#allocation8 + $0x318] sm:$0xff]
    %v339 = vld [vmem:[#allocation8 + $0x320] sm:$0xff]
    %v340 = vld [vmem:[#allocation8 + $0x328] sm:$0xff]
    %v341 = vld [vmem:[#allocation8 + $0x330] sm:$0xff]
    %v342 = vld [vmem:[#allocation8 + $0x338] sm:$0xff]
    %v343 = vld [vmem:[#allocation8 + $0x340] sm:$0xff]
    %v344 = vld [vmem:[#allocation8 + $0x348] sm:$0xff]
    %v345 = vld [vmem:[#allocation8 + $0x350] sm:$0xff]
    %v346 = vld [vmem:[#allocation8 + $0x358] sm:$0xff]
    %v347 = vld [vmem:[#allocation8 + $0x360] sm:$0xff]
    %v348 = vld [vmem:[#allocation8 + $0x368] sm:$0xff]
    %v349 = vld [vmem:[#allocation8 + $0x370] sm:$0xff]
    %v350 = vld [vmem:[#allocation8 + $0x378] sm:$0xff]
    %v351 = vld [vmem:[#allocation8 + $0x380] sm:$0xff]
    %v352 = vld [vmem:[#allocation8 + $0x388] sm:$0xff]
    %v353 = vld [vmem:[#allocation8 + $0x390] sm:$0xff]
    %v354 = vld [vmem:[#allocation8 + $0x398] sm:$0xff]
    %v355 = vld [vmem:[#allocation8 + $0x3a0] sm:$0xff]
    %v356 = vld [vmem:[#allocation8 + $0x3a8] sm:$0xff]
    %v357 = vld [vmem:[#allocation8 + $0x3b0] sm:$0xff]
    %v358 = vld [vmem:[#allocation8 + $0x3b8] sm:$0xff]
    %v359 = vld [vmem:[#allocation8 + $0x3c0] sm:$0xff]
    %v360 = vld [vmem:[#allocation8 + $0x3c8] sm:$0xff]
    %v361 = vld [vmem:[#allocation8 + $0x3d0] sm:$0xff]
    %v362 = vld [vmem:[#allocation8 + $0x3d8] sm:$0xff]
    %v363 = vld [vmem:[#allocation8 + $0x3e0] sm:$0xff]
    %v364 = vld [vmem:[#allocation8 + $0x3e8] sm:$0xff]
    %v365 = vld [vmem:[#allocation8 + $0x3f0] sm:$0xff]
    %v366 = vld [vmem:[#allocation8 + $0x3f8] sm:$0xff]
    %v367 = vld [vmem:[#allocation10] sm:$0xf]
    %v369 = vlaneseq
    %v370 = vshrl.u32 %v369, 7
    %v371 = vsub.s32 0, %v370
    %v372 = vrot.slane %v367, %v371
    %v373 = vlaneseq
    %v374 = vshrl.u32 %v373, 7
    %v375 = vsub.s32 1, %v374
    %v376 = vrot.slane %v367, %v375
    %v377 = vlaneseq
    %v378 = vshrl.u32 %v377, 7
    %v379 = vsub.s32 2, %v378
    %v380 = vrot.slane %v367, %v379
    %v381 = vlaneseq
    %v382 = vshrl.u32 %v381, 7
    %v383 = vsub.s32 3, %v382
    %v384 = vrot.slane %v367, %v383
    %389 = vmatprep.subr.mxu0 %v240
    %390 = vmatpush1.msra.mxu0 %v239
    %391 = vmatprep.subr.mxu0 %v244
    %392 = vmatpush1.msra.mxu0 %v243
    %393 = vmatprep.subr.mxu0 %v248
    %394 = vmatpush1.msra.mxu0 %v247
    %395 = vmatprep.subr.mxu0 %v252
    %396 = vmatpush1.msra.mxu0 %v251
    %397 = vmatprep.subr.mxu0 %v256
    %398 = vmatpush1.msra.mxu0 %v255
    %399 = vmatprep.subr.mxu0 %v260
    %400 = vmatpush1.msra.mxu0 %v259
    %401 = vmatprep.subr.mxu0 %v264
    %402 = vmatpush1.msra.mxu0 %v263
    %403 = vmatprep.subr.mxu0 %v268
    %404 = vmatpush1.msra.mxu0 %v267
    %405 = vmatprep.subr.mxu0 %v272
    %406 = vmatpush1.msra.mxu0 %v271
    %407 = vmatprep.subr.mxu0 %v276
    %408 = vmatpush1.msra.mxu0 %v275
    %409 = vmatprep.subr.mxu0 %v280
    %410 = vmatpush1.msra.mxu0 %v279
    %411 = vmatprep.subr.mxu0 %v284
    %412 = vmatpush1.msra.mxu0 %v283
    %413 = vmatprep.subr.mxu0 %v288
    %414 = vmatpush1.msra.mxu0 %v287
    %415 = vmatprep.subr.mxu0 %v292
    %416 = vmatpush1.msra.mxu0 %v291
    %417 = vmatprep.subr.mxu0 %v296
    %418 = vmatpush1.msra.mxu0 %v295
    %419 = vmatprep.subr.mxu0 %v300
    %420 = vmatpush1.msra.mxu0 %v299
    %421 = vmatprep.subr.mxu0 %v304
    %422 = vmatpush1.msra.mxu0 %v303
    %423 = vmatprep.subr.mxu0 %v308
    %424 = vmatpush1.msra.mxu0 %v307
    %425 = vmatprep.subr.mxu0 %v312
    %426 = vmatpush1.msra.mxu0 %v311
    %427 = vmatprep.subr.mxu0 %v316
    %428 = vmatpush1.msra.mxu0 %v315
    %429 = vmatprep.subr.mxu0 %v320
    %430 = vmatpush1.msra.mxu0 %v319
    %431 = vmatprep.subr.mxu0 %v324
    %432 = vmatpush1.msra.mxu0 %v323
    %433 = vmatprep.subr.mxu0 %v328
    %434 = vmatpush1.msra.mxu0 %v327
    %435 = vmatprep.subr.mxu0 %v332
    %436 = vmatpush1.msra.mxu0 %v331
    %437 = vmatprep.subr.mxu0 %v336
    %438 = vmatpush1.msra.mxu0 %v335
    %439 = vmatprep.subr.mxu0 %v340
    %440 = vmatpush1.msra.mxu0 %v339
    %441 = vmatprep.subr.mxu0 %v344
    %442 = vmatpush1.msra.mxu0 %v343
    %443 = vmatprep.subr.mxu0 %v348
    %444 = vmatpush1.msra.mxu0 %v347
    %445 = vmatprep.subr.mxu0 %v352
    %446 = vmatpush1.msra.mxu0 %v351
    %447 = vmatprep.subr.mxu0 %v356
    %448 = vmatpush1.msra.mxu0 %v355
    %449 = vmatprep.subr.mxu0 %v360
    %450 = vmatpush1.msra.mxu0 %v359
    %451 = vmatprep.subr.mxu0 %v364
    %452 = vmatpush1.msra.mxu0 %v363
    %453 = vmatprep.mubr.f32.mxu0 %v238
    %454 = vmatmul.mubr.f32.gmra.mrb[0].mxu0 %v237
    %v455 = vpop.f32.mrb[0].mxu0
    %v456 = vadd.f32 %v372, %v455
    %v457 = vpop.f32.mrb[0].mxu0
    %v458 = vadd.f32 %v376, %v457
    %459 = vdwg.mxu0
    %460 = vmatprep.subr.mxu0 %v242
    %461 = vmatpush1.msra.mxu0 %v241
    %462 = vmatprep.subr.mxu0 %v246
    %463 = vmatpush1.msra.mxu0 %v245
    %464 = vmatprep.subr.mxu0 %v250
    %465 = vmatpush1.msra.mxu0 %v249
    %466 = vmatprep.subr.mxu0 %v254
    %467 = vmatpush1.msra.mxu0 %v253
    %468 = vmatprep.subr.mxu0 %v258
    %469 = vmatpush1.msra.mxu0 %v257
    %470 = vmatprep.subr.mxu0 %v262
    %471 = vmatpush1.msra.mxu0 %v261
    %472 = vmatprep.subr.mxu0 %v266
    %473 = vmatpush1.msra.mxu0 %v265
    %474 = vmatprep.subr.mxu0 %v270
    %475 = vmatpush1.msra.mxu0 %v269
    %476 = vmatprep.subr.mxu0 %v274
    %477 = vmatpush1.msra.mxu0 %v273
    %478 = vmatprep.subr.mxu0 %v278
    %479 = vmatpush1.msra.mxu0 %v277
    %480 = vmatprep.subr.mxu0 %v282
    %481 = vmatpush1.msra.mxu0 %v281
    %482 = vmatprep.subr.mxu0 %v286
    %483 = vmatpush1.msra.mxu0 %v285
    %484 = vmatprep.subr.mxu0 %v290
    %485 = vmatpush1.msra.mxu0 %v289
    %486 = vmatprep.subr.mxu0 %v294
    %487 = vmatpush1.msra.mxu0 %v293
    %488 = vmatprep.subr.mxu0 %v298
    %489 = vmatpush1.msra.mxu0 %v297
    %490 = vmatprep.subr.mxu0 %v302
    %491 = vmatpush1.msra.mxu0 %v301
    %492 = vmatprep.subr.mxu0 %v306
    %493 = vmatpush1.msra.mxu0 %v305
    %494 = vmatprep.subr.mxu0 %v310
    %495 = vmatpush1.msra.mxu0 %v309
    %496 = vmatprep.subr.mxu0 %v314
    %497 = vmatpush1.msra.mxu0 %v313
    %498 = vmatprep.subr.mxu0 %v318
    %499 = vmatpush1.msra.mxu0 %v317
    %500 = vmatprep.subr.mxu0 %v322
    %501 = vmatpush1.msra.mxu0 %v321
    %502 = vmatprep.subr.mxu0 %v326
    %503 = vmatpush1.msra.mxu0 %v325
    %504 = vmatprep.subr.mxu0 %v330
    %505 = vmatpush1.msra.mxu0 %v329
    %506 = vmatprep.subr.mxu0 %v334
    %507 = vmatpush1.msra.mxu0 %v333
    %508 = vmatprep.subr.mxu0 %v338
    %509 = vmatpush1.msra.mxu0 %v337
    %510 = vmatprep.subr.mxu0 %v342
    %511 = vmatpush1.msra.mxu0 %v341
    %512 = vmatprep.subr.mxu0 %v346
    %513 = vmatpush1.msra.mxu0 %v345
    %514 = vmatprep.subr.mxu0 %v350
    %515 = vmatpush1.msra.mxu0 %v349
    %516 = vmatprep.subr.mxu0 %v354
    %517 = vmatpush1.msra.mxu0 %v353
    %518 = vmatprep.subr.mxu0 %v358
    %519 = vmatpush1.msra.mxu0 %v357
    %520 = vmatprep.subr.mxu0 %v362
    %521 = vmatpush1.msra.mxu0 %v361
    %522 = vmatprep.subr.mxu0 %v366
    %523 = vmatpush1.msra.mxu0 %v365
    %524 = vmatprep.mubr.f32.mxu0 %v238
    %525 = vmatmul.mubr.f32.gmra.mrb[0].mxu0 %v237
    %v526 = vpop.f32.mrb[0].mxu0
    %v527 = vadd.f32 %v380, %v526
    %v528 = vpop.f32.mrb[0].mxu0
    %v529 = vadd.f32 %v384, %v528
    %530 = vdwg.mxu0
    %v531 = vmax.f32 %v456, 0.0
    %v532 = vmax.f32 %v458, 0.0
    %v533 = vmax.f32 %v527, 0.0
    %v534 = vmax.f32 %v529, 0.0
    %v535 = vld [vmem:[#allocation11] sm:$0xff]
    %v536 = vld [vmem:[#allocation11 + $0x8] sm:$0xff]
    %v537 = vld [vmem:[#allocation11 + $0x10] sm:$0xff]
    %v538 = vld [vmem:[#allocation11 + $0x18] sm:$0xff]
    %v539 = vld [vmem:[#allocation11 + $0x20] sm:$0xff]
    %v540 = vld [vmem:[#allocation11 + $0x28] sm:$0xff]
    %v541 = vld [vmem:[#allocation11 + $0x30] sm:$0xff]
    %v542 = vld [vmem:[#allocation11 + $0x38] sm:$0xff]
    %v543 = vld [vmem:[#allocation11 + $0x40] sm:$0xff]
    %v544 = vld [vmem:[#allocation11 + $0x48] sm:$0xff]
    %v545 = vld [vmem:[#allocation11 + $0x50] sm:$0xff]
    %v546 = vld [vmem:[#allocation11 + $0x58] sm:$0xff]
    %v547 = vld [vmem:[#allocation11 + $0x60] sm:$0xff]
    %v548 = vld [vmem:[#allocation11 + $0x68] sm:$0xff]
    %v549 = vld [vmem:[#allocation11 + $0x70] sm:$0xff]
    %v550 = vld [vmem:[#allocation11 + $0x78] sm:$0xff]
    %v551 = vld [vmem:[#allocation11 + $0x80] sm:$0xff]
    %v552 = vld [vmem:[#allocation11 + $0x88] sm:$0xff]
    %v553 = vld [vmem:[#allocation11 + $0x90] sm:$0xff]
    %v554 = vld [vmem:[#allocation11 + $0x98] sm:$0xff]
    %v555 = vld [vmem:[#allocation11 + $0xa0] sm:$0xff]
    %v556 = vld [vmem:[#allocation11 + $0xa8] sm:$0xff]
    %v557 = vld [vmem:[#allocation11 + $0xb0] sm:$0xff]
    %v558 = vld [vmem:[#allocation11 + $0xb8] sm:$0xff]
    %v559 = vld [vmem:[#allocation11 + $0xc0] sm:$0xff]
    %v560 = vld [vmem:[#allocation11 + $0xc8] sm:$0xff]
    %v561 = vld [vmem:[#allocation11 + $0xd0] sm:$0xff]
    %v562 = vld [vmem:[#allocation11 + $0xd8] sm:$0xff]
    %v563 = vld [vmem:[#allocation11 + $0xe0] sm:$0xff]
    %v564 = vld [vmem:[#allocation11 + $0xe8] sm:$0xff]
    %v565 = vld [vmem:[#allocation11 + $0xf0] sm:$0xff]
    %v566 = vld [vmem:[#allocation11 + $0xf8] sm:$0xff]
    %v567 = vld [vmem:[#allocation11 + $0x100] sm:$0xff]
    %v568 = vld [vmem:[#allocation11 + $0x108] sm:$0xff]
    %v569 = vld [vmem:[#allocation11 + $0x110] sm:$0xff]
    %v570 = vld [vmem:[#allocation11 + $0x118] sm:$0xff]
    %v571 = vld [vmem:[#allocation11 + $0x120] sm:$0xff]
    %v572 = vld [vmem:[#allocation11 + $0x128] sm:$0xff]
    %v573 = vld [vmem:[#allocation11 + $0x130] sm:$0xff]
    %v574 = vld [vmem:[#allocation11 + $0x138] sm:$0xff]
    %v575 = vld [vmem:[#allocation11 + $0x140] sm:$0xff]
    %v576 = vld [vmem:[#allocation11 + $0x148] sm:$0xff]
    %v577 = vld [vmem:[#allocation11 + $0x150] sm:$0xff]
    %v578 = vld [vmem:[#allocation11 + $0x158] sm:$0xff]
    %v579 = vld [vmem:[#allocation11 + $0x160] sm:$0xff]
    %v580 = vld [vmem:[#allocation11 + $0x168] sm:$0xff]
    %v581 = vld [vmem:[#allocation11 + $0x170] sm:$0xff]
    %v582 = vld [vmem:[#allocation11 + $0x178] sm:$0xff]
    %v583 = vld [vmem:[#allocation11 + $0x180] sm:$0xff]
    %v584 = vld [vmem:[#allocation11 + $0x188] sm:$0xff]
    %v585 = vld [vmem:[#allocation11 + $0x190] sm:$0xff]
    %v586 = vld [vmem:[#allocation11 + $0x198] sm:$0xff]
    %v587 = vld [vmem:[#allocation11 + $0x1a0] sm:$0xff]
    %v588 = vld [vmem:[#allocation11 + $0x1a8] sm:$0xff]
    %v589 = vld [vmem:[#allocation11 + $0x1b0] sm:$0xff]
    %v590 = vld [vmem:[#allocation11 + $0x1b8] sm:$0xff]
    %v591 = vld [vmem:[#allocation11 + $0x1c0] sm:$0xff]
    %v592 = vld [vmem:[#allocation11 + $0x1c8] sm:$0xff]
    %v593 = vld [vmem:[#allocation11 + $0x1d0] sm:$0xff]
    %v594 = vld [vmem:[#allocation11 + $0x1d8] sm:$0xff]
    %v595 = vld [vmem:[#allocation11 + $0x1e0] sm:$0xff]
    %v596 = vld [vmem:[#allocation11 + $0x1e8] sm:$0xff]
    %v597 = vld [vmem:[#allocation11 + $0x1f0] sm:$0xff]
    %v598 = vld [vmem:[#allocation11 + $0x1f8] sm:$0xff]
    %v599 = vld [vmem:[#allocation11 + $0x200] sm:$0xff]
    %v600 = vld [vmem:[#allocation11 + $0x208] sm:$0xff]
    %v601 = vld [vmem:[#allocation11 + $0x210] sm:$0xff]
    %v602 = vld [vmem:[#allocation11 + $0x218] sm:$0xff]
    %v603 = vld [vmem:[#allocation11 + $0x220] sm:$0xff]
    %v604 = vld [vmem:[#allocation11 + $0x228] sm:$0xff]
    %v605 = vld [vmem:[#allocation11 + $0x230] sm:$0xff]
    %v606 = vld [vmem:[#allocation11 + $0x238] sm:$0xff]
    %v607 = vld [vmem:[#allocation11 + $0x240] sm:$0xff]
    %v608 = vld [vmem:[#allocation11 + $0x248] sm:$0xff]
    %v609 = vld [vmem:[#allocation11 + $0x250] sm:$0xff]
    %v610 = vld [vmem:[#allocation11 + $0x258] sm:$0xff]
    %v611 = vld [vmem:[#allocation11 + $0x260] sm:$0xff]
    %v612 = vld [vmem:[#allocation11 + $0x268] sm:$0xff]
    %v613 = vld [vmem:[#allocation11 + $0x270] sm:$0xff]
    %v614 = vld [vmem:[#allocation11 + $0x278] sm:$0xff]
    %v615 = vld [vmem:[#allocation11 + $0x280] sm:$0xff]
    %v616 = vld [vmem:[#allocation11 + $0x288] sm:$0xff]
    %v617 = vld [vmem:[#allocation11 + $0x290] sm:$0xff]
    %v618 = vld [vmem:[#allocation11 + $0x298] sm:$0xff]
    %v619 = vld [vmem:[#allocation11 + $0x2a0] sm:$0xff]
    %v620 = vld [vmem:[#allocation11 + $0x2a8] sm:$0xff]
    %v621 = vld [vmem:[#allocation11 + $0x2b0] sm:$0xff]
    %v622 = vld [vmem:[#allocation11 + $0x2b8] sm:$0xff]
    %v623 = vld [vmem:[#allocation11 + $0x2c0] sm:$0xff]
    %v624 = vld [vmem:[#allocation11 + $0x2c8] sm:$0xff]
    %v625 = vld [vmem:[#allocation11 + $0x2d0] sm:$0xff]
    %v626 = vld [vmem:[#allocation11 + $0x2d8] sm:$0xff]
    %v627 = vld [vmem:[#allocation11 + $0x2e0] sm:$0xff]
    %v628 = vld [vmem:[#allocation11 + $0x2e8] sm:$0xff]
    %v629 = vld [vmem:[#allocation11 + $0x2f0] sm:$0xff]
    %v630 = vld [vmem:[#allocation11 + $0x2f8] sm:$0xff]
    %v631 = vld [vmem:[#allocation11 + $0x300] sm:$0xff]
    %v632 = vld [vmem:[#allocation11 + $0x308] sm:$0xff]
    %v633 = vld [vmem:[#allocation11 + $0x310] sm:$0xff]
    %v634 = vld [vmem:[#allocation11 + $0x318] sm:$0xff]
    %v635 = vld [vmem:[#allocation11 + $0x320] sm:$0xff]
    %v636 = vld [vmem:[#allocation11 + $0x328] sm:$0xff]
    %v637 = vld [vmem:[#allocation11 + $0x330] sm:$0xff]
    %v638 = vld [vmem:[#allocation11 + $0x338] sm:$0xff]
    %v639 = vld [vmem:[#allocation11 + $0x340] sm:$0xff]
    %v640 = vld [vmem:[#allocation11 + $0x348] sm:$0xff]
    %v641 = vld [vmem:[#allocation11 + $0x350] sm:$0xff]
    %v642 = vld [vmem:[#allocation11 + $0x358] sm:$0xff]
    %v643 = vld [vmem:[#allocation11 + $0x360] sm:$0xff]
    %v644 = vld [vmem:[#allocation11 + $0x368] sm:$0xff]
    %v645 = vld [vmem:[#allocation11 + $0x370] sm:$0xff]
    %v646 = vld [vmem:[#allocation11 + $0x378] sm:$0xff]
    %v647 = vld [vmem:[#allocation11 + $0x380] sm:$0xff]
    %v648 = vld [vmem:[#allocation11 + $0x388] sm:$0xff]
    %v649 = vld [vmem:[#allocation11 + $0x390] sm:$0xff]
    %v650 = vld [vmem:[#allocation11 + $0x398] sm:$0xff]
    %v651 = vld [vmem:[#allocation11 + $0x3a0] sm:$0xff]
    %v652 = vld [vmem:[#allocation11 + $0x3a8] sm:$0xff]
    %v653 = vld [vmem:[#allocation11 + $0x3b0] sm:$0xff]
    %v654 = vld [vmem:[#allocation11 + $0x3b8] sm:$0xff]
    %v655 = vld [vmem:[#allocation11 + $0x3c0] sm:$0xff]
    %v656 = vld [vmem:[#allocation11 + $0x3c8] sm:$0xff]
    %v657 = vld [vmem:[#allocation11 + $0x3d0] sm:$0xff]
    %v658 = vld [vmem:[#allocation11 + $0x3d8] sm:$0xff]
    %v659 = vld [vmem:[#allocation11 + $0x3e0] sm:$0xff]
    %v660 = vld [vmem:[#allocation11 + $0x3e8] sm:$0xff]
    %v661 = vld [vmem:[#allocation11 + $0x3f0] sm:$0xff]
    %v662 = vld [vmem:[#allocation11 + $0x3f8] sm:$0xff]
    %v663 = vld [vmem:[#allocation11 + $0x400] sm:$0xff]
    %v664 = vld [vmem:[#allocation11 + $0x408] sm:$0xff]
    %v665 = vld [vmem:[#allocation11 + $0x410] sm:$0xff]
    %v666 = vld [vmem:[#allocation11 + $0x418] sm:$0xff]
    %v667 = vld [vmem:[#allocation11 + $0x420] sm:$0xff]
    %v668 = vld [vmem:[#allocation11 + $0x428] sm:$0xff]
    %v669 = vld [vmem:[#allocation11 + $0x430] sm:$0xff]
    %v670 = vld [vmem:[#allocation11 + $0x438] sm:$0xff]
    %v671 = vld [vmem:[#allocation11 + $0x440] sm:$0xff]
    %v672 = vld [vmem:[#allocation11 + $0x448] sm:$0xff]
    %v673 = vld [vmem:[#allocation11 + $0x450] sm:$0xff]
    %v674 = vld [vmem:[#allocation11 + $0x458] sm:$0xff]
    %v675 = vld [vmem:[#allocation11 + $0x460] sm:$0xff]
    %v676 = vld [vmem:[#allocation11 + $0x468] sm:$0xff]
    %v677 = vld [vmem:[#allocation11 + $0x470] sm:$0xff]
    %v678 = vld [vmem:[#allocation11 + $0x478] sm:$0xff]
    %v679 = vld [vmem:[#allocation11 + $0x480] sm:$0xff]
    %v680 = vld [vmem:[#allocation11 + $0x488] sm:$0xff]
    %v681 = vld [vmem:[#allocation11 + $0x490] sm:$0xff]
    %v682 = vld [vmem:[#allocation11 + $0x498] sm:$0xff]
    %v683 = vld [vmem:[#allocation11 + $0x4a0] sm:$0xff]
    %v684 = vld [vmem:[#allocation11 + $0x4a8] sm:$0xff]
    %v685 = vld [vmem:[#allocation11 + $0x4b0] sm:$0xff]
    %v686 = vld [vmem:[#allocation11 + $0x4b8] sm:$0xff]
    %v687 = vld [vmem:[#allocation11 + $0x4c0] sm:$0xff]
    %v688 = vld [vmem:[#allocation11 + $0x4c8] sm:$0xff]
    %v689 = vld [vmem:[#allocation11 + $0x4d0] sm:$0xff]
    %v690 = vld [vmem:[#allocation11 + $0x4d8] sm:$0xff]
    %v691 = vld [vmem:[#allocation11 + $0x4e0] sm:$0xff]
    %v692 = vld [vmem:[#allocation11 + $0x4e8] sm:$0xff]
    %v693 = vld [vmem:[#allocation11 + $0x4f0] sm:$0xff]
    %v694 = vld [vmem:[#allocation11 + $0x4f8] sm:$0xff]
    %v695 = vld [vmem:[#allocation11 + $0x500] sm:$0xff]
    %v696 = vld [vmem:[#allocation11 + $0x508] sm:$0xff]
    %v697 = vld [vmem:[#allocation11 + $0x510] sm:$0xff]
    %v698 = vld [vmem:[#allocation11 + $0x518] sm:$0xff]
    %v699 = vld [vmem:[#allocation11 + $0x520] sm:$0xff]
    %v700 = vld [vmem:[#allocation11 + $0x528] sm:$0xff]
    %v701 = vld [vmem:[#allocation11 + $0x530] sm:$0xff]
    %v702 = vld [vmem:[#allocation11 + $0x538] sm:$0xff]
    %v703 = vld [vmem:[#allocation11 + $0x540] sm:$0xff]
    %v704 = vld [vmem:[#allocation11 + $0x548] sm:$0xff]
    %v705 = vld [vmem:[#allocation11 + $0x550] sm:$0xff]
    %v706 = vld [vmem:[#allocation11 + $0x558] sm:$0xff]
    %v707 = vld [vmem:[#allocation11 + $0x560] sm:$0xff]
    %v708 = vld [vmem:[#allocation11 + $0x568] sm:$0xff]
    %v709 = vld [vmem:[#allocation11 + $0x570] sm:$0xff]
    %v710 = vld [vmem:[#allocation11 + $0x578] sm:$0xff]
    %v711 = vld [vmem:[#allocation11 + $0x580] sm:$0xff]
    %v712 = vld [vmem:[#allocation11 + $0x588] sm:$0xff]
    %v713 = vld [vmem:[#allocation11 + $0x590] sm:$0xff]
    %v714 = vld [vmem:[#allocation11 + $0x598] sm:$0xff]
    %v715 = vld [vmem:[#allocation11 + $0x5a0] sm:$0xff]
    %v716 = vld [vmem:[#allocation11 + $0x5a8] sm:$0xff]
    %v717 = vld [vmem:[#allocation11 + $0x5b0] sm:$0xff]
    %v718 = vld [vmem:[#allocation11 + $0x5b8] sm:$0xff]
    %v719 = vld [vmem:[#allocation11 + $0x5c0] sm:$0xff]
    %v720 = vld [vmem:[#allocation11 + $0x5c8] sm:$0xff]
    %v721 = vld [vmem:[#allocation11 + $0x5d0] sm:$0xff]
    %v722 = vld [vmem:[#allocation11 + $0x5d8] sm:$0xff]
    %v723 = vld [vmem:[#allocation11 + $0x5e0] sm:$0xff]
    %v724 = vld [vmem:[#allocation11 + $0x5e8] sm:$0xff]
    %v725 = vld [vmem:[#allocation11 + $0x5f0] sm:$0xff]
    %v726 = vld [vmem:[#allocation11 + $0x5f8] sm:$0xff]
    %v727 = vld [vmem:[#allocation11 + $0x600] sm:$0xff]
    %v728 = vld [vmem:[#allocation11 + $0x608] sm:$0xff]
    %v729 = vld [vmem:[#allocation11 + $0x610] sm:$0xff]
    %v730 = vld [vmem:[#allocation11 + $0x618] sm:$0xff]
    %v731 = vld [vmem:[#allocation11 + $0x620] sm:$0xff]
    %v732 = vld [vmem:[#allocation11 + $0x628] sm:$0xff]
    %v733 = vld [vmem:[#allocation11 + $0x630] sm:$0xff]
    %v734 = vld [vmem:[#allocation11 + $0x638] sm:$0xff]
    %v735 = vld [vmem:[#allocation11 + $0x640] sm:$0xff]
    %v736 = vld [vmem:[#allocation11 + $0x648] sm:$0xff]
    %v737 = vld [vmem:[#allocation11 + $0x650] sm:$0xff]
    %v738 = vld [vmem:[#allocation11 + $0x658] sm:$0xff]
    %v739 = vld [vmem:[#allocation11 + $0x660] sm:$0xff]
    %v740 = vld [vmem:[#allocation11 + $0x668] sm:$0xff]
    %v741 = vld [vmem:[#allocation11 + $0x670] sm:$0xff]
    %v742 = vld [vmem:[#allocation11 + $0x678] sm:$0xff]
    %v743 = vld [vmem:[#allocation11 + $0x680] sm:$0xff]
    %v744 = vld [vmem:[#allocation11 + $0x688] sm:$0xff]
    %v745 = vld [vmem:[#allocation11 + $0x690] sm:$0xff]
    %v746 = vld [vmem:[#allocation11 + $0x698] sm:$0xff]
    %v747 = vld [vmem:[#allocation11 + $0x6a0] sm:$0xff]
    %v748 = vld [vmem:[#allocation11 + $0x6a8] sm:$0xff]
    %v749 = vld [vmem:[#allocation11 + $0x6b0] sm:$0xff]
    %v750 = vld [vmem:[#allocation11 + $0x6b8] sm:$0xff]
    %v751 = vld [vmem:[#allocation11 + $0x6c0] sm:$0xff]
    %v752 = vld [vmem:[#allocation11 + $0x6c8] sm:$0xff]
    %v753 = vld [vmem:[#allocation11 + $0x6d0] sm:$0xff]
    %v754 = vld [vmem:[#allocation11 + $0x6d8] sm:$0xff]
    %v755 = vld [vmem:[#allocation11 + $0x6e0] sm:$0xff]
    %v756 = vld [vmem:[#allocation11 + $0x6e8] sm:$0xff]
    %v757 = vld [vmem:[#allocation11 + $0x6f0] sm:$0xff]
    %v758 = vld [vmem:[#allocation11 + $0x6f8] sm:$0xff]
    %v759 = vld [vmem:[#allocation11 + $0x700] sm:$0xff]
    %v760 = vld [vmem:[#allocation11 + $0x708] sm:$0xff]
    %v761 = vld [vmem:[#allocation11 + $0x710] sm:$0xff]
    %v762 = vld [vmem:[#allocation11 + $0x718] sm:$0xff]
    %v763 = vld [vmem:[#allocation11 + $0x720] sm:$0xff]
    %v764 = vld [vmem:[#allocation11 + $0x728] sm:$0xff]
    %v765 = vld [vmem:[#allocation11 + $0x730] sm:$0xff]
    %v766 = vld [vmem:[#allocation11 + $0x738] sm:$0xff]
    %v767 = vld [vmem:[#allocation11 + $0x740] sm:$0xff]
    %v768 = vld [vmem:[#allocation11 + $0x748] sm:$0xff]
    %v769 = vld [vmem:[#allocation11 + $0x750] sm:$0xff]
    %v770 = vld [vmem:[#allocation11 + $0x758] sm:$0xff]
    %v771 = vld [vmem:[#allocation11 + $0x760] sm:$0xff]
    %v772 = vld [vmem:[#allocation11 + $0x768] sm:$0xff]
    %v773 = vld [vmem:[#allocation11 + $0x770] sm:$0xff]
    %v774 = vld [vmem:[#allocation11 + $0x778] sm:$0xff]
    %v775 = vld [vmem:[#allocation11 + $0x780] sm:$0xff]
    %v776 = vld [vmem:[#allocation11 + $0x788] sm:$0xff]
    %v777 = vld [vmem:[#allocation11 + $0x790] sm:$0xff]
    %v778 = vld [vmem:[#allocation11 + $0x798] sm:$0xff]
    %v779 = vld [vmem:[#allocation11 + $0x7a0] sm:$0xff]
    %v780 = vld [vmem:[#allocation11 + $0x7a8] sm:$0xff]
    %v781 = vld [vmem:[#allocation11 + $0x7b0] sm:$0xff]
    %v782 = vld [vmem:[#allocation11 + $0x7b8] sm:$0xff]
    %v783 = vld [vmem:[#allocation11 + $0x7c0] sm:$0xff]
    %v784 = vld [vmem:[#allocation11 + $0x7c8] sm:$0xff]
    %v785 = vld [vmem:[#allocation11 + $0x7d0] sm:$0xff]
    %v786 = vld [vmem:[#allocation11 + $0x7d8] sm:$0xff]
    %v787 = vld [vmem:[#allocation11 + $0x7e0] sm:$0xff]
    %v788 = vld [vmem:[#allocation11 + $0x7e8] sm:$0xff]
    %v789 = vld [vmem:[#allocation11 + $0x7f0] sm:$0xff]
    %v790 = vld [vmem:[#allocation11 + $0x7f8] sm:$0xff]
    %v791 = vld [vmem:[#allocation11 + $0x800] sm:$0xff]
    %v792 = vld [vmem:[#allocation11 + $0x808] sm:$0xff]
    %v793 = vld [vmem:[#allocation11 + $0x810] sm:$0xff]
    %v794 = vld [vmem:[#allocation11 + $0x818] sm:$0xff]
    %v795 = vld [vmem:[#allocation11 + $0x820] sm:$0xff]
    %v796 = vld [vmem:[#allocation11 + $0x828] sm:$0xff]
    %v797 = vld [vmem:[#allocation11 + $0x830] sm:$0xff]
    %v798 = vld [vmem:[#allocation11 + $0x838] sm:$0xff]
    %v799 = vld [vmem:[#allocation11 + $0x840] sm:$0xff]
    %v800 = vld [vmem:[#allocation11 + $0x848] sm:$0xff]
    %v801 = vld [vmem:[#allocation11 + $0x850] sm:$0xff]
    %v802 = vld [vmem:[#allocation11 + $0x858] sm:$0xff]
    %v803 = vld [vmem:[#allocation11 + $0x860] sm:$0xff]
    %v804 = vld [vmem:[#allocation11 + $0x868] sm:$0xff]
    %v805 = vld [vmem:[#allocation11 + $0x870] sm:$0xff]
    %v806 = vld [vmem:[#allocation11 + $0x878] sm:$0xff]
    %v807 = vld [vmem:[#allocation11 + $0x880] sm:$0xff]
    %v808 = vld [vmem:[#allocation11 + $0x888] sm:$0xff]
    %v809 = vld [vmem:[#allocation11 + $0x890] sm:$0xff]
    %v810 = vld [vmem:[#allocation11 + $0x898] sm:$0xff]
    %v811 = vld [vmem:[#allocation11 + $0x8a0] sm:$0xff]
    %v812 = vld [vmem:[#allocation11 + $0x8a8] sm:$0xff]
    %v813 = vld [vmem:[#allocation11 + $0x8b0] sm:$0xff]
    %v814 = vld [vmem:[#allocation11 + $0x8b8] sm:$0xff]
    %v815 = vld [vmem:[#allocation11 + $0x8c0] sm:$0xff]
    %v816 = vld [vmem:[#allocation11 + $0x8c8] sm:$0xff]
    %v817 = vld [vmem:[#allocation11 + $0x8d0] sm:$0xff]
    %v818 = vld [vmem:[#allocation11 + $0x8d8] sm:$0xff]
    %v819 = vld [vmem:[#allocation11 + $0x8e0] sm:$0xff]
    %v820 = vld [vmem:[#allocation11 + $0x8e8] sm:$0xff]
    %v821 = vld [vmem:[#allocation11 + $0x8f0] sm:$0xff]
    %v822 = vld [vmem:[#allocation11 + $0x8f8] sm:$0xff]
    %v823 = vld [vmem:[#allocation11 + $0x900] sm:$0xff]
    %v824 = vld [vmem:[#allocation11 + $0x908] sm:$0xff]
    %v825 = vld [vmem:[#allocation11 + $0x910] sm:$0xff]
    %v826 = vld [vmem:[#allocation11 + $0x918] sm:$0xff]
    %v827 = vld [vmem:[#allocation11 + $0x920] sm:$0xff]
    %v828 = vld [vmem:[#allocation11 + $0x928] sm:$0xff]
    %v829 = vld [vmem:[#allocation11 + $0x930] sm:$0xff]
    %v830 = vld [vmem:[#allocation11 + $0x938] sm:$0xff]
    %v831 = vld [vmem:[#allocation11 + $0x940] sm:$0xff]
    %v832 = vld [vmem:[#allocation11 + $0x948] sm:$0xff]
    %v833 = vld [vmem:[#allocation11 + $0x950] sm:$0xff]
    %v834 = vld [vmem:[#allocation11 + $0x958] sm:$0xff]
    %v835 = vld [vmem:[#allocation11 + $0x960] sm:$0xff]
    %v836 = vld [vmem:[#allocation11 + $0x968] sm:$0xff]
    %v837 = vld [vmem:[#allocation11 + $0x970] sm:$0xff]
    %v838 = vld [vmem:[#allocation11 + $0x978] sm:$0xff]
    %v839 = vld [vmem:[#allocation11 + $0x980] sm:$0xff]
    %v840 = vld [vmem:[#allocation11 + $0x988] sm:$0xff]
    %v841 = vld [vmem:[#allocation11 + $0x990] sm:$0xff]
    %v842 = vld [vmem:[#allocation11 + $0x998] sm:$0xff]
    %v843 = vld [vmem:[#allocation11 + $0x9a0] sm:$0xff]
    %v844 = vld [vmem:[#allocation11 + $0x9a8] sm:$0xff]
    %v845 = vld [vmem:[#allocation11 + $0x9b0] sm:$0xff]
    %v846 = vld [vmem:[#allocation11 + $0x9b8] sm:$0xff]
    %v847 = vld [vmem:[#allocation11 + $0x9c0] sm:$0xff]
    %v848 = vld [vmem:[#allocation11 + $0x9c8] sm:$0xff]
    %v849 = vld [vmem:[#allocation11 + $0x9d0] sm:$0xff]
    %v850 = vld [vmem:[#allocation11 + $0x9d8] sm:$0xff]
    %v851 = vld [vmem:[#allocation11 + $0x9e0] sm:$0xff]
    %v852 = vld [vmem:[#allocation11 + $0x9e8] sm:$0xff]
    %v853 = vld [vmem:[#allocation11 + $0x9f0] sm:$0xff]
    %v854 = vld [vmem:[#allocation11 + $0x9f8] sm:$0xff]
    %v855 = vld [vmem:[#allocation11 + $0xa00] sm:$0xff]
    %v856 = vld [vmem:[#allocation11 + $0xa08] sm:$0xff]
    %v857 = vld [vmem:[#allocation11 + $0xa10] sm:$0xff]
    %v858 = vld [vmem:[#allocation11 + $0xa18] sm:$0xff]
    %v859 = vld [vmem:[#allocation11 + $0xa20] sm:$0xff]
    %v860 = vld [vmem:[#allocation11 + $0xa28] sm:$0xff]
    %v861 = vld [vmem:[#allocation11 + $0xa30] sm:$0xff]
    %v862 = vld [vmem:[#allocation11 + $0xa38] sm:$0xff]
    %v863 = vld [vmem:[#allocation11 + $0xa40] sm:$0xff]
    %v864 = vld [vmem:[#allocation11 + $0xa48] sm:$0xff]
    %v865 = vld [vmem:[#allocation11 + $0xa50] sm:$0xff]
    %v866 = vld [vmem:[#allocation11 + $0xa58] sm:$0xff]
    %v867 = vld [vmem:[#allocation11 + $0xa60] sm:$0xff]
    %v868 = vld [vmem:[#allocation11 + $0xa68] sm:$0xff]
    %v869 = vld [vmem:[#allocation11 + $0xa70] sm:$0xff]
    %v870 = vld [vmem:[#allocation11 + $0xa78] sm:$0xff]
    %v871 = vld [vmem:[#allocation11 + $0xa80] sm:$0xff]
    %v872 = vld [vmem:[#allocation11 + $0xa88] sm:$0xff]
    %v873 = vld [vmem:[#allocation11 + $0xa90] sm:$0xff]
    %v874 = vld [vmem:[#allocation11 + $0xa98] sm:$0xff]
    %v875 = vld [vmem:[#allocation11 + $0xaa0] sm:$0xff]
    %v876 = vld [vmem:[#allocation11 + $0xaa8] sm:$0xff]
    %v877 = vld [vmem:[#allocation11 + $0xab0] sm:$0xff]
    %v878 = vld [vmem:[#allocation11 + $0xab8] sm:$0xff]
    %v879 = vld [vmem:[#allocation11 + $0xac0] sm:$0xff]
    %v880 = vld [vmem:[#allocation11 + $0xac8] sm:$0xff]
    %v881 = vld [vmem:[#allocation11 + $0xad0] sm:$0xff]
    %v882 = vld [vmem:[#allocation11 + $0xad8] sm:$0xff]
    %v883 = vld [vmem:[#allocation11 + $0xae0] sm:$0xff]
    %v884 = vld [vmem:[#allocation11 + $0xae8] sm:$0xff]
    %v885 = vld [vmem:[#allocation11 + $0xaf0] sm:$0xff]
    %v886 = vld [vmem:[#allocation11 + $0xaf8] sm:$0xff]
    %v887 = vld [vmem:[#allocation11 + $0xb00] sm:$0xff]
    %v888 = vld [vmem:[#allocation11 + $0xb08] sm:$0xff]
    %v889 = vld [vmem:[#allocation11 + $0xb10] sm:$0xff]
    %v890 = vld [vmem:[#allocation11 + $0xb18] sm:$0xff]
    %v891 = vld [vmem:[#allocation11 + $0xb20] sm:$0xff]
    %v892 = vld [vmem:[#allocation11 + $0xb28] sm:$0xff]
    %v893 = vld [vmem:[#allocation11 + $0xb30] sm:$0xff]
    %v894 = vld [vmem:[#allocation11 + $0xb38] sm:$0xff]
    %v895 = vld [vmem:[#allocation11 + $0xb40] sm:$0xff]
    %v896 = vld [vmem:[#allocation11 + $0xb48] sm:$0xff]
    %v897 = vld [vmem:[#allocation11 + $0xb50] sm:$0xff]
    %v898 = vld [vmem:[#allocation11 + $0xb58] sm:$0xff]
    %v899 = vld [vmem:[#allocation11 + $0xb60] sm:$0xff]
    %v900 = vld [vmem:[#allocation11 + $0xb68] sm:$0xff]
    %v901 = vld [vmem:[#allocation11 + $0xb70] sm:$0xff]
    %v902 = vld [vmem:[#allocation11 + $0xb78] sm:$0xff]
    %v903 = vld [vmem:[#allocation11 + $0xb80] sm:$0xff]
    %v904 = vld [vmem:[#allocation11 + $0xb88] sm:$0xff]
    %v905 = vld [vmem:[#allocation11 + $0xb90] sm:$0xff]
    %v906 = vld [vmem:[#allocation11 + $0xb98] sm:$0xff]
    %v907 = vld [vmem:[#allocation11 + $0xba0] sm:$0xff]
    %v908 = vld [vmem:[#allocation11 + $0xba8] sm:$0xff]
    %v909 = vld [vmem:[#allocation11 + $0xbb0] sm:$0xff]
    %v910 = vld [vmem:[#allocation11 + $0xbb8] sm:$0xff]
    %v911 = vld [vmem:[#allocation11 + $0xbc0] sm:$0xff]
    %v912 = vld [vmem:[#allocation11 + $0xbc8] sm:$0xff]
    %v913 = vld [vmem:[#allocation11 + $0xbd0] sm:$0xff]
    %v914 = vld [vmem:[#allocation11 + $0xbd8] sm:$0xff]
    %v915 = vld [vmem:[#allocation11 + $0xbe0] sm:$0xff]
    %v916 = vld [vmem:[#allocation11 + $0xbe8] sm:$0xff]
    %v917 = vld [vmem:[#allocation11 + $0xbf0] sm:$0xff]
    %v918 = vld [vmem:[#allocation11 + $0xbf8] sm:$0xff]
    %v919 = vld [vmem:[#allocation11 + $0xc00] sm:$0xff]
    %v920 = vld [vmem:[#allocation11 + $0xc08] sm:$0xff]
    %v921 = vld [vmem:[#allocation11 + $0xc10] sm:$0xff]
    %v922 = vld [vmem:[#allocation11 + $0xc18] sm:$0xff]
    %v923 = vld [vmem:[#allocation11 + $0xc20] sm:$0xff]
    %v924 = vld [vmem:[#allocation11 + $0xc28] sm:$0xff]
    %v925 = vld [vmem:[#allocation11 + $0xc30] sm:$0xff]
    %v926 = vld [vmem:[#allocation11 + $0xc38] sm:$0xff]
    %v927 = vld [vmem:[#allocation11 + $0xc40] sm:$0xff]
    %v928 = vld [vmem:[#allocation11 + $0xc48] sm:$0xff]
    %v929 = vld [vmem:[#allocation11 + $0xc50] sm:$0xff]
    %v930 = vld [vmem:[#allocation11 + $0xc58] sm:$0xff]
    %v931 = vld [vmem:[#allocation11 + $0xc60] sm:$0xff]
    %v932 = vld [vmem:[#allocation11 + $0xc68] sm:$0xff]
    %v933 = vld [vmem:[#allocation11 + $0xc70] sm:$0xff]
    %v934 = vld [vmem:[#allocation11 + $0xc78] sm:$0xff]
    %v935 = vld [vmem:[#allocation11 + $0xc80] sm:$0xff]
    %v936 = vld [vmem:[#allocation11 + $0xc88] sm:$0xff]
    %v937 = vld [vmem:[#allocation11 + $0xc90] sm:$0xff]
    %v938 = vld [vmem:[#allocation11 + $0xc98] sm:$0xff]
    %v939 = vld [vmem:[#allocation11 + $0xca0] sm:$0xff]
    %v940 = vld [vmem:[#allocation11 + $0xca8] sm:$0xff]
    %v941 = vld [vmem:[#allocation11 + $0xcb0] sm:$0xff]
    %v942 = vld [vmem:[#allocation11 + $0xcb8] sm:$0xff]
    %v943 = vld [vmem:[#allocation11 + $0xcc0] sm:$0xff]
    %v944 = vld [vmem:[#allocation11 + $0xcc8] sm:$0xff]
    %v945 = vld [vmem:[#allocation11 + $0xcd0] sm:$0xff]
    %v946 = vld [vmem:[#allocation11 + $0xcd8] sm:$0xff]
    %v947 = vld [vmem:[#allocation11 + $0xce0] sm:$0xff]
    %v948 = vld [vmem:[#allocation11 + $0xce8] sm:$0xff]
    %v949 = vld [vmem:[#allocation11 + $0xcf0] sm:$0xff]
    %v950 = vld [vmem:[#allocation11 + $0xcf8] sm:$0xff]
    %v951 = vld [vmem:[#allocation11 + $0xd00] sm:$0xff]
    %v952 = vld [vmem:[#allocation11 + $0xd08] sm:$0xff]
    %v953 = vld [vmem:[#allocation11 + $0xd10] sm:$0xff]
    %v954 = vld [vmem:[#allocation11 + $0xd18] sm:$0xff]
    %v955 = vld [vmem:[#allocation11 + $0xd20] sm:$0xff]
    %v956 = vld [vmem:[#allocation11 + $0xd28] sm:$0xff]
    %v957 = vld [vmem:[#allocation11 + $0xd30] sm:$0xff]
    %v958 = vld [vmem:[#allocation11 + $0xd38] sm:$0xff]
    %v959 = vld [vmem:[#allocation11 + $0xd40] sm:$0xff]
    %v960 = vld [vmem:[#allocation11 + $0xd48] sm:$0xff]
    %v961 = vld [vmem:[#allocation11 + $0xd50] sm:$0xff]
    %v962 = vld [vmem:[#allocation11 + $0xd58] sm:$0xff]
    %v963 = vld [vmem:[#allocation11 + $0xd60] sm:$0xff]
    %v964 = vld [vmem:[#allocation11 + $0xd68] sm:$0xff]
    %v965 = vld [vmem:[#allocation11 + $0xd70] sm:$0xff]
    %v966 = vld [vmem:[#allocation11 + $0xd78] sm:$0xff]
    %v967 = vld [vmem:[#allocation11 + $0xd80] sm:$0xff]
    %v968 = vld [vmem:[#allocation11 + $0xd88] sm:$0xff]
    %v969 = vld [vmem:[#allocation11 + $0xd90] sm:$0xff]
    %v970 = vld [vmem:[#allocation11 + $0xd98] sm:$0xff]
    %v971 = vld [vmem:[#allocation11 + $0xda0] sm:$0xff]
    %v972 = vld [vmem:[#allocation11 + $0xda8] sm:$0xff]
    %v973 = vld [vmem:[#allocation11 + $0xdb0] sm:$0xff]
    %v974 = vld [vmem:[#allocation11 + $0xdb8] sm:$0xff]
    %v975 = vld [vmem:[#allocation11 + $0xdc0] sm:$0xff]
    %v976 = vld [vmem:[#allocation11 + $0xdc8] sm:$0xff]
    %v977 = vld [vmem:[#allocation11 + $0xdd0] sm:$0xff]
    %v978 = vld [vmem:[#allocation11 + $0xdd8] sm:$0xff]
    %v979 = vld [vmem:[#allocation11 + $0xde0] sm:$0xff]
    %v980 = vld [vmem:[#allocation11 + $0xde8] sm:$0xff]
    %v981 = vld [vmem:[#allocation11 + $0xdf0] sm:$0xff]
    %v982 = vld [vmem:[#allocation11 + $0xdf8] sm:$0xff]
    %v983 = vld [vmem:[#allocation11 + $0xe00] sm:$0xff]
    %v984 = vld [vmem:[#allocation11 + $0xe08] sm:$0xff]
    %v985 = vld [vmem:[#allocation11 + $0xe10] sm:$0xff]
    %v986 = vld [vmem:[#allocation11 + $0xe18] sm:$0xff]
    %v987 = vld [vmem:[#allocation11 + $0xe20] sm:$0xff]
    %v988 = vld [vmem:[#allocation11 + $0xe28] sm:$0xff]
    %v989 = vld [vmem:[#allocation11 + $0xe30] sm:$0xff]
    %v990 = vld [vmem:[#allocation11 + $0xe38] sm:$0xff]
    %v991 = vld [vmem:[#allocation11 + $0xe40] sm:$0xff]
    %v992 = vld [vmem:[#allocation11 + $0xe48] sm:$0xff]
    %v993 = vld [vmem:[#allocation11 + $0xe50] sm:$0xff]
    %v994 = vld [vmem:[#allocation11 + $0xe58] sm:$0xff]
    %v995 = vld [vmem:[#allocation11 + $0xe60] sm:$0xff]
    %v996 = vld [vmem:[#allocation11 + $0xe68] sm:$0xff]
    %v997 = vld [vmem:[#allocation11 + $0xe70] sm:$0xff]
    %v998 = vld [vmem:[#allocation11 + $0xe78] sm:$0xff]
    %v999 = vld [vmem:[#allocation11 + $0xe80] sm:$0xff]
    %v1000 = vld [vmem:[#allocation11 + $0xe88] sm:$0xff]
    %v1001 = vld [vmem:[#allocation11 + $0xe90] sm:$0xff]
    %v1002 = vld [vmem:[#allocation11 + $0xe98] sm:$0xff]
    %v1003 = vld [vmem:[#allocation11 + $0xea0] sm:$0xff]
    %v1004 = vld [vmem:[#allocation11 + $0xea8] sm:$0xff]
    %v1005 = vld [vmem:[#allocation11 + $0xeb0] sm:$0xff]
    %v1006 = vld [vmem:[#allocation11 + $0xeb8] sm:$0xff]
    %v1007 = vld [vmem:[#allocation11 + $0xec0] sm:$0xff]
    %v1008 = vld [vmem:[#allocation11 + $0xec8] sm:$0xff]
    %v1009 = vld [vmem:[#allocation11 + $0xed0] sm:$0xff]
    %v1010 = vld [vmem:[#allocation11 + $0xed8] sm:$0xff]
    %v1011 = vld [vmem:[#allocation11 + $0xee0] sm:$0xff]
    %v1012 = vld [vmem:[#allocation11 + $0xee8] sm:$0xff]
    %v1013 = vld [vmem:[#allocation11 + $0xef0] sm:$0xff]
    %v1014 = vld [vmem:[#allocation11 + $0xef8] sm:$0xff]
    %v1015 = vld [vmem:[#allocation11 + $0xf00] sm:$0xff]
    %v1016 = vld [vmem:[#allocation11 + $0xf08] sm:$0xff]
    %v1017 = vld [vmem:[#allocation11 + $0xf10] sm:$0xff]
    %v1018 = vld [vmem:[#allocation11 + $0xf18] sm:$0xff]
    %v1019 = vld [vmem:[#allocation11 + $0xf20] sm:$0xff]
    %v1020 = vld [vmem:[#allocation11 + $0xf28] sm:$0xff]
    %v1021 = vld [vmem:[#allocation11 + $0xf30] sm:$0xff]
    %v1022 = vld [vmem:[#allocation11 + $0xf38] sm:$0xff]
    %v1023 = vld [vmem:[#allocation11 + $0xf40] sm:$0xff]
    %v1024 = vld [vmem:[#allocation11 + $0xf48] sm:$0xff]
    %v1025 = vld [vmem:[#allocation11 + $0xf50] sm:$0xff]
    %v1026 = vld [vmem:[#allocation11 + $0xf58] sm:$0xff]
    %v1027 = vld [vmem:[#allocation11 + $0xf60] sm:$0xff]
    %v1028 = vld [vmem:[#allocation11 + $0xf68] sm:$0xff]
    %v1029 = vld [vmem:[#allocation11 + $0xf70] sm:$0xff]
    %v1030 = vld [vmem:[#allocation11 + $0xf78] sm:$0xff]
    %v1031 = vld [vmem:[#allocation11 + $0xf80] sm:$0xff]
    %v1032 = vld [vmem:[#allocation11 + $0xf88] sm:$0xff]
    %v1033 = vld [vmem:[#allocation11 + $0xf90] sm:$0xff]
    %v1034 = vld [vmem:[#allocation11 + $0xf98] sm:$0xff]
    %v1035 = vld [vmem:[#allocation11 + $0xfa0] sm:$0xff]
    %v1036 = vld [vmem:[#allocation11 + $0xfa8] sm:$0xff]
    %v1037 = vld [vmem:[#allocation11 + $0xfb0] sm:$0xff]
    %v1038 = vld [vmem:[#allocation11 + $0xfb8] sm:$0xff]
    %v1039 = vld [vmem:[#allocation11 + $0xfc0] sm:$0xff]
    %v1040 = vld [vmem:[#allocation11 + $0xfc8] sm:$0xff]
    %v1041 = vld [vmem:[#allocation11 + $0xfd0] sm:$0xff]
    %v1042 = vld [vmem:[#allocation11 + $0xfd8] sm:$0xff]
    %v1043 = vld [vmem:[#allocation11 + $0xfe0] sm:$0xff]
    %v1044 = vld [vmem:[#allocation11 + $0xfe8] sm:$0xff]
    %v1045 = vld [vmem:[#allocation11 + $0xff0] sm:$0xff]
    %v1046 = vld [vmem:[#allocation11 + $0xff8] sm:$0xff]
    %v1047 = vld [vmem:[#allocation13] sm:$0xff]
    %v1049 = vlaneseq
    %v1050 = vshrl.u32 %v1049, 7
    %v1051 = vsub.s32 0, %v1050
    %v1052 = vrot.slane %v1047, %v1051
    %v1053 = vlaneseq
    %v1054 = vshrl.u32 %v1053, 7
    %v1055 = vsub.s32 1, %v1054
    %v1056 = vrot.slane %v1047, %v1055
    %v1057 = vlaneseq
    %v1058 = vshrl.u32 %v1057, 7
    %v1059 = vsub.s32 2, %v1058
    %v1060 = vrot.slane %v1047, %v1059
    %v1061 = vlaneseq
    %v1062 = vshrl.u32 %v1061, 7
    %v1063 = vsub.s32 3, %v1062
    %v1064 = vrot.slane %v1047, %v1063
    %v1065 = vlaneseq
    %v1066 = vshrl.u32 %v1065, 7
    %v1067 = vsub.s32 4, %v1066
    %v1068 = vrot.slane %v1047, %v1067
    %v1069 = vlaneseq
    %v1070 = vshrl.u32 %v1069, 7
    %v1071 = vsub.s32 5, %v1070
    %v1072 = vrot.slane %v1047, %v1071
    %v1073 = vlaneseq
    %v1074 = vshrl.u32 %v1073, 7
    %v1075 = vsub.s32 6, %v1074
    %v1076 = vrot.slane %v1047, %v1075
    %v1077 = vlaneseq
    %v1078 = vshrl.u32 %v1077, 7
    %v1079 = vsub.s32 7, %v1078
    %v1080 = vrot.slane %v1047, %v1079
    %1089 = vmatprep.subr.mxu0 %v536
    %1090 = vmatpush1.msra.mxu0 %v535
    %1091 = vmatprep.subr.mxu0 %v544
    %1092 = vmatpush1.msra.mxu0 %v543
    %1093 = vmatprep.subr.mxu0 %v552
    %1094 = vmatpush1.msra.mxu0 %v551
    %1095 = vmatprep.subr.mxu0 %v560
    %1096 = vmatpush1.msra.mxu0 %v559
    %1097 = vmatprep.subr.mxu0 %v568
    %1098 = vmatpush1.msra.mxu0 %v567
    %1099 = vmatprep.subr.mxu0 %v576
    %1100 = vmatpush1.msra.mxu0 %v575
    %1101 = vmatprep.subr.mxu0 %v584
    %1102 = vmatpush1.msra.mxu0 %v583
    %1103 = vmatprep.subr.mxu0 %v592
    %1104 = vmatpush1.msra.mxu0 %v591
    %1105 = vmatprep.subr.mxu0 %v600
    %1106 = vmatpush1.msra.mxu0 %v599
    %1107 = vmatprep.subr.mxu0 %v608
    %1108 = vmatpush1.msra.mxu0 %v607
    %1109 = vmatprep.subr.mxu0 %v616
    %1110 = vmatpush1.msra.mxu0 %v615
    %1111 = vmatprep.subr.mxu0 %v624
    %1112 = vmatpush1.msra.mxu0 %v623
    %1113 = vmatprep.subr.mxu0 %v632
    %1114 = vmatpush1.msra.mxu0 %v631
    %1115 = vmatprep.subr.mxu0 %v640
    %1116 = vmatpush1.msra.mxu0 %v639
    %1117 = vmatprep.subr.mxu0 %v648
    %1118 = vmatpush1.msra.mxu0 %v647
    %1119 = vmatprep.subr.mxu0 %v656
    %1120 = vmatpush1.msra.mxu0 %v655
    %1121 = vmatprep.subr.mxu0 %v664
    %1122 = vmatpush1.msra.mxu0 %v663
    %1123 = vmatprep.subr.mxu0 %v672
    %1124 = vmatpush1.msra.mxu0 %v671
    %1125 = vmatprep.subr.mxu0 %v680
    %1126 = vmatpush1.msra.mxu0 %v679
    %1127 = vmatprep.subr.mxu0 %v688
    %1128 = vmatpush1.msra.mxu0 %v687
    %1129 = vmatprep.subr.mxu0 %v696
    %1130 = vmatpush1.msra.mxu0 %v695
    %1131 = vmatprep.subr.mxu0 %v704
    %1132 = vmatpush1.msra.mxu0 %v703
    %1133 = vmatprep.subr.mxu0 %v712
    %1134 = vmatpush1.msra.mxu0 %v711
    %1135 = vmatprep.subr.mxu0 %v720
    %1136 = vmatpush1.msra.mxu0 %v719
    %1137 = vmatprep.subr.mxu0 %v728
    %1138 = vmatpush1.msra.mxu0 %v727
    %1139 = vmatprep.subr.mxu0 %v736
    %1140 = vmatpush1.msra.mxu0 %v735
    %1141 = vmatprep.subr.mxu0 %v744
    %1142 = vmatpush1.msra.mxu0 %v743
    %1143 = vmatprep.subr.mxu0 %v752
    %1144 = vmatpush1.msra.mxu0 %v751
    %1145 = vmatprep.subr.mxu0 %v760
    %1146 = vmatpush1.msra.mxu0 %v759
    %1147 = vmatprep.subr.mxu0 %v768
    %1148 = vmatpush1.msra.mxu0 %v767
    %1149 = vmatprep.subr.mxu0 %v776
    %1150 = vmatpush1.msra.mxu0 %v775
    %1151 = vmatprep.subr.mxu0 %v784
    %1152 = vmatpush1.msra.mxu0 %v783
    %1153 = vmatprep.mubr.f32.mxu0 %v532
    %1154 = vmatmul.mubr.f32.gmra.mrb[0].mxu0 %v531
    %v1155 = vpop.f32.mrb[0].mxu0
    %v1156 = vadd.f32 %v1052, %v1155
    %v1157 = vpop.f32.mrb[0].mxu0
    %v1158 = vadd.f32 %v1056, %v1157
    %1159 = vdwg.mxu0
    %1160 = vmatprep.subr.mxu0 %v792
    %1161 = vmatpush1.msra.mxu0 %v791
    %1162 = vmatprep.subr.mxu0 %v800
    %1163 = vmatpush1.msra.mxu0 %v799
    %1164 = vmatprep.subr.mxu0 %v808
    %1165 = vmatpush1.msra.mxu0 %v807
    %1166 = vmatprep.subr.mxu0 %v816
    %1167 = vmatpush1.msra.mxu0 %v815
    %1168 = vmatprep.subr.mxu0 %v824
    %1169 = vmatpush1.msra.mxu0 %v823
    %1170 = vmatprep.subr.mxu0 %v832
    %1171 = vmatpush1.msra.mxu0 %v831
    %1172 = vmatprep.subr.mxu0 %v840
    %1173 = vmatpush1.msra.mxu0 %v839
    %1174 = vmatprep.subr.mxu0 %v848
    %1175 = vmatpush1.msra.mxu0 %v847
    %1176 = vmatprep.subr.mxu0 %v856
    %1177 = vmatpush1.msra.mxu0 %v855
    %1178 = vmatprep.subr.mxu0 %v864
    %1179 = vmatpush1.msra.mxu0 %v863
    %1180 = vmatprep.subr.mxu0 %v872
    %1181 = vmatpush1.msra.mxu0 %v871
    %1182 = vmatprep.subr.mxu0 %v880
    %1183 = vmatpush1.msra.mxu0 %v879
    %1184 = vmatprep.subr.mxu0 %v888
    %1185 = vmatpush1.msra.mxu0 %v887
    %1186 = vmatprep.subr.mxu0 %v896
    %1187 = vmatpush1.msra.mxu0 %v895
    %1188 = vmatprep.subr.mxu0 %v904
    %1189 = vmatpush1.msra.mxu0 %v903
    %1190 = vmatprep.subr.mxu0 %v912
    %1191 = vmatpush1.msra.mxu0 %v911
    %1192 = vmatprep.subr.mxu0 %v920
    %1193 = vmatpush1.msra.mxu0 %v919
    %1194 = vmatprep.subr.mxu0 %v928
    %1195 = vmatpush1.msra.mxu0 %v927
    %1196 = vmatprep.subr.mxu0 %v936
    %1197 = vmatpush1.msra.mxu0 %v935
    %1198 = vmatprep.subr.mxu0 %v944
    %1199 = vmatpush1.msra.mxu0 %v943
    %1200 = vmatprep.subr.mxu0 %v952
    %1201 = vmatpush1.msra.mxu0 %v951
    %1202 = vmatprep.subr.mxu0 %v960
    %1203 = vmatpush1.msra.mxu0 %v959
    %1204 = vmatprep.subr.mxu0 %v968
    %1205 = vmatpush1.msra.mxu0 %v967
    %1206 = vmatprep.subr.mxu0 %v976
    %1207 = vmatpush1.msra.mxu0 %v975
    %1208 = vmatprep.subr.mxu0 %v984
    %1209 = vmatpush1.msra.mxu0 %v983
    %1210 = vmatprep.subr.mxu0 %v992
    %1211 = vmatpush1.msra.mxu0 %v991
    %1212 = vmatprep.subr.mxu0 %v1000
    %1213 = vmatpush1.msra.mxu0 %v999
    %1214 = vmatprep.subr.mxu0 %v1008
    %1215 = vmatpush1.msra.mxu0 %v1007
    %1216 = vmatprep.subr.mxu0 %v1016
    %1217 = vmatpush1.msra.mxu0 %v1015
    %1218 = vmatprep.subr.mxu0 %v1024
    %1219 = vmatpush1.msra.mxu0 %v1023
    %1220 = vmatprep.subr.mxu0 %v1032
    %1221 = vmatpush1.msra.mxu0 %v1031
    %1222 = vmatprep.subr.mxu0 %v1040
    %1223 = vmatpush1.msra.mxu0 %v1039
    %1224 = vmatprep.mubr.f32.mxu0 %v534
    %1225 = vmatmul.mubr.f32.gmra.mrb[0].mxu0 %v533
    %v1226 = vpop.f32.mrb[0].mxu0
    %v1227 = vadd.f32 %v1156, %v1226
    %v1228 = vpop.f32.mrb[0].mxu0
    %v1229 = vadd.f32 %v1158, %v1228
    %1230 = vdwg.mxu0
    %1231 = vmatprep.subr.mxu0 %v538
    %1232 = vmatpush1.msra.mxu0 %v537
    %1233 = vmatprep.subr.mxu0 %v546
    %1234 = vmatpush1.msra.mxu0 %v545
    %1235 = vmatprep.subr.mxu0 %v554
    %1236 = vmatpush1.msra.mxu0 %v553
    %1237 = vmatprep.subr.mxu0 %v562
    %1238 = vmatpush1.msra.mxu0 %v561
    %1239 = vmatprep.subr.mxu0 %v570
    %1240 = vmatpush1.msra.mxu0 %v569
    %1241 = vmatprep.subr.mxu0 %v578
    %1242 = vmatpush1.msra.mxu0 %v577
    %1243 = vmatprep.subr.mxu0 %v586
    %1244 = vmatpush1.msra.mxu0 %v585
    %1245 = vmatprep.subr.mxu0 %v594
    %1246 = vmatpush1.msra.mxu0 %v593
    %1247 = vmatprep.subr.mxu0 %v602
    %1248 = vmatpush1.msra.mxu0 %v601
    %1249 = vmatprep.subr.mxu0 %v610
    %1250 = vmatpush1.msra.mxu0 %v609
    %1251 = vmatprep.subr.mxu0 %v618
    %1252 = vmatpush1.msra.mxu0 %v617
    %1253 = vmatprep.subr.mxu0 %v626
    %1254 = vmatpush1.msra.mxu0 %v625
    %1255 = vmatprep.subr.mxu0 %v634
    %1256 = vmatpush1.msra.mxu0 %v633
    %1257 = vmatprep.subr.mxu0 %v642
    %1258 = vmatpush1.msra.mxu0 %v641
    %1259 = vmatprep.subr.mxu0 %v650
    %1260 = vmatpush1.msra.mxu0 %v649
    %1261 = vmatprep.subr.mxu0 %v658
    %1262 = vmatpush1.msra.mxu0 %v657
    %1263 = vmatprep.subr.mxu0 %v666
    %1264 = vmatpush1.msra.mxu0 %v665
    %1265 = vmatprep.subr.mxu0 %v674
    %1266 = vmatpush1.msra.mxu0 %v673
    %1267 = vmatprep.subr.mxu0 %v682
    %1268 = vmatpush1.msra.mxu0 %v681
    %1269 = vmatprep.subr.mxu0 %v690
    %1270 = vmatpush1.msra.mxu0 %v689
    %1271 = vmatprep.subr.mxu0 %v698
    %1272 = vmatpush1.msra.mxu0 %v697
    %1273 = vmatprep.subr.mxu0 %v706
    %1274 = vmatpush1.msra.mxu0 %v705
    %1275 = vmatprep.subr.mxu0 %v714
    %1276 = vmatpush1.msra.mxu0 %v713
    %1277 = vmatprep.subr.mxu0 %v722
    %1278 = vmatpush1.msra.mxu0 %v721
    %1279 = vmatprep.subr.mxu0 %v730
    %1280 = vmatpush1.msra.mxu0 %v729
    %1281 = vmatprep.subr.mxu0 %v738
    %1282 = vmatpush1.msra.mxu0 %v737
    %1283 = vmatprep.subr.mxu0 %v746
    %1284 = vmatpush1.msra.mxu0 %v745
    %1285 = vmatprep.subr.mxu0 %v754
    %1286 = vmatpush1.msra.mxu0 %v753
    %1287 = vmatprep.subr.mxu0 %v762
    %1288 = vmatpush1.msra.mxu0 %v761
    %1289 = vmatprep.subr.mxu0 %v770
    %1290 = vmatpush1.msra.mxu0 %v769
    %1291 = vmatprep.subr.mxu0 %v778
    %1292 = vmatpush1.msra.mxu0 %v777
    %1293 = vmatprep.subr.mxu0 %v786
    %1294 = vmatpush1.msra.mxu0 %v785
    %1295 = vmatprep.mubr.f32.mxu0 %v532
    %1296 = vmatmul.mubr.f32.gmra.mrb[0].mxu0 %v531
    %v1297 = vpop.f32.mrb[0].mxu0
    %v1298 = vadd.f32 %v1060, %v1297
    %v1299 = vpop.f32.mrb[0].mxu0
    %v1300 = vadd.f32 %v1064, %v1299
    %1301 = vdwg.mxu0
    %1302 = vmatprep.subr.mxu0 %v794
    %1303 = vmatpush1.msra.mxu0 %v793
    %1304 = vmatprep.subr.mxu0 %v802
    %1305 = vmatpush1.msra.mxu0 %v801
    %1306 = vmatprep.subr.mxu0 %v810
    %1307 = vmatpush1.msra.mxu0 %v809
    %1308 = vmatprep.subr.mxu0 %v818
    %1309 = vmatpush1.msra.mxu0 %v817
    %1310 = vmatprep.subr.mxu0 %v826
    %1311 = vmatpush1.msra.mxu0 %v825
    %1312 = vmatprep.subr.mxu0 %v834
    %1313 = vmatpush1.msra.mxu0 %v833
    %1314 = vmatprep.subr.mxu0 %v842
    %1315 = vmatpush1.msra.mxu0 %v841
    %1316 = vmatprep.subr.mxu0 %v850
    %1317 = vmatpush1.msra.mxu0 %v849
    %1318 = vmatprep.subr.mxu0 %v858
    %1319 = vmatpush1.msra.mxu0 %v857
    %1320 = vmatprep.subr.mxu0 %v866
    %1321 = vmatpush1.msra.mxu0 %v865
    %1322 = vmatprep.subr.mxu0 %v874
    %1323 = vmatpush1.msra.mxu0 %v873
    %1324 = vmatprep.subr.mxu0 %v882
    %1325 = vmatpush1.msra.mxu0 %v881
    %1326 = vmatprep.subr.mxu0 %v890
    %1327 = vmatpush1.msra.mxu0 %v889
    %1328 = vmatprep.subr.mxu0 %v898
    %1329 = vmatpush1.msra.mxu0 %v897
    %1330 = vmatprep.subr.mxu0 %v906
    %1331 = vmatpush1.msra.mxu0 %v905
    %1332 = vmatprep.subr.mxu0 %v914
    %1333 = vmatpush1.msra.mxu0 %v913
    %1334 = vmatprep.subr.mxu0 %v922
    %1335 = vmatpush1.msra.mxu0 %v921
    %1336 = vmatprep.subr.mxu0 %v930
    %1337 = vmatpush1.msra.mxu0 %v929
    %1338 = vmatprep.subr.mxu0 %v938
    %1339 = vmatpush1.msra.mxu0 %v937
    %1340 = vmatprep.subr.mxu0 %v946
    %1341 = vmatpush1.msra.mxu0 %v945
    %1342 = vmatprep.subr.mxu0 %v954
    %1343 = vmatpush1.msra.mxu0 %v953
    %1344 = vmatprep.subr.mxu0 %v962
    %1345 = vmatpush1.msra.mxu0 %v961
    %1346 = vmatprep.subr.mxu0 %v970
    %1347 = vmatpush1.msra.mxu0 %v969
    %1348 = vmatprep.subr.mxu0 %v978
    %1349 = vmatpush1.msra.mxu0 %v977
    %1350 = vmatprep.subr.mxu0 %v986
    %1351 = vmatpush1.msra.mxu0 %v985
    %1352 = vmatprep.subr.mxu0 %v994
    %1353 = vmatpush1.msra.mxu0 %v993
    %1354 = vmatprep.subr.mxu0 %v1002
    %1355 = vmatpush1.msra.mxu0 %v1001
    %1356 = vmatprep.subr.mxu0 %v1010
    %1357 = vmatpush1.msra.mxu0 %v1009
    %1358 = vmatprep.subr.mxu0 %v1018
    %1359 = vmatpush1.msra.mxu0 %v1017
    %1360 = vmatprep.subr.mxu0 %v1026
    %1361 = vmatpush1.msra.mxu0 %v1025
    %1362 = vmatprep.subr.mxu0 %v1034
    %1363 = vmatpush1.msra.mxu0 %v1033
    %1364 = vmatprep.subr.mxu0 %v1042
    %1365 = vmatpush1.msra.mxu0 %v1041
    %1366 = vmatprep.mubr.f32.mxu0 %v534
    %1367 = vmatmul.mubr.f32.gmra.mrb[0].mxu0 %v533
    %v1368 = vpop.f32.mrb[0].mxu0
    %v1369 = vadd.f32 %v1298, %v1368
    %v1370 = vpop.f32.mrb[0].mxu0
    %v1371 = vadd.f32 %v1300, %v1370
    %1372 = vdwg.mxu0
    %1373 = vmatprep.subr.mxu0 %v540
    %1374 = vmatpush1.msra.mxu0 %v539
    %1375 = vmatprep.subr.mxu0 %v548
    %1376 = vmatpush1.msra.mxu0 %v547
    %1377 = vmatprep.subr.mxu0 %v556
    %1378 = vmatpush1.msra.mxu0 %v555
    %1379 = vmatprep.subr.mxu0 %v564
    %1380 = vmatpush1.msra.mxu0 %v563
    %1381 = vmatprep.subr.mxu0 %v572
    %1382 = vmatpush1.msra.mxu0 %v571
    %1383 = vmatprep.subr.mxu0 %v580
    %1384 = vmatpush1.msra.mxu0 %v579
    %1385 = vmatprep.subr.mxu0 %v588
    %1386 = vmatpush1.msra.mxu0 %v587
    %1387 = vmatprep.subr.mxu0 %v596
    %1388 = vmatpush1.msra.mxu0 %v595
    %1389 = vmatprep.subr.mxu0 %v604
    %1390 = vmatpush1.msra.mxu0 %v603
    %1391 = vmatprep.subr.mxu0 %v612
    %1392 = vmatpush1.msra.mxu0 %v611
    %1393 = vmatprep.subr.mxu0 %v620
    %1394 = vmatpush1.msra.mxu0 %v619
    %1395 = vmatprep.subr.mxu0 %v628
    %1396 = vmatpush1.msra.mxu0 %v627
    %1397 = vmatprep.subr.mxu0 %v636
    %1398 = vmatpush1.msra.mxu0 %v635
    %1399 = vmatprep.subr.mxu0 %v644
    %1400 = vmatpush1.msra.mxu0 %v643
    %1401 = vmatprep.subr.mxu0 %v652
    %1402 = vmatpush1.msra.mxu0 %v651
    %1403 = vmatprep.subr.mxu0 %v660
    %1404 = vmatpush1.msra.mxu0 %v659
    %1405 = vmatprep.subr.mxu0 %v668
    %1406 = vmatpush1.msra.mxu0 %v667
    %1407 = vmatprep.subr.mxu0 %v676
    %1408 = vmatpush1.msra.mxu0 %v675
    %1409 = vmatprep.subr.mxu0 %v684
    %1410 = vmatpush1.msra.mxu0 %v683
    %1411 = vmatprep.subr.mxu0 %v692
    %1412 = vmatpush1.msra.mxu0 %v691
    %1413 = vmatprep.subr.mxu0 %v700
    %1414 = vmatpush1.msra.mxu0 %v699
    %1415 = vmatprep.subr.mxu0 %v708
    %1416 = vmatpush1.msra.mxu0 %v707
    %1417 = vmatprep.subr.mxu0 %v716
    %1418 = vmatpush1.msra.mxu0 %v715
    %1419 = vmatprep.subr.mxu0 %v724
    %1420 = vmatpush1.msra.mxu0 %v723
    %1421 = vmatprep.subr.mxu0 %v732
    %1422 = vmatpush1.msra.mxu0 %v731
    %1423 = vmatprep.subr.mxu0 %v740
    %1424 = vmatpush1.msra.mxu0 %v739
    %1425 = vmatprep.subr.mxu0 %v748
    %1426 = vmatpush1.msra.mxu0 %v747
    %1427 = vmatprep.subr.mxu0 %v756
    %1428 = vmatpush1.msra.mxu0 %v755
    %1429 = vmatprep.subr.mxu0 %v764
    %1430 = vmatpush1.msra.mxu0 %v763
    %1431 = vmatprep.subr.mxu0 %v772
    %1432 = vmatpush1.msra.mxu0 %v771
    %1433 = vmatprep.subr.mxu0 %v780
    %1434 = vmatpush1.msra.mxu0 %v779
    %1435 = vmatprep.subr.mxu0 %v788
    %1436 = vmatpush1.msra.mxu0 %v787
    %1437 = vmatprep.mubr.f32.mxu0 %v532
    %1438 = vmatmul.mubr.f32.gmra.mrb[0].mxu0 %v531
    %v1439 = vpop.f32.mrb[0].mxu0
    %v1440 = vadd.f32 %v1068, %v1439
    %v1441 = vpop.f32.mrb[0].mxu0
    %v1442 = vadd.f32 %v1072, %v1441
    %1443 = vdwg.mxu0
    %1444 = vmatprep.subr.mxu0 %v796
    %1445 = vmatpush1.msra.mxu0 %v795
    %1446 = vmatprep.subr.mxu0 %v804
    %1447 = vmatpush1.msra.mxu0 %v803
    %1448 = vmatprep.subr.mxu0 %v812
    %1449 = vmatpush1.msra.mxu0 %v811
    %1450 = vmatprep.subr.mxu0 %v820
    %1451 = vmatpush1.msra.mxu0 %v819
    %1452 = vmatprep.subr.mxu0 %v828
    %1453 = vmatpush1.msra.mxu0 %v827
    %1454 = vmatprep.subr.mxu0 %v836
    %1455 = vmatpush1.msra.mxu0 %v835
    %1456 = vmatprep.subr.mxu0 %v844
    %1457 = vmatpush1.msra.mxu0 %v843
    %1458 = vmatprep.subr.mxu0 %v852
    %1459 = vmatpush1.msra.mxu0 %v851
    %1460 = vmatprep.subr.mxu0 %v860
    %1461 = vmatpush1.msra.mxu0 %v859
    %1462 = vmatprep.subr.mxu0 %v868
    %1463 = vmatpush1.msra.mxu0 %v867
    %1464 = vmatprep.subr.mxu0 %v876
    %1465 = vmatpush1.msra.mxu0 %v875
    %1466 = vmatprep.subr.mxu0 %v884
    %1467 = vmatpush1.msra.mxu0 %v883
    %1468 = vmatprep.subr.mxu0 %v892
    %1469 = vmatpush1.msra.mxu0 %v891
    %1470 = vmatprep.subr.mxu0 %v900
    %1471 = vmatpush1.msra.mxu0 %v899
    %1472 = vmatprep.subr.mxu0 %v908
    %1473 = vmatpush1.msra.mxu0 %v907
    %1474 = vmatprep.subr.mxu0 %v916
    %1475 = vmatpush1.msra.mxu0 %v915
    %1476 = vmatprep.subr.mxu0 %v924
    %1477 = vmatpush1.msra.mxu0 %v923
    %1478 = vmatprep.subr.mxu0 %v932
    %1479 = vmatpush1.msra.mxu0 %v931
    %1480 = vmatprep.subr.mxu0 %v940
    %1481 = vmatpush1.msra.mxu0 %v939
    %1482 = vmatprep.subr.mxu0 %v948
    %1483 = vmatpush1.msra.mxu0 %v947
    %1484 = vmatprep.subr.mxu0 %v956
    %1485 = vmatpush1.msra.mxu0 %v955
    %1486 = vmatprep.subr.mxu0 %v964
    %1487 = vmatpush1.msra.mxu0 %v963
    %1488 = vmatprep.subr.mxu0 %v972
    %1489 = vmatpush1.msra.mxu0 %v971
    %1490 = vmatprep.subr.mxu0 %v980
    %1491 = vmatpush1.msra.mxu0 %v979
    %1492 = vmatprep.subr.mxu0 %v988
    %1493 = vmatpush1.msra.mxu0 %v987
    %1494 = vmatprep.subr.mxu0 %v996
    %1495 = vmatpush1.msra.mxu0 %v995
    %1496 = vmatprep.subr.mxu0 %v1004
    %1497 = vmatpush1.msra.mxu0 %v1003
    %1498 = vmatprep.subr.mxu0 %v1012
    %1499 = vmatpush1.msra.mxu0 %v1011
    %1500 = vmatprep.subr.mxu0 %v1020
    %1501 = vmatpush1.msra.mxu0 %v1019
    %1502 = vmatprep.subr.mxu0 %v1028
    %1503 = vmatpush1.msra.mxu0 %v1027
    %1504 = vmatprep.subr.mxu0 %v1036
    %1505 = vmatpush1.msra.mxu0 %v1035
    %1506 = vmatprep.subr.mxu0 %v1044
    %1507 = vmatpush1.msra.mxu0 %v1043
    %1508 = vmatprep.mubr.f32.mxu0 %v534
    %1509 = vmatmul.mubr.f32.gmra.mrb[0].mxu0 %v533
    %v1510 = vpop.f32.mrb[0].mxu0
    %v1511 = vadd.f32 %v1440, %v1510
    %v1512 = vpop.f32.mrb[0].mxu0
    %v1513 = vadd.f32 %v1442, %v1512
    %1514 = vdwg.mxu0
    %1515 = vmatprep.subr.mxu0 %v542
    %1516 = vmatpush1.msra.mxu0 %v541
    %1517 = vmatprep.subr.mxu0 %v550
    %1518 = vmatpush1.msra.mxu0 %v549
    %1519 = vmatprep.subr.mxu0 %v558
    %1520 = vmatpush1.msra.mxu0 %v557
    %1521 = vmatprep.subr.mxu0 %v566
    %1522 = vmatpush1.msra.mxu0 %v565
    %1523 = vmatprep.subr.mxu0 %v574
    %1524 = vmatpush1.msra.mxu0 %v573
    %1525 = vmatprep.subr.mxu0 %v582
    %1526 = vmatpush1.msra.mxu0 %v581
    %1527 = vmatprep.subr.mxu0 %v590
    %1528 = vmatpush1.msra.mxu0 %v589
    %1529 = vmatprep.subr.mxu0 %v598
    %1530 = vmatpush1.msra.mxu0 %v597
    %1531 = vmatprep.subr.mxu0 %v606
    %1532 = vmatpush1.msra.mxu0 %v605
    %1533 = vmatprep.subr.mxu0 %v614
    %1534 = vmatpush1.msra.mxu0 %v613
    %1535 = vmatprep.subr.mxu0 %v622
    %1536 = vmatpush1.msra.mxu0 %v621
    %1537 = vmatprep.subr.mxu0 %v630
    %1538 = vmatpush1.msra.mxu0 %v629
    %1539 = vmatprep.subr.mxu0 %v638
    %1540 = vmatpush1.msra.mxu0 %v637
    %1541 = vmatprep.subr.mxu0 %v646
    %1542 = vmatpush1.msra.mxu0 %v645
    %1543 = vmatprep.subr.mxu0 %v654
    %1544 = vmatpush1.msra.mxu0 %v653
    %1545 = vmatprep.subr.mxu0 %v662
    %1546 = vmatpush1.msra.mxu0 %v661
    %1547 = vmatprep.subr.mxu0 %v670
    %1548 = vmatpush1.msra.mxu0 %v669
    %1549 = vmatprep.subr.mxu0 %v678
    %1550 = vmatpush1.msra.mxu0 %v677
    %1551 = vmatprep.subr.mxu0 %v686
    %1552 = vmatpush1.msra.mxu0 %v685
    %1553 = vmatprep.subr.mxu0 %v694
    %1554 = vmatpush1.msra.mxu0 %v693
    %1555 = vmatprep.subr.mxu0 %v702
    %1556 = vmatpush1.msra.mxu0 %v701
    %1557 = vmatprep.subr.mxu0 %v710
    %1558 = vmatpush1.msra.mxu0 %v709
    %1559 = vmatprep.subr.mxu0 %v718
    %1560 = vmatpush1.msra.mxu0 %v717
    %1561 = vmatprep.subr.mxu0 %v726
    %1562 = vmatpush1.msra.mxu0 %v725
    %1563 = vmatprep.subr.mxu0 %v734
    %1564 = vmatpush1.msra.mxu0 %v733
    %1565 = vmatprep.subr.mxu0 %v742
    %1566 = vmatpush1.msra.mxu0 %v741
    %1567 = vmatprep.subr.mxu0 %v750
    %1568 = vmatpush1.msra.mxu0 %v749
    %1569 = vmatprep.subr.mxu0 %v758
    %1570 = vmatpush1.msra.mxu0 %v757
    %1571 = vmatprep.subr.mxu0 %v766
    %1572 = vmatpush1.msra.mxu0 %v765
    %1573 = vmatprep.subr.mxu0 %v774
    %1574 = vmatpush1.msra.mxu0 %v773
    %1575 = vmatprep.subr.mxu0 %v782
    %1576 = vmatpush1.msra.mxu0 %v781
    %1577 = vmatprep.subr.mxu0 %v790
    %1578 = vmatpush1.msra.mxu0 %v789
    %1579 = vmatprep.mubr.f32.mxu0 %v532
    %1580 = vmatmul.mubr.f32.gmra.mrb[0].mxu0 %v531
    %v1581 = vpop.f32.mrb[0].mxu0
    %v1582 = vadd.f32 %v1076, %v1581
    %v1583 = vpop.f32.mrb[0].mxu0
    %v1584 = vadd.f32 %v1080, %v1583
    %1585 = vdwg.mxu0
    %1586 = vmatprep.subr.mxu0 %v798
    %1587 = vmatpush1.msra.mxu0 %v797
    %1588 = vmatprep.subr.mxu0 %v806
    %1589 = vmatpush1.msra.mxu0 %v805
    %1590 = vmatprep.subr.mxu0 %v814
    %1591 = vmatpush1.msra.mxu0 %v813
    %1592 = vmatprep.subr.mxu0 %v822
    %1593 = vmatpush1.msra.mxu0 %v821
    %1594 = vmatprep.subr.mxu0 %v830
    %1595 = vmatpush1.msra.mxu0 %v829
    %1596 = vmatprep.subr.mxu0 %v838
    %1597 = vmatpush1.msra.mxu0 %v837
    %1598 = vmatprep.subr.mxu0 %v846
    %1599 = vmatpush1.msra.mxu0 %v845
    %1600 = vmatprep.subr.mxu0 %v854
    %1601 = vmatpush1.msra.mxu0 %v853
    %1602 = vmatprep.subr.mxu0 %v862
    %1603 = vmatpush1.msra.mxu0 %v861
    %1604 = vmatprep.subr.mxu0 %v870
    %1605 = vmatpush1.msra.mxu0 %v869
    %1606 = vmatprep.subr.mxu0 %v878
    %1607 = vmatpush1.msra.mxu0 %v877
    %1608 = vmatprep.subr.mxu0 %v886
    %1609 = vmatpush1.msra.mxu0 %v885
    %1610 = vmatprep.subr.mxu0 %v894
    %1611 = vmatpush1.msra.mxu0 %v893
    %1612 = vmatprep.subr.mxu0 %v902
    %1613 = vmatpush1.msra.mxu0 %v901
    %1614 = vmatprep.subr.mxu0 %v910
    %1615 = vmatpush1.msra.mxu0 %v909
    %1616 = vmatprep.subr.mxu0 %v918
    %1617 = vmatpush1.msra.mxu0 %v917
    %1618 = vmatprep.subr.mxu0 %v926
    %1619 = vmatpush1.msra.mxu0 %v925
    %1620 = vmatprep.subr.mxu0 %v934
    %1621 = vmatpush1.msra.mxu0 %v933
    %1622 = vmatprep.subr.mxu0 %v942
    %1623 = vmatpush1.msra.mxu0 %v941
    %1624 = vmatprep.subr.mxu0 %v950
    %1625 = vmatpush1.msra.mxu0 %v949
    %1626 = vmatprep.subr.mxu0 %v958
    %1627 = vmatpush1.msra.mxu0 %v957
    %1628 = vmatprep.subr.mxu0 %v966
    %1629 = vmatpush1.msra.mxu0 %v965
    %1630 = vmatprep.subr.mxu0 %v974
    %1631 = vmatpush1.msra.mxu0 %v973
    %1632 = vmatprep.subr.mxu0 %v982
    %1633 = vmatpush1.msra.mxu0 %v981
    %1634 = vmatprep.subr.mxu0 %v990
    %1635 = vmatpush1.msra.mxu0 %v989
    %1636 = vmatprep.subr.mxu0 %v998
    %1637 = vmatpush1.msra.mxu0 %v997
    %1638 = vmatprep.subr.mxu0 %v1006
    %1639 = vmatpush1.msra.mxu0 %v1005
    %1640 = vmatprep.subr.mxu0 %v1014
    %1641 = vmatpush1.msra.mxu0 %v1013
    %1642 = vmatprep.subr.mxu0 %v1022
    %1643 = vmatpush1.msra.mxu0 %v1021
    %1644 = vmatprep.subr.mxu0 %v1030
    %1645 = vmatpush1.msra.mxu0 %v1029
    %1646 = vmatprep.subr.mxu0 %v1038
    %1647 = vmatpush1.msra.mxu0 %v1037
    %1648 = vmatprep.subr.mxu0 %v1046
    %1649 = vmatpush1.msra.mxu0 %v1045
    %1650 = vmatprep.mubr.f32.mxu0 %v534
    %1651 = vmatmul.mubr.f32.gmra.mrb[0].mxu0 %v533
    %v1652 = vpop.f32.mrb[0].mxu0
    %v1653 = vadd.f32 %v1582, %v1652
    %v1654 = vpop.f32.mrb[0].mxu0
    %v1655 = vadd.f32 %v1584, %v1654
    %1656 = vdwg.mxu0
    %v1657 = vmax.f32 %v1227, 0.0
    %v1658 = vmax.f32 %v1229, 0.0
    %v1659 = vmax.f32 %v1369, 0.0
    %v1660 = vmax.f32 %v1371, 0.0
    %v1661 = vmax.f32 %v1511, 0.0
    %v1662 = vmax.f32 %v1513, 0.0
    %v1663 = vmax.f32 %v1653, 0.0
    %v1664 = vmax.f32 %v1655, 0.0
    %v1665 = vld [vmem:[#allocation14] sm:$0xff]
    %v1666 = vld [vmem:[#allocation14 + $0x8] sm:$0xff]
    %v1667 = vld [vmem:[#allocation14 + $0x10] sm:$0xff]
    %v1668 = vld [vmem:[#allocation14 + $0x18] sm:$0xff]
    %v1669 = vld [vmem:[#allocation14 + $0x20] sm:$0xff]
    %v1670 = vld [vmem:[#allocation14 + $0x28] sm:$0xff]
    %v1671 = vld [vmem:[#allocation14 + $0x30] sm:$0xff]
    %v1672 = vld [vmem:[#allocation14 + $0x38] sm:$0xff]
    %v1673 = vld [vmem:[#allocation14 + $0x40] sm:$0xff]
    %v1674 = vld [vmem:[#allocation14 + $0x48] sm:$0xff]
    %v1675 = vld [vmem:[#allocation14 + $0x50] sm:$0xff]
    %v1676 = vld [vmem:[#allocation14 + $0x58] sm:$0xff]
    %v1677 = vld [vmem:[#allocation14 + $0x60] sm:$0xff]
    %v1678 = vld [vmem:[#allocation14 + $0x68] sm:$0xff]
    %v1679 = vld [vmem:[#allocation14 + $0x70] sm:$0xff]
    %v1680 = vld [vmem:[#allocation14 + $0x78] sm:$0xff]
    %v1681 = vld [vmem:[#allocation14 + $0x80] sm:$0xff]
    %v1682 = vld [vmem:[#allocation14 + $0x88] sm:$0xff]
    %v1683 = vld [vmem:[#allocation14 + $0x90] sm:$0xff]
    %v1684 = vld [vmem:[#allocation14 + $0x98] sm:$0xff]
    %v1685 = vld [vmem:[#allocation14 + $0xa0] sm:$0xff]
    %v1686 = vld [vmem:[#allocation14 + $0xa8] sm:$0xff]
    %v1687 = vld [vmem:[#allocation14 + $0xb0] sm:$0xff]
    %v1688 = vld [vmem:[#allocation14 + $0xb8] sm:$0xff]
    %v1689 = vld [vmem:[#allocation14 + $0xc0] sm:$0xff]
    %v1690 = vld [vmem:[#allocation14 + $0xc8] sm:$0xff]
    %v1691 = vld [vmem:[#allocation14 + $0xd0] sm:$0xff]
    %v1692 = vld [vmem:[#allocation14 + $0xd8] sm:$0xff]
    %v1693 = vld [vmem:[#allocation14 + $0xe0] sm:$0xff]
    %v1694 = vld [vmem:[#allocation14 + $0xe8] sm:$0xff]
    %v1695 = vld [vmem:[#allocation14 + $0xf0] sm:$0xff]
    %v1696 = vld [vmem:[#allocation14 + $0xf8] sm:$0xff]
    %v1697 = vld [vmem:[#allocation14 + $0x100] sm:$0xff]
    %v1698 = vld [vmem:[#allocation14 + $0x108] sm:$0xff]
    %v1699 = vld [vmem:[#allocation14 + $0x110] sm:$0xff]
    %v1700 = vld [vmem:[#allocation14 + $0x118] sm:$0xff]
    %v1701 = vld [vmem:[#allocation14 + $0x120] sm:$0xff]
    %v1702 = vld [vmem:[#allocation14 + $0x128] sm:$0xff]
    %v1703 = vld [vmem:[#allocation14 + $0x130] sm:$0xff]
    %v1704 = vld [vmem:[#allocation14 + $0x138] sm:$0xff]
    %v1705 = vld [vmem:[#allocation14 + $0x140] sm:$0xff]
    %v1706 = vld [vmem:[#allocation14 + $0x148] sm:$0xff]
    %v1707 = vld [vmem:[#allocation14 + $0x150] sm:$0xff]
    %v1708 = vld [vmem:[#allocation14 + $0x158] sm:$0xff]
    %v1709 = vld [vmem:[#allocation14 + $0x160] sm:$0xff]
    %v1710 = vld [vmem:[#allocation14 + $0x168] sm:$0xff]
    %v1711 = vld [vmem:[#allocation14 + $0x170] sm:$0xff]
    %v1712 = vld [vmem:[#allocation14 + $0x178] sm:$0xff]
    %v1713 = vld [vmem:[#allocation14 + $0x180] sm:$0xff]
    %v1714 = vld [vmem:[#allocation14 + $0x188] sm:$0xff]
    %v1715 = vld [vmem:[#allocation14 + $0x190] sm:$0xff]
    %v1716 = vld [vmem:[#allocation14 + $0x198] sm:$0xff]
    %v1717 = vld [vmem:[#allocation14 + $0x1a0] sm:$0xff]
    %v1718 = vld [vmem:[#allocation14 + $0x1a8] sm:$0xff]
    %v1719 = vld [vmem:[#allocation14 + $0x1b0] sm:$0xff]
    %v1720 = vld [vmem:[#allocation14 + $0x1b8] sm:$0xff]
    %v1721 = vld [vmem:[#allocation14 + $0x1c0] sm:$0xff]
    %v1722 = vld [vmem:[#allocation14 + $0x1c8] sm:$0xff]
    %v1723 = vld [vmem:[#allocation14 + $0x1d0] sm:$0xff]
    %v1724 = vld [vmem:[#allocation14 + $0x1d8] sm:$0xff]
    %v1725 = vld [vmem:[#allocation14 + $0x1e0] sm:$0xff]
    %v1726 = vld [vmem:[#allocation14 + $0x1e8] sm:$0xff]
    %v1727 = vld [vmem:[#allocation14 + $0x1f0] sm:$0xff]
    %v1728 = vld [vmem:[#allocation14 + $0x1f8] sm:$0xff]
    %v1729 = vld [vmem:[#allocation14 + $0x200] sm:$0xff]
    %v1730 = vld [vmem:[#allocation14 + $0x208] sm:$0xff]
    %v1731 = vld [vmem:[#allocation14 + $0x210] sm:$0xff]
    %v1732 = vld [vmem:[#allocation14 + $0x218] sm:$0xff]
    %v1733 = vld [vmem:[#allocation14 + $0x220] sm:$0xff]
    %v1734 = vld [vmem:[#allocation14 + $0x228] sm:$0xff]
    %v1735 = vld [vmem:[#allocation14 + $0x230] sm:$0xff]
    %v1736 = vld [vmem:[#allocation14 + $0x238] sm:$0xff]
    %v1737 = vld [vmem:[#allocation14 + $0x240] sm:$0xff]
    %v1738 = vld [vmem:[#allocation14 + $0x248] sm:$0xff]
    %v1739 = vld [vmem:[#allocation14 + $0x250] sm:$0xff]
    %v1740 = vld [vmem:[#allocation14 + $0x258] sm:$0xff]
    %v1741 = vld [vmem:[#allocation14 + $0x260] sm:$0xff]
    %v1742 = vld [vmem:[#allocation14 + $0x268] sm:$0xff]
    %v1743 = vld [vmem:[#allocation14 + $0x270] sm:$0xff]
    %v1744 = vld [vmem:[#allocation14 + $0x278] sm:$0xff]
    %v1745 = vld [vmem:[#allocation14 + $0x280] sm:$0xff]
    %v1746 = vld [vmem:[#allocation14 + $0x288] sm:$0xff]
    %v1747 = vld [vmem:[#allocation14 + $0x290] sm:$0xff]
    %v1748 = vld [vmem:[#allocation14 + $0x298] sm:$0xff]
    %v1749 = vld [vmem:[#allocation14 + $0x2a0] sm:$0xff]
    %v1750 = vld [vmem:[#allocation14 + $0x2a8] sm:$0xff]
    %v1751 = vld [vmem:[#allocation14 + $0x2b0] sm:$0xff]
    %v1752 = vld [vmem:[#allocation14 + $0x2b8] sm:$0xff]
    %v1753 = vld [vmem:[#allocation14 + $0x2c0] sm:$0xff]
    %v1754 = vld [vmem:[#allocation14 + $0x2c8] sm:$0xff]
    %v1755 = vld [vmem:[#allocation14 + $0x2d0] sm:$0xff]
    %v1756 = vld [vmem:[#allocation14 + $0x2d8] sm:$0xff]
    %v1757 = vld [vmem:[#allocation14 + $0x2e0] sm:$0xff]
    %v1758 = vld [vmem:[#allocation14 + $0x2e8] sm:$0xff]
    %v1759 = vld [vmem:[#allocation14 + $0x2f0] sm:$0xff]
    %v1760 = vld [vmem:[#allocation14 + $0x2f8] sm:$0xff]
    %v1761 = vld [vmem:[#allocation14 + $0x300] sm:$0xff]
    %v1762 = vld [vmem:[#allocation14 + $0x308] sm:$0xff]
    %v1763 = vld [vmem:[#allocation14 + $0x310] sm:$0xff]
    %v1764 = vld [vmem:[#allocation14 + $0x318] sm:$0xff]
    %v1765 = vld [vmem:[#allocation14 + $0x320] sm:$0xff]
    %v1766 = vld [vmem:[#allocation14 + $0x328] sm:$0xff]
    %v1767 = vld [vmem:[#allocation14 + $0x330] sm:$0xff]
    %v1768 = vld [vmem:[#allocation14 + $0x338] sm:$0xff]
    %v1769 = vld [vmem:[#allocation14 + $0x340] sm:$0xff]
    %v1770 = vld [vmem:[#allocation14 + $0x348] sm:$0xff]
    %v1771 = vld [vmem:[#allocation14 + $0x350] sm:$0xff]
    %v1772 = vld [vmem:[#allocation14 + $0x358] sm:$0xff]
    %v1773 = vld [vmem:[#allocation14 + $0x360] sm:$0xff]
    %v1774 = vld [vmem:[#allocation14 + $0x368] sm:$0xff]
    %v1775 = vld [vmem:[#allocation14 + $0x370] sm:$0xff]
    %v1776 = vld [vmem:[#allocation14 + $0x378] sm:$0xff]
    %v1777 = vld [vmem:[#allocation14 + $0x380] sm:$0xff]
    %v1778 = vld [vmem:[#allocation14 + $0x388] sm:$0xff]
    %v1779 = vld [vmem:[#allocation14 + $0x390] sm:$0xff]
    %v1780 = vld [vmem:[#allocation14 + $0x398] sm:$0xff]
    %v1781 = vld [vmem:[#allocation14 + $0x3a0] sm:$0xff]
    %v1782 = vld [vmem:[#allocation14 + $0x3a8] sm:$0xff]
    %v1783 = vld [vmem:[#allocation14 + $0x3b0] sm:$0xff]
    %v1784 = vld [vmem:[#allocation14 + $0x3b8] sm:$0xff]
    %v1785 = vld [vmem:[#allocation14 + $0x3c0] sm:$0xff]
    %v1786 = vld [vmem:[#allocation14 + $0x3c8] sm:$0xff]
    %v1787 = vld [vmem:[#allocation14 + $0x3d0] sm:$0xff]
    %v1788 = vld [vmem:[#allocation14 + $0x3d8] sm:$0xff]
    %v1789 = vld [vmem:[#allocation14 + $0x3e0] sm:$0xff]
    %v1790 = vld [vmem:[#allocation14 + $0x3e8] sm:$0xff]
    %v1791 = vld [vmem:[#allocation14 + $0x3f0] sm:$0xff]
    %v1792 = vld [vmem:[#allocation14 + $0x3f8] sm:$0xff]
    %v1793 = vld [vmem:[#allocation16] sm:$0x1]
    %v1795 = vlaneseq
    %v1796 = vshrl.u32 %v1795, 7
    %v1797 = vsub.s32 0, %v1796
    %v1798 = vrot.slane %v1793, %v1797
    %1800 = vmatprep.subr.mxu0 0.0
    %1801 = vmatpush1.msra.mxu0 %v1665
    %1802 = vmatprep.subr.mxu0 0.0
    %1803 = vmatpush1.msra.mxu0 %v1666
    %1804 = vmatprep.subr.mxu0 0.0
    %1805 = vmatpush1.msra.mxu0 %v1667
    %1806 = vmatprep.subr.mxu0 0.0
    %1807 = vmatpush1.msra.mxu0 %v1668
    %1808 = vmatprep.subr.mxu0 0.0
    %1809 = vmatpush1.msra.mxu0 %v1669
    %1810 = vmatprep.subr.mxu0 0.0
    %1811 = vmatpush1.msra.mxu0 %v1670
    %1812 = vmatprep.subr.mxu0 0.0
    %1813 = vmatpush1.msra.mxu0 %v1671
    %1814 = vmatprep.subr.mxu0 0.0
    %1815 = vmatpush1.msra.mxu0 %v1672
    %1816 = vmatprep.subr.mxu0 0.0
    %1817 = vmatpush1.msra.mxu0 %v1673
    %1818 = vmatprep.subr.mxu0 0.0
    %1819 = vmatpush1.msra.mxu0 %v1674
    %1820 = vmatprep.subr.mxu0 0.0
    %1821 = vmatpush1.msra.mxu0 %v1675
    %1822 = vmatprep.subr.mxu0 0.0
    %1823 = vmatpush1.msra.mxu0 %v1676
    %1824 = vmatprep.subr.mxu0 0.0
    %1825 = vmatpush1.msra.mxu0 %v1677
    %1826 = vmatprep.subr.mxu0 0.0
    %1827 = vmatpush1.msra.mxu0 %v1678
    %1828 = vmatprep.subr.mxu0 0.0
    %1829 = vmatpush1.msra.mxu0 %v1679
    %1830 = vmatprep.subr.mxu0 0.0
    %1831 = vmatpush1.msra.mxu0 %v1680
    %1832 = vmatprep.subr.mxu0 0.0
    %1833 = vmatpush1.msra.mxu0 %v1681
    %1834 = vmatprep.subr.mxu0 0.0
    %1835 = vmatpush1.msra.mxu0 %v1682
    %1836 = vmatprep.subr.mxu0 0.0
    %1837 = vmatpush1.msra.mxu0 %v1683
    %1838 = vmatprep.subr.mxu0 0.0
    %1839 = vmatpush1.msra.mxu0 %v1684
    %1840 = vmatprep.subr.mxu0 0.0
    %1841 = vmatpush1.msra.mxu0 %v1685
    %1842 = vmatprep.subr.mxu0 0.0
    %1843 = vmatpush1.msra.mxu0 %v1686
    %1844 = vmatprep.subr.mxu0 0.0
    %1845 = vmatpush1.msra.mxu0 %v1687
    %1846 = vmatprep.subr.mxu0 0.0
    %1847 = vmatpush1.msra.mxu0 %v1688
    %1848 = vmatprep.subr.mxu0 0.0
    %1849 = vmatpush1.msra.mxu0 %v1689
    %1850 = vmatprep.subr.mxu0 0.0
    %1851 = vmatpush1.msra.mxu0 %v1690
    %1852 = vmatprep.subr.mxu0 0.0
    %1853 = vmatpush1.msra.mxu0 %v1691
    %1854 = vmatprep.subr.mxu0 0.0
    %1855 = vmatpush1.msra.mxu0 %v1692
    %1856 = vmatprep.subr.mxu0 0.0
    %1857 = vmatpush1.msra.mxu0 %v1693
    %1858 = vmatprep.subr.mxu0 0.0
    %1859 = vmatpush1.msra.mxu0 %v1694
    %1860 = vmatprep.subr.mxu0 0.0
    %1861 = vmatpush1.msra.mxu0 %v1695
    %1862 = vmatprep.subr.mxu0 0.0
    %1863 = vmatpush1.msra.mxu0 %v1696
    %1864 = vmatprep.mubr.f32.mxu0 %v1658
    %1865 = vmatmul.mubr.f32.gmra.mrb[0].mxu0 %v1657
    %v1866 = vpop.f32.mrb[0].mxu0
    %v1867 = vadd.f32 %v1798, %v1866
    %v1868 = vpop.f32.mrb[0].mxu0
    %1869 = vdwg.mxu0
    %1870 = vmatprep.subr.mxu0 0.0
    %1871 = vmatpush1.msra.mxu0 %v1697
    %1872 = vmatprep.subr.mxu0 0.0
    %1873 = vmatpush1.msra.mxu0 %v1698
    %1874 = vmatprep.subr.mxu0 0.0
    %1875 = vmatpush1.msra.mxu0 %v1699
    %1876 = vmatprep.subr.mxu0 0.0
    %1877 = vmatpush1.msra.mxu0 %v1700
    %1878 = vmatprep.subr.mxu0 0.0
    %1879 = vmatpush1.msra.mxu0 %v1701
    %1880 = vmatprep.subr.mxu0 0.0
    %1881 = vmatpush1.msra.mxu0 %v1702
    %1882 = vmatprep.subr.mxu0 0.0
    %1883 = vmatpush1.msra.mxu0 %v1703
    %1884 = vmatprep.subr.mxu0 0.0
    %1885 = vmatpush1.msra.mxu0 %v1704
    %1886 = vmatprep.subr.mxu0 0.0
    %1887 = vmatpush1.msra.mxu0 %v1705
    %1888 = vmatprep.subr.mxu0 0.0
    %1889 = vmatpush1.msra.mxu0 %v1706
    %1890 = vmatprep.subr.mxu0 0.0
    %1891 = vmatpush1.msra.mxu0 %v1707
    %1892 = vmatprep.subr.mxu0 0.0
    %1893 = vmatpush1.msra.mxu0 %v1708
    %1894 = vmatprep.subr.mxu0 0.0
    %1895 = vmatpush1.msra.mxu0 %v1709
    %1896 = vmatprep.subr.mxu0 0.0
    %1897 = vmatpush1.msra.mxu0 %v1710
    %1898 = vmatprep.subr.mxu0 0.0
    %1899 = vmatpush1.msra.mxu0 %v1711
    %1900 = vmatprep.subr.mxu0 0.0
    %1901 = vmatpush1.msra.mxu0 %v1712
    %1902 = vmatprep.subr.mxu0 0.0
    %1903 = vmatpush1.msra.mxu0 %v1713
    %1904 = vmatprep.subr.mxu0 0.0
    %1905 = vmatpush1.msra.mxu0 %v1714
    %1906 = vmatprep.subr.mxu0 0.0
    %1907 = vmatpush1.msra.mxu0 %v1715
    %1908 = vmatprep.subr.mxu0 0.0
    %1909 = vmatpush1.msra.mxu0 %v1716
    %1910 = vmatprep.subr.mxu0 0.0
    %1911 = vmatpush1.msra.mxu0 %v1717
    %1912 = vmatprep.subr.mxu0 0.0
    %1913 = vmatpush1.msra.mxu0 %v1718
    %1914 = vmatprep.subr.mxu0 0.0
    %1915 = vmatpush1.msra.mxu0 %v1719
    %1916 = vmatprep.subr.mxu0 0.0
    %1917 = vmatpush1.msra.mxu0 %v1720
    %1918 = vmatprep.subr.mxu0 0.0
    %1919 = vmatpush1.msra.mxu0 %v1721
    %1920 = vmatprep.subr.mxu0 0.0
    %1921 = vmatpush1.msra.mxu0 %v1722
    %1922 = vmatprep.subr.mxu0 0.0
    %1923 = vmatpush1.msra.mxu0 %v1723
    %1924 = vmatprep.subr.mxu0 0.0
    %1925 = vmatpush1.msra.mxu0 %v1724
    %1926 = vmatprep.subr.mxu0 0.0
    %1927 = vmatpush1.msra.mxu0 %v1725
    %1928 = vmatprep.subr.mxu0 0.0
    %1929 = vmatpush1.msra.mxu0 %v1726
    %1930 = vmatprep.subr.mxu0 0.0
    %1931 = vmatpush1.msra.mxu0 %v1727
    %1932 = vmatprep.subr.mxu0 0.0
    %1933 = vmatpush1.msra.mxu0 %v1728
    %1934 = vmatprep.mubr.f32.mxu0 %v1660
    %1935 = vmatmul.mubr.f32.gmra.mrb[0].mxu0 %v1659
    %v1936 = vpop.f32.mrb[0].mxu0
    %v1937 = vadd.f32 %v1867, %v1936
    %v1938 = vpop.f32.mrb[0].mxu0
    %1939 = vdwg.mxu0
    %1940 = vmatprep.subr.mxu0 0.0
    %1941 = vmatpush1.msra.mxu0 %v1729
    %1942 = vmatprep.subr.mxu0 0.0
    %1943 = vmatpush1.msra.mxu0 %v1730
    %1944 = vmatprep.subr.mxu0 0.0
    %1945 = vmatpush1.msra.mxu0 %v1731
    %1946 = vmatprep.subr.mxu0 0.0
    %1947 = vmatpush1.msra.mxu0 %v1732
    %1948 = vmatprep.subr.mxu0 0.0
    %1949 = vmatpush1.msra.mxu0 %v1733
    %1950 = vmatprep.subr.mxu0 0.0
    %1951 = vmatpush1.msra.mxu0 %v1734
    %1952 = vmatprep.subr.mxu0 0.0
    %1953 = vmatpush1.msra.mxu0 %v1735
    %1954 = vmatprep.subr.mxu0 0.0
    %1955 = vmatpush1.msra.mxu0 %v1736
    %1956 = vmatprep.subr.mxu0 0.0
    %1957 = vmatpush1.msra.mxu0 %v1737
    %1958 = vmatprep.subr.mxu0 0.0
    %1959 = vmatpush1.msra.mxu0 %v1738
    %1960 = vmatprep.subr.mxu0 0.0
    %1961 = vmatpush1.msra.mxu0 %v1739
    %1962 = vmatprep.subr.mxu0 0.0
    %1963 = vmatpush1.msra.mxu0 %v1740
    %1964 = vmatprep.subr.mxu0 0.0
    %1965 = vmatpush1.msra.mxu0 %v1741
    %1966 = vmatprep.subr.mxu0 0.0
    %1967 = vmatpush1.msra.mxu0 %v1742
    %1968 = vmatprep.subr.mxu0 0.0
    %1969 = vmatpush1.msra.mxu0 %v1743
    %1970 = vmatprep.subr.mxu0 0.0
    %1971 = vmatpush1.msra.mxu0 %v1744
    %1972 = vmatprep.subr.mxu0 0.0
    %1973 = vmatpush1.msra.mxu0 %v1745
    %1974 = vmatprep.subr.mxu0 0.0
    %1975 = vmatpush1.msra.mxu0 %v1746
    %1976 = vmatprep.subr.mxu0 0.0
    %1977 = vmatpush1.msra.mxu0 %v1747
    %1978 = vmatprep.subr.mxu0 0.0
    %1979 = vmatpush1.msra.mxu0 %v1748
    %1980 = vmatprep.subr.mxu0 0.0
    %1981 = vmatpush1.msra.mxu0 %v1749
    %1982 = vmatprep.subr.mxu0 0.0
    %1983 = vmatpush1.msra.mxu0 %v1750
    %1984 = vmatprep.subr.mxu0 0.0
    %1985 = vmatpush1.msra.mxu0 %v1751
    %1986 = vmatprep.subr.mxu0 0.0
    %1987 = vmatpush1.msra.mxu0 %v1752
    %1988 = vmatprep.subr.mxu0 0.0
    %1989 = vmatpush1.msra.mxu0 %v1753
    %1990 = vmatprep.subr.mxu0 0.0
    %1991 = vmatpush1.msra.mxu0 %v1754
    %1992 = vmatprep.subr.mxu0 0.0
    %1993 = vmatpush1.msra.mxu0 %v1755
    %1994 = vmatprep.subr.mxu0 0.0
    %1995 = vmatpush1.msra.mxu0 %v1756
    %1996 = vmatprep.subr.mxu0 0.0
    %1997 = vmatpush1.msra.mxu0 %v1757
    %1998 = vmatprep.subr.mxu0 0.0
    %1999 = vmatpush1.msra.mxu0 %v1758
    %2000 = vmatprep.subr.mxu0 0.0
    %2001 = vmatpush1.msra.mxu0 %v1759
    %2002 = vmatprep.subr.mxu0 0.0
    %2003 = vmatpush1.msra.mxu0 %v1760
    %2004 = vmatprep.mubr.f32.mxu0 %v1662
    %2005 = vmatmul.mubr.f32.gmra.mrb[0].mxu0 %v1661
    %v2006 = vpop.f32.mrb[0].mxu0
    %v2007 = vadd.f32 %v1937, %v2006
    %v2008 = vpop.f32.mrb[0].mxu0
    %2009 = vdwg.mxu0
    %2010 = vmatprep.subr.mxu0 0.0
    %2011 = vmatpush1.msra.mxu0 %v1761
    %2012 = vmatprep.subr.mxu0 0.0
    %2013 = vmatpush1.msra.mxu0 %v1762
    %2014 = vmatprep.subr.mxu0 0.0
    %2015 = vmatpush1.msra.mxu0 %v1763
    %2016 = vmatprep.subr.mxu0 0.0
    %2017 = vmatpush1.msra.mxu0 %v1764
    %2018 = vmatprep.subr.mxu0 0.0
    %2019 = vmatpush1.msra.mxu0 %v1765
    %2020 = vmatprep.subr.mxu0 0.0
    %2021 = vmatpush1.msra.mxu0 %v1766
    %2022 = vmatprep.subr.mxu0 0.0
    %2023 = vmatpush1.msra.mxu0 %v1767
    %2024 = vmatprep.subr.mxu0 0.0
    %2025 = vmatpush1.msra.mxu0 %v1768
    %2026 = vmatprep.subr.mxu0 0.0
    %2027 = vmatpush1.msra.mxu0 %v1769
    %2028 = vmatprep.subr.mxu0 0.0
    %2029 = vmatpush1.msra.mxu0 %v1770
    %2030 = vmatprep.subr.mxu0 0.0
    %2031 = vmatpush1.msra.mxu0 %v1771
    %2032 = vmatprep.subr.mxu0 0.0
    %2033 = vmatpush1.msra.mxu0 %v1772
    %2034 = vmatprep.subr.mxu0 0.0
    %2035 = vmatpush1.msra.mxu0 %v1773
    %2036 = vmatprep.subr.mxu0 0.0
    %2037 = vmatpush1.msra.mxu0 %v1774
    %2038 = vmatprep.subr.mxu0 0.0
    %2039 = vmatpush1.msra.mxu0 %v1775
    %2040 = vmatprep.subr.mxu0 0.0
    %2041 = vmatpush1.msra.mxu0 %v1776
    %2042 = vmatprep.subr.mxu0 0.0
    %2043 = vmatpush1.msra.mxu0 %v1777
    %2044 = vmatprep.subr.mxu0 0.0
    %2045 = vmatpush1.msra.mxu0 %v1778
    %2046 = vmatprep.subr.mxu0 0.0
    %2047 = vmatpush1.msra.mxu0 %v1779
    %2048 = vmatprep.subr.mxu0 0.0
    %2049 = vmatpush1.msra.mxu0 %v1780
    %2050 = vmatprep.subr.mxu0 0.0
    %2051 = vmatpush1.msra.mxu0 %v1781
    %2052 = vmatprep.subr.mxu0 0.0
    %2053 = vmatpush1.msra.mxu0 %v1782
    %2054 = vmatprep.subr.mxu0 0.0
    %2055 = vmatpush1.msra.mxu0 %v1783
    %2056 = vmatprep.subr.mxu0 0.0
    %2057 = vmatpush1.msra.mxu0 %v1784
    %2058 = vmatprep.subr.mxu0 0.0
    %2059 = vmatpush1.msra.mxu0 %v1785
    %2060 = vmatprep.subr.mxu0 0.0
    %2061 = vmatpush1.msra.mxu0 %v1786
    %2062 = vmatprep.subr.mxu0 0.0
    %2063 = vmatpush1.msra.mxu0 %v1787
    %2064 = vmatprep.subr.mxu0 0.0
    %2065 = vmatpush1.msra.mxu0 %v1788
    %2066 = vmatprep.subr.mxu0 0.0
    %2067 = vmatpush1.msra.mxu0 %v1789
    %2068 = vmatprep.subr.mxu0 0.0
    %2069 = vmatpush1.msra.mxu0 %v1790
    %2070 = vmatprep.subr.mxu0 0.0
    %2071 = vmatpush1.msra.mxu0 %v1791
    %2072 = vmatprep.subr.mxu0 0.0
    %2073 = vmatpush1.msra.mxu0 %v1792
    %2074 = vmatprep.mubr.f32.mxu0 %v1664
    %2075 = vmatmul.mubr.f32.gmra.mrb[0].mxu0 %v1663
    %v2076 = vpop.f32.mrb[0].mxu0
    %v2077 = vadd.f32 %v2007, %v2076
    %v2078 = vpop.f32.mrb[0].mxu0
    %2079 = vdwg.mxu0
    %2080 = vst [vmem:[#allocation17] sm:$0xff] %v2077
    // Predicated region
    $region74: #{tpu_custom_call.1} parent=1 // pred_check
      _
    $region75: #{tpu_custom_call.1} parent=1 // pred_check_branch
      %2082 = sbr.rel (0) target = $region77
    $region76: #{tpu_custom_call.1} parent=1 // pred_region
      %s2084 = ssub.s32 128, 128
      %2085 = vsyncadd [#allocation4], %s2084
      %s2087 = sshll.u32 [#allocation17], 4
      %s2088 = int_to_ptr.vmem [resolvable:$true] %s2087
      %2090 = dma.vmem_to_hbm [thread:$0]  %s2088, 128, %s9, [#allocation4]
    $region77: #{tpu_custom_call.1} parent=1 // pred_fallthru
      _
    // Predicated region
    $region78: #{tpu_custom_call.1} parent=1 // pred_check
      _
    $region79: #{tpu_custom_call.1} parent=1 // pred_check_branch
      %2092 = sbr.rel (0) target = $region81
    $region80: #{tpu_custom_call.1} parent=1 // pred_region
      %2093 = dma.done [#allocation4], 128
    $region81: #{tpu_custom_call.1} parent=1 // pred_fallthru
      _
    %2094 = vsyncpa [#allocation3], 1
    %2095 = vsyncpa [#allocation6], 1
    %2096 = vsyncpa [#allocation9], 1
    %2097 = vsyncpa [#allocation12], 1
    %2098 = vsyncpa [#allocation15], 1
    %2099 = vsyncpa [#allocation4], 1

</llo_original>
